<compile_context>
chip_gen: v6e
topology: v6e:2x2x1
jax: 0.10.0
libtpu: 0.0.40
codegen_flags: <defaults>
</compile_context>

<pallas_src>
import functools

import jax
import jax.numpy as jnp
from jax.experimental import pallas as pl
from jax.experimental.pallas import tpu as pltpu


LANES = 128  # MXU / lane-native output width


def _round_up(x, m):
    return ((x + m - 1) // m) * m


def _compiler_params():
    # Explicit VMEM budget (safe on v5e/v6e/v7x) + megacore sharding of the
    # row axis on v7x.
    return pltpu.CompilerParams(
        dimension_semantics=("parallel",),
        vmem_limit_bytes=32 * 1024 * 1024,
    )


# ---------------------------------------------------------------------------
# Pallas kernels
# ---------------------------------------------------------------------------
def _conv_pool_kernel(pa_ref, pb_ref, pc_ref, pd_ref, w_ref, b_ref, o_ref):
    """Fused conv-GEMM (4 pool corners) + max-pool + bias + ReLU.

    pa..pd: (TM, Kp) bf16 im2col corner tiles; w: (Kp, 128) bf16 resident;
    b: (1, 128) f32 resident; o: (TM, 128) f32 pooled post-ReLU activation.
    relu(max_c(p_c @ W) + b) == maxpool2x2(relu(conv + b)).
    """
    w = w_ref[...]
    s = jnp.dot(pa_ref[...], w, preferred_element_type=jnp.float32)
    s = jnp.maximum(s, jnp.dot(pb_ref[...], w, preferred_element_type=jnp.float32))
    s = jnp.maximum(s, jnp.dot(pc_ref[...], w, preferred_element_type=jnp.float32))
    s = jnp.maximum(s, jnp.dot(pd_ref[...], w, preferred_element_type=jnp.float32))
    o_ref[...] = jnp.maximum(s + b_ref[...], 0.0)


def _mlp_kernel(x_ref, w1_ref, b1_ref, w2_ref, b2_ref, w3_ref, b3_ref, o_ref):
    """Fused fc1+ReLU -> fc2+ReLU -> fc3 on one activation tile (weights resident)."""
    h = jnp.dot(x_ref[...], w1_ref[...], preferred_element_type=jnp.float32)
    h = jnp.maximum(h + b1_ref[...], 0.0)
    h = jnp.dot(h.astype(w2_ref.dtype), w2_ref[...],
                preferred_element_type=jnp.float32)
    h = jnp.maximum(h + b2_ref[...], 0.0)
    h = jnp.dot(h.astype(w3_ref.dtype), w3_ref[...],
                preferred_element_type=jnp.float32)
    o_ref[...] = h + b3_ref[...]


# ---------------------------------------------------------------------------
# Pallas wrappers
# ---------------------------------------------------------------------------
def conv_relu_pool(x, wm_p, b_p, *, oc, kh, kw, tile_m=512):
    """Fused 'valid' stride-1 conv + bias + ReLU + 2x2/stride-2 max pool.

    x: (N, H, W, C) NHWC f32; wm_p: (Kp, 128) bf16 pre-padded im2col weight
    (feature order = (kh, kw, C)); b_p: (1, 128) f32 pre-padded bias.
    Returns (N, (H-kh+1)//2, (W-kw+1)//2, oc) f32.
    """
    n, h, w_dim, c = x.shape
    oh, ow = h - kh + 1, w_dim - kw + 1
    ph, pw = oh // 2, ow // 2
    k = kh * kw * c
    kp = wm_p.shape[0]
    rows = n * ph * pw

    # Four bf16 im2col "corner" matrices, one per 2x2 pool-window position.
    # (JAX glue; in-kernel windowed-DMA im2col is a further optimization.)
    mats = []
    for a in (0, 1):
        for b2 in (0, 1):
            taps = [x[:, a + di: a + di + 2 * ph: 2,
                       b2 + dj: b2 + dj + 2 * pw: 2, :]
                    for di in range(kh) for dj in range(kw)]
            p = jnp.stack(taps, axis=3).reshape(rows, k).astype(wm_p.dtype)
            mats.append(p)

    tm = min(tile_m, _round_up(rows, 8))
    mp = _round_up(rows, tm)
    mats = [jnp.pad(p, ((0, mp - rows), (0, kp - k))) for p in mats]

    act_spec = pl.BlockSpec((tm, kp), lambda i: (i, 0))
    out = pl.pallas_call(
        _conv_pool_kernel,
        out_shape=jax.ShapeDtypeStruct((mp, LANES), jnp.float32),
        grid=(mp // tm,),
        in_specs=[act_spec] * 4 + [
            pl.BlockSpec((kp, LANES), lambda i: (0, 0)),   # resident weight
            pl.BlockSpec((1, LANES), lambda i: (0, 0)),    # resident bias
        ],
        out_specs=pl.BlockSpec((tm, LANES), lambda i: (i, 0)),
        compiler_params=_compiler_params(),
    )(*mats, wm_p, b_p)
    return out[:rows, :oc].reshape(n, ph, pw, oc)


def mlp3(x, w1p, b1p, w2p, b2p, w3p, b3p, *, out_dim, tile_m=512):
    """Fused fc1(ReLU)-fc2(ReLU)-fc3 stack.  x: (M, 400) f32 -> (M, out_dim) f32."""
    m, k = x.shape
    k1p = w1p.shape[0]
    tm = min(tile_m, _round_up(m, 8))
    mp = _round_up(m, tm)
    xp = jnp.pad(x.astype(w1p.dtype), ((0, mp - m), (0, k1p - k)))

    def res(shape):
        return pl.BlockSpec(shape, lambda i: (0, 0))       # resident block

    out = pl.pallas_call(
        _mlp_kernel,
        out_shape=jax.ShapeDtypeStruct((mp, LANES), jnp.float32),
        grid=(mp // tm,),
        in_specs=[pl.BlockSpec((tm, k1p), lambda i: (i, 0)),
                  res((k1p, LANES)), res((1, LANES)),
                  res((LANES, LANES)), res((1, LANES)),
                  res((LANES, LANES)), res((1, LANES))],
        out_specs=pl.BlockSpec((tm, LANES), lambda i: (i, 0)),
        compiler_params=_compiler_params(),
    )(xp, w1p, b1p, w2p, b2p, w3p, b3p)
    return out[:m, :out_dim]


# ---------------------------------------------------------------------------
# Parameter init (deterministic, PyTorch-style uniform(-1/sqrt(fan_in), ...))
# and one-time preparation (padding / bf16 cast / im2col weight layout).
# ---------------------------------------------------------------------------
def init_params(key, num_classes=10):
    keys = jax.random.split(key, 10)

    def u(k, shape, fan_in):
        bound = 1.0 / float(fan_in) ** 0.5
        return jax.random.uniform(k, shape, jnp.float32, -bound, bound)

    # Conv weights created in PyTorch layout (OC, IC, KH, KW), converted to
    # (KH, KW, IC, OC) to match the (kh, kw, C) im2col feature ordering.
    w1 = jnp.transpose(u(keys[0], (6, 3, 5, 5), 3 * 5 * 5), (2, 3, 1, 0))
    b1 = u(keys[1], (6,), 3 * 5 * 5)
    w2 = jnp.transpose(u(keys[2], (16, 6, 5, 5), 6 * 5 * 5), (2, 3, 1, 0))
    b2 = u(keys[3], (16,), 6 * 5 * 5)
    # Linear weights created in PyTorch layout (out, in), transposed to (in, out).
    wfc1 = u(keys[4], (120, 16 * 5 * 5), 16 * 5 * 5).T
    bfc1 = u(keys[5], (120,), 16 * 5 * 5)
    wfc2 = u(keys[6], (84, 120), 120).T
    bfc2 = u(keys[7], (84,), 120)
    wfc3 = u(keys[8], (num_classes, 84), 84).T
    bfc3 = u(keys[9], (num_classes,), 84)
    return dict(w1=w1, b1=b1, w2=w2, b2=b2,
                wfc1=wfc1, bfc1=bfc1, wfc2=wfc2, bfc2=bfc2,
                wfc3=wfc3, bfc3=bfc3)


def prepare_params(params, *, compute_dtype=jnp.bfloat16):
    """Hoisted one-time weight prep: im2col reshape, pad to (Kp, 128), bf16 cast."""
    def pad_w(w2d):
        kk, nn = w2d.shape
        kp = _round_up(kk, LANES)
        return jnp.pad(w2d.astype(compute_dtype), ((0, kp - kk), (0, LANES - nn)))

    def pad_b(b):
        return jnp.pad(b.astype(jnp.float32), (0, LANES - b.shape[0]))[None, :]

    return dict(
        wm1=pad_w(params['w1'].reshape(-1, params['w1'].shape[-1])),  # (128, 128)
        b1=pad_b(params['b1']),
        wm2=pad_w(params['w2'].reshape(-1, params['w2'].shape[-1])),  # (256, 128)
        b2=pad_b(params['b2']),
        wf1=pad_w(params['wfc1']), bf1=pad_b(params['bfc1']),         # (512, 128)
        wf2=pad_w(params['wfc2']), bf2=pad_b(params['bfc2']),         # (128, 128)
        wf3=pad_w(params['wfc3']), bf3=pad_b(params['bfc3']),         # (128, 128)
    )


# ---------------------------------------------------------------------------
# Forward pass (matches PyTorch ConvNet.forward semantics)
# ---------------------------------------------------------------------------
def convnet_forward(x_nchw, prep, *, num_classes=10, tile_m=512):
    # layout: x_nchw is (N, 3, 32, 32) float32 NCHW; NHWC internally.
    x = jnp.transpose(x_nchw, (0, 2, 3, 1)).astype(jnp.float32)        # (N,32,32,3)
    x = conv_relu_pool(x, prep['wm1'], prep['b1'],
                       oc=6, kh=5, kw=5, tile_m=tile_m)                 # (N,14,14,6)
    x = conv_relu_pool(x, prep['wm2'], prep['b2'],
                       oc=16, kh=5, kw=5, tile_m=tile_m)                # (N,5,5,16)
    # x.view(-1, 16*5*5) in PyTorch flattens NCHW (C, H, W) order:
    x = jnp.transpose(x, (0, 3, 1, 2)).reshape(x.shape[0], -1)          # (N, 400)
    return mlp3(x, prep['wf1'], prep['bf1'], prep['wf2'], prep['bf2'],
                prep['wf3'], prep['bf3'], out_dim=num_classes,
                tile_m=tile_m)                                           # (N, nc)


if __name__ == "__main__":
    key = jax.random.PRNGKey(0)
    k_x, k_p = jax.random.split(key)
    # Spatial size must be 32x32 (3 channels) for the 16*5*5 flatten to hold.
    x = jax.random.normal(k_x, (2, 3, 32, 32), jnp.float32)
    params = init_params(k_p, num_classes=10)
    prep = prepare_params(params)

    fwd = jax.jit(functools.partial(convnet_forward, num_classes=10))
    logits = jax.block_until_ready(fwd(x, prep))
    assert logits.shape == (2, 10), logits.shape
    assert bool(jnp.all(jnp.isfinite(logits)))
    print("KERNEL_OK")
</pallas_src>

<mosaic_0001>
module attributes {stable_mosaic.version = 11 : i64} {
  func.func @_conv_pool_kernel(%arg0: i32, %arg1: memref<392x128xbf16, #tpu.memory_space<vmem>>, %arg2: memref<392x128xbf16, #tpu.memory_space<vmem>>, %arg3: memref<392x128xbf16, #tpu.memory_space<vmem>>, %arg4: memref<392x128xbf16, #tpu.memory_space<vmem>>, %arg5: memref<128x128xbf16, #tpu.memory_space<vmem>>, %arg6: memref<1x128xf32, #tpu.memory_space<vmem>>, %arg7: memref<392x128xf32, #tpu.memory_space<vmem>>) attributes {dimension_semantics = [#tpu.dimension_semantics<parallel>], iteration_bounds = array<i64: 1>, scalar_prefetch = 0 : i64, scratch_operands = 0 : i64, tpu.core_type = #tpu.core_type<tc>, window_params = [{transform_indices = @transform_0, window_bounds = array<i64: 392, 128>}, {transform_indices = @transform_1, window_bounds = array<i64: 392, 128>}, {transform_indices = @transform_2, window_bounds = array<i64: 392, 128>}, {transform_indices = @transform_3, window_bounds = array<i64: 392, 128>}, {pipeline_mode = #tpu.pipeline_mode<synchronous>, transform_indices = @transform_4, window_bounds = array<i64: 128, 128>}, {pipeline_mode = #tpu.pipeline_mode<synchronous>, transform_indices = @transform_5, window_bounds = array<i64: 1, 128>}, {transform_indices = @transform_6, window_bounds = array<i64: 392, 128>}]} {
    %c0 = arith.constant 0 : index
    %c0_0 = arith.constant 0 : index
    %0 = vector.load %arg5[%c0, %c0_0] : memref<128x128xbf16, #tpu.memory_space<vmem>>, vector<128x128xbf16>
    %c0_1 = arith.constant 0 : index
    %c0_2 = arith.constant 0 : index
    %1 = vector.load %arg1[%c0_1, %c0_2] : memref<392x128xbf16, #tpu.memory_space<vmem>>, vector<392x128xbf16>
    %cst = arith.constant dense<0.000000e+00> : vector<392x128xf32>
    %2 = tpu.matmul %1, %0, %cst {dimension_numbers = #tpu.dot_dimension_numbers<[1], [0], [0], [1], [0, 0, 1, 1], [], []>} : vector<392x128xbf16>, vector<128x128xbf16>, vector<392x128xf32> -> vector<392x128xf32>
    %c0_3 = arith.constant 0 : index
    %c0_4 = arith.constant 0 : index
    %3 = vector.load %arg2[%c0_3, %c0_4] : memref<392x128xbf16, #tpu.memory_space<vmem>>, vector<392x128xbf16>
    %cst_5 = arith.constant dense<0.000000e+00> : vector<392x128xf32>
    %4 = tpu.matmul %3, %0, %cst_5 {dimension_numbers = #tpu.dot_dimension_numbers<[1], [0], [0], [1], [0, 0, 1, 1], [], []>} : vector<392x128xbf16>, vector<128x128xbf16>, vector<392x128xf32> -> vector<392x128xf32>
    %5 = arith.maximumf %2, %4 : vector<392x128xf32>
    %c0_6 = arith.constant 0 : index
    %c0_7 = arith.constant 0 : index
    %6 = vector.load %arg3[%c0_6, %c0_7] : memref<392x128xbf16, #tpu.memory_space<vmem>>, vector<392x128xbf16>
    %cst_8 = arith.constant dense<0.000000e+00> : vector<392x128xf32>
    %7 = tpu.matmul %6, %0, %cst_8 {dimension_numbers = #tpu.dot_dimension_numbers<[1], [0], [0], [1], [0, 0, 1, 1], [], []>} : vector<392x128xbf16>, vector<128x128xbf16>, vector<392x128xf32> -> vector<392x128xf32>
    %8 = arith.maximumf %5, %7 : vector<392x128xf32>
    %c0_9 = arith.constant 0 : index
    %c0_10 = arith.constant 0 : index
    %9 = vector.load %arg4[%c0_9, %c0_10] : memref<392x128xbf16, #tpu.memory_space<vmem>>, vector<392x128xbf16>
    %cst_11 = arith.constant dense<0.000000e+00> : vector<392x128xf32>
    %10 = tpu.matmul %9, %0, %cst_11 {dimension_numbers = #tpu.dot_dimension_numbers<[1], [0], [0], [1], [0, 0, 1, 1], [], []>} : vector<392x128xbf16>, vector<128x128xbf16>, vector<392x128xf32> -> vector<392x128xf32>
    %11 = arith.maximumf %8, %10 : vector<392x128xf32>
    %c0_12 = arith.constant 0 : index
    %c0_13 = arith.constant 0 : index
    %12 = vector.load %arg6[%c0_12, %c0_13] : memref<1x128xf32, #tpu.memory_space<vmem>>, vector<1x128xf32>
    %13 = vector.broadcast %12 : vector<1x128xf32> to vector<392x128xf32>
    %14 = arith.addf %11, %13 : vector<392x128xf32>
    %cst_14 = arith.constant 0.000000e+00 : f32
    %15 = vector.broadcast %cst_14 : f32 to vector<392x128xf32>
    %16 = arith.maximumf %14, %15 : vector<392x128xf32>
    %c0_15 = arith.constant 0 : index
    %c0_16 = arith.constant 0 : index
    %17 = vector.load %arg7[%c0_15, %c0_16] : memref<392x128xf32, #tpu.memory_space<vmem>>, vector<392x128xf32>
    tpu.vector_store %arg7[%c0_15, %c0_16], %16 {strides = array<i32>} : memref<392x128xf32, #tpu.memory_space<vmem>>, vector<392x128xf32>,
    return
  }
  func.func @transform_0(%arg0: i32) -> (i32, i32) {
    %c0_i32 = arith.constant 0 : i32
    %c0_i32_0 = arith.constant 0 : i32
    return %arg0, %c0_i32 : i32, i32
  }
  func.func @transform_1(%arg0: i32) -> (i32, i32) {
    %c0_i32 = arith.constant 0 : i32
    %c0_i32_0 = arith.constant 0 : i32
    return %arg0, %c0_i32 : i32, i32
  }
  func.func @transform_2(%arg0: i32) -> (i32, i32) {
    %c0_i32 = arith.constant 0 : i32
    %c0_i32_0 = arith.constant 0 : i32
    return %arg0, %c0_i32 : i32, i32
  }
  func.func @transform_3(%arg0: i32) -> (i32, i32) {
    %c0_i32 = arith.constant 0 : i32
    %c0_i32_0 = arith.constant 0 : i32
    return %arg0, %c0_i32 : i32, i32
  }
  func.func @transform_4(%arg0: i32) -> (i32, i32) {
    %c0_i32 = arith.constant 0 : i32
    %c0_i32_0 = arith.constant 0 : i32
    %c0_i32_1 = arith.constant 0 : i32
    return %c0_i32, %c0_i32_0 : i32, i32
  }
  func.func @transform_5(%arg0: i32) -> (i32, i32) {
    %c0_i32 = arith.constant 0 : i32
    %c0_i32_0 = arith.constant 0 : i32
    %c0_i32_1 = arith.constant 0 : i32
    return %c0_i32, %c0_i32_0 : i32, i32
  }
  func.func @transform_6(%arg0: i32) -> (i32, i32) {
    %c0_i32 = arith.constant 0 : i32
    %c0_i32_0 = arith.constant 0 : i32
    return %arg0, %c0_i32 : i32, i32
  }
}

module attributes {stable_mosaic.version = 11 : i64} {
  func.func @_conv_pool_kernel(%arg0: i32, %arg1: memref<56x256xbf16, #tpu.memory_space<vmem>>, %arg2: memref<56x256xbf16, #tpu.memory_space<vmem>>, %arg3: memref<56x256xbf16, #tpu.memory_space<vmem>>, %arg4: memref<56x256xbf16, #tpu.memory_space<vmem>>, %arg5: memref<256x128xbf16, #tpu.memory_space<vmem>>, %arg6: memref<1x128xf32, #tpu.memory_space<vmem>>, %arg7: memref<56x128xf32, #tpu.memory_space<vmem>>) attributes {dimension_semantics = [#tpu.dimension_semantics<parallel>], iteration_bounds = array<i64: 1>, scalar_prefetch = 0 : i64, scratch_operands = 0 : i64, tpu.core_type = #tpu.core_type<tc>, window_params = [{transform_indices = @transform_0, window_bounds = array<i64: 56, 256>}, {transform_indices = @transform_1, window_bounds = array<i64: 56, 256>}, {transform_indices = @transform_2, window_bounds = array<i64: 56, 256>}, {transform_indices = @transform_3, window_bounds = array<i64: 56, 256>}, {pipeline_mode = #tpu.pipeline_mode<synchronous>, transform_indices = @transform_4, window_bounds = array<i64: 256, 128>}, {pipeline_mode = #tpu.pipeline_mode<synchronous>, transform_indices = @transform_5, window_bounds = array<i64: 1, 128>}, {transform_indices = @transform_6, window_bounds = array<i64: 56, 128>}]} {
    %c0 = arith.constant 0 : index
    %c0_0 = arith.constant 0 : index
    %0 = vector.load %arg5[%c0, %c0_0] : memref<256x128xbf16, #tpu.memory_space<vmem>>, vector<256x128xbf16>
    %c0_1 = arith.constant 0 : index
    %c0_2 = arith.constant 0 : index
    %1 = vector.load %arg1[%c0_1, %c0_2] : memref<56x256xbf16, #tpu.memory_space<vmem>>, vector<56x256xbf16>
    %cst = arith.constant dense<0.000000e+00> : vector<56x128xf32>
    %2 = tpu.matmul %1, %0, %cst {dimension_numbers = #tpu.dot_dimension_numbers<[1], [0], [0], [1], [0, 0, 1, 1], [], []>} : vector<56x256xbf16>, vector<256x128xbf16>, vector<56x128xf32> -> vector<56x128xf32>
    %c0_3 = arith.constant 0 : index
    %c0_4 = arith.constant 0 : index
    %3 = vector.load %arg2[%c0_3, %c0_4] : memref<56x256xbf16, #tpu.memory_space<vmem>>, vector<56x256xbf16>
    %cst_5 = arith.constant dense<0.000000e+00> : vector<56x128xf32>
    %4 = tpu.matmul %3, %0, %cst_5 {dimension_numbers = #tpu.dot_dimension_numbers<[1], [0], [0], [1], [0, 0, 1, 1], [], []>} : vector<56x256xbf16>, vector<256x128xbf16>, vector<56x128xf32> -> vector<56x128xf32>
    %5 = arith.maximumf %2, %4 : vector<56x128xf32>
    %c0_6 = arith.constant 0 : index
    %c0_7 = arith.constant 0 : index
    %6 = vector.load %arg3[%c0_6, %c0_7] : memref<56x256xbf16, #tpu.memory_space<vmem>>, vector<56x256xbf16>
    %cst_8 = arith.constant dense<0.000000e+00> : vector<56x128xf32>
    %7 = tpu.matmul %6, %0, %cst_8 {dimension_numbers = #tpu.dot_dimension_numbers<[1], [0], [0], [1], [0, 0, 1, 1], [], []>} : vector<56x256xbf16>, vector<256x128xbf16>, vector<56x128xf32> -> vector<56x128xf32>
    %8 = arith.maximumf %5, %7 : vector<56x128xf32>
    %c0_9 = arith.constant 0 : index
    %c0_10 = arith.constant 0 : index
    %9 = vector.load %arg4[%c0_9, %c0_10] : memref<56x256xbf16, #tpu.memory_space<vmem>>, vector<56x256xbf16>
    %cst_11 = arith.constant dense<0.000000e+00> : vector<56x128xf32>
    %10 = tpu.matmul %9, %0, %cst_11 {dimension_numbers = #tpu.dot_dimension_numbers<[1], [0], [0], [1], [0, 0, 1, 1], [], []>} : vector<56x256xbf16>, vector<256x128xbf16>, vector<56x128xf32> -> vector<56x128xf32>
    %11 = arith.maximumf %8, %10 : vector<56x128xf32>
    %c0_12 = arith.constant 0 : index
    %c0_13 = arith.constant 0 : index
    %12 = vector.load %arg6[%c0_12, %c0_13] : memref<1x128xf32, #tpu.memory_space<vmem>>, vector<1x128xf32>
    %13 = vector.broadcast %12 : vector<1x128xf32> to vector<56x128xf32>
    %14 = arith.addf %11, %13 : vector<56x128xf32>
    %cst_14 = arith.constant 0.000000e+00 : f32
    %15 = vector.broadcast %cst_14 : f32 to vector<56x128xf32>
    %16 = arith.maximumf %14, %15 : vector<56x128xf32>
    %c0_15 = arith.constant 0 : index
    %c0_16 = arith.constant 0 : index
    %17 = vector.load %arg7[%c0_15, %c0_16] : memref<56x128xf32, #tpu.memory_space<vmem>>, vector<56x128xf32>
    tpu.vector_store %arg7[%c0_15, %c0_16], %16 {strides = array<i32>} : memref<56x128xf32, #tpu.memory_space<vmem>>, vector<56x128xf32>,
    return
  }
  func.func @transform_0(%arg0: i32) -> (i32, i32) {
    %c0_i32 = arith.constant 0 : i32
    %c0_i32_0 = arith.constant 0 : i32
    return %arg0, %c0_i32 : i32, i32
  }
  func.func @transform_1(%arg0: i32) -> (i32, i32) {
    %c0_i32 = arith.constant 0 : i32
    %c0_i32_0 = arith.constant 0 : i32
    return %arg0, %c0_i32 : i32, i32
  }
  func.func @transform_2(%arg0: i32) -> (i32, i32) {
    %c0_i32 = arith.constant 0 : i32
    %c0_i32_0 = arith.constant 0 : i32
    return %arg0, %c0_i32 : i32, i32
  }
  func.func @transform_3(%arg0: i32) -> (i32, i32) {
    %c0_i32 = arith.constant 0 : i32
    %c0_i32_0 = arith.constant 0 : i32
    return %arg0, %c0_i32 : i32, i32
  }
  func.func @transform_4(%arg0: i32) -> (i32, i32) {
    %c0_i32 = arith.constant 0 : i32
    %c0_i32_0 = arith.constant 0 : i32
    %c0_i32_1 = arith.constant 0 : i32
    return %c0_i32, %c0_i32_0 : i32, i32
  }
  func.func @transform_5(%arg0: i32) -> (i32, i32) {
    %c0_i32 = arith.constant 0 : i32
    %c0_i32_0 = arith.constant 0 : i32
    %c0_i32_1 = arith.constant 0 : i32
    return %c0_i32, %c0_i32_0 : i32, i32
  }
  func.func @transform_6(%arg0: i32) -> (i32, i32) {
    %c0_i32 = arith.constant 0 : i32
    %c0_i32_0 = arith.constant 0 : i32
    return %arg0, %c0_i32 : i32, i32
  }
}

module attributes {stable_mosaic.version = 11 : i64} {
  func.func @_mlp_kernel(%arg0: i32, %arg1: memref<8x512xbf16, #tpu.memory_space<vmem>>, %arg2: memref<512x128xbf16, #tpu.memory_space<vmem>>, %arg3: memref<1x128xf32, #tpu.memory_space<vmem>>, %arg4: memref<128x128xbf16, #tpu.memory_space<vmem>>, %arg5: memref<1x128xf32, #tpu.memory_space<vmem>>, %arg6: memref<128x128xbf16, #tpu.memory_space<vmem>>, %arg7: memref<1x128xf32, #tpu.memory_space<vmem>>, %arg8: memref<8x128xf32, #tpu.memory_space<vmem>>) attributes {dimension_semantics = [#tpu.dimension_semantics<parallel>], iteration_bounds = array<i64: 1>, scalar_prefetch = 0 : i64, scratch_operands = 0 : i64, tpu.core_type = #tpu.core_type<tc>, window_params = [{transform_indices = @transform_0, window_bounds = array<i64: 8, 512>}, {pipeline_mode = #tpu.pipeline_mode<synchronous>, transform_indices = @transform_1, window_bounds = array<i64: 512, 128>}, {pipeline_mode = #tpu.pipeline_mode<synchronous>, transform_indices = @transform_2, window_bounds = array<i64: 1, 128>}, {pipeline_mode = #tpu.pipeline_mode<synchronous>, transform_indices = @transform_3, window_bounds = array<i64: 128, 128>}, {pipeline_mode = #tpu.pipeline_mode<synchronous>, transform_indices = @transform_4, window_bounds = array<i64: 1, 128>}, {pipeline_mode = #tpu.pipeline_mode<synchronous>, transform_indices = @transform_5, window_bounds = array<i64: 128, 128>}, {pipeline_mode = #tpu.pipeline_mode<synchronous>, transform_indices = @transform_6, window_bounds = array<i64: 1, 128>}, {transform_indices = @transform_7, window_bounds = array<i64: 8, 128>}]} {
    %c0 = arith.constant 0 : index
    %c0_0 = arith.constant 0 : index
    %0 = vector.load %arg1[%c0, %c0_0] : memref<8x512xbf16, #tpu.memory_space<vmem>>, vector<8x512xbf16>
    %c0_1 = arith.constant 0 : index
    %c0_2 = arith.constant 0 : index
    %1 = vector.load %arg2[%c0_1, %c0_2] : memref<512x128xbf16, #tpu.memory_space<vmem>>, vector<512x128xbf16>
    %cst = arith.constant dense<0.000000e+00> : vector<8x128xf32>
    %2 = tpu.matmul %0, %1, %cst {dimension_numbers = #tpu.dot_dimension_numbers<[1], [0], [0], [1], [0, 0, 1, 1], [], []>} : vector<8x512xbf16>, vector<512x128xbf16>, vector<8x128xf32> -> vector<8x128xf32>
    %c0_3 = arith.constant 0 : index
    %c0_4 = arith.constant 0 : index
    %3 = vector.load %arg3[%c0_3, %c0_4] : memref<1x128xf32, #tpu.memory_space<vmem>>, vector<1x128xf32>
    %4 = vector.broadcast %3 : vector<1x128xf32> to vector<8x128xf32>
    %5 = arith.addf %2, %4 : vector<8x128xf32>
    %cst_5 = arith.constant 0.000000e+00 : f32
    %6 = vector.broadcast %cst_5 : f32 to vector<8x128xf32>
    %7 = arith.maximumf %5, %6 : vector<8x128xf32>
    %8 = arith.truncf %7 : vector<8x128xf32> to vector<8x128xbf16>
    %c0_6 = arith.constant 0 : index
    %c0_7 = arith.constant 0 : index
    %9 = vector.load %arg4[%c0_6, %c0_7] : memref<128x128xbf16, #tpu.memory_space<vmem>>, vector<128x128xbf16>
    %cst_8 = arith.constant dense<0.000000e+00> : vector<8x128xf32>
    %10 = tpu.matmul %8, %9, %cst_8 {dimension_numbers = #tpu.dot_dimension_numbers<[1], [0], [0], [1], [0, 0, 1, 1], [], []>} : vector<8x128xbf16>, vector<128x128xbf16>, vector<8x128xf32> -> vector<8x128xf32>
    %c0_9 = arith.constant 0 : index
    %c0_10 = arith.constant 0 : index
    %11 = vector.load %arg5[%c0_9, %c0_10] : memref<1x128xf32, #tpu.memory_space<vmem>>, vector<1x128xf32>
    %12 = vector.broadcast %11 : vector<1x128xf32> to vector<8x128xf32>
    %13 = arith.addf %10, %12 : vector<8x128xf32>
    %cst_11 = arith.constant 0.000000e+00 : f32
    %14 = vector.broadcast %cst_11 : f32 to vector<8x128xf32>
    %15 = arith.maximumf %13, %14 : vector<8x128xf32>
    %16 = arith.truncf %15 : vector<8x128xf32> to vector<8x128xbf16>
    %c0_12 = arith.constant 0 : index
    %c0_13 = arith.constant 0 : index
    %17 = vector.load %arg6[%c0_12, %c0_13] : memref<128x128xbf16, #tpu.memory_space<vmem>>, vector<128x128xbf16>
    %cst_14 = arith.constant dense<0.000000e+00> : vector<8x128xf32>
    %18 = tpu.matmul %16, %17, %cst_14 {dimension_numbers = #tpu.dot_dimension_numbers<[1], [0], [0], [1], [0, 0, 1, 1], [], []>} : vector<8x128xbf16>, vector<128x128xbf16>, vector<8x128xf32> -> vector<8x128xf32>
    %c0_15 = arith.constant 0 : index
    %c0_16 = arith.constant 0 : index
    %19 = vector.load %arg7[%c0_15, %c0_16] : memref<1x128xf32, #tpu.memory_space<vmem>>, vector<1x128xf32>
    %20 = vector.broadcast %19 : vector<1x128xf32> to vector<8x128xf32>
    %21 = arith.addf %18, %20 : vector<8x128xf32>
    %c0_17 = arith.constant 0 : index
    %c0_18 = arith.constant 0 : index
    %22 = vector.load %arg8[%c0_17, %c0_18] : memref<8x128xf32, #tpu.memory_space<vmem>>, vector<8x128xf32>
    tpu.vector_store %arg8[%c0_17, %c0_18], %21 {strides = array<i32>} : memref<8x128xf32, #tpu.memory_space<vmem>>, vector<8x128xf32>,
    return
  }
  func.func @transform_0(%arg0: i32) -> (i32, i32) {
    %c0_i32 = arith.constant 0 : i32
    %c0_i32_0 = arith.constant 0 : i32
    return %arg0, %c0_i32 : i32, i32
  }
  func.func @transform_1(%arg0: i32) -> (i32, i32) {
    %c0_i32 = arith.constant 0 : i32
    %c0_i32_0 = arith.constant 0 : i32
    %c0_i32_1 = arith.constant 0 : i32
    return %c0_i32, %c0_i32_0 : i32, i32
  }
  func.func @transform_2(%arg0: i32) -> (i32, i32) {
    %c0_i32 = arith.constant 0 : i32
    %c0_i32_0 = arith.constant 0 : i32
    %c0_i32_1 = arith.constant 0 : i32
    return %c0_i32, %c0_i32_0 : i32, i32
  }
  func.func @transform_3(%arg0: i32) -> (i32, i32) {
    %c0_i32 = arith.constant 0 : i32
    %c0_i32_0 = arith.constant 0 : i32
    %c0_i32_1 = arith.constant 0 : i32
    return %c0_i32, %c0_i32_0 : i32, i32
  }
  func.func @transform_4(%arg0: i32) -> (i32, i32) {
    %c0_i32 = arith.constant 0 : i32
    %c0_i32_0 = arith.constant 0 : i32
    %c0_i32_1 = arith.constant 0 : i32
    return %c0_i32, %c0_i32_0 : i32, i32
  }
  func.func @transform_5(%arg0: i32) -> (i32, i32) {
    %c0_i32 = arith.constant 0 : i32
    %c0_i32_0 = arith.constant 0 : i32
    %c0_i32_1 = arith.constant 0 : i32
    return %c0_i32, %c0_i32_0 : i32, i32
  }
  func.func @transform_6(%arg0: i32) -> (i32, i32) {
    %c0_i32 = arith.constant 0 : i32
    %c0_i32_0 = arith.constant 0 : i32
    %c0_i32_1 = arith.constant 0 : i32
    return %c0_i32, %c0_i32_0 : i32, i32
  }
  func.func @transform_7(%arg0: i32) -> (i32, i32) {
    %c0_i32 = arith.constant 0 : i32
    %c0_i32_0 = arith.constant 0 : i32
    return %arg0, %c0_i32 : i32, i32
  }
}

</mosaic_0001>

<llo_original>
// kernel: convnet_forward.3
$region0: #{convnet_forward.3}
  #allocation0 [shape = 'u32[]', space=smem, size = 0x4, offset = 0x4, fixed_abs, tag = 'smem constant byte address 0x4 - core index']
  #allocation1 [shape = 'u32[144,128]{1,0:T(1,128)}', space=vmem, size = 0x12000, scoped, tag = 'internal scratch']
  %s0 = inlined_call_operand.vmem [shape: bf16[392,128], index: 0, kind: input, shape index: {}]
  %s1 = inlined_call_operand.vmem [shape: bf16[392,128], index: 1, kind: input, shape index: {}]
  %s2 = inlined_call_operand.vmem [shape: bf16[392,128], index: 2, kind: input, shape index: {}]
  %s3 = inlined_call_operand.vmem [shape: bf16[392,128], index: 3, kind: input, shape index: {}]
  %s4 = inlined_call_operand.vmem [shape: bf16[128,128], index: 4, kind: input, shape index: {}]
  %s5 = inlined_call_operand.vmem [shape: f32[1,128], index: 5, kind: input, shape index: {}]
  %s6 = inlined_call_operand.vmem [shape: f32[392,128], index: 6, kind: output, shape index: {}]
  %s7 = sld [smem:[#allocation0]]
  $region34: #{convnet_forward.3} parent=0
    _
  %s9 = ssub.s32 1, %s7
  %s10 = scalar_select 0, %s9, %s7
  // Predicated region
  $region2: #{convnet_forward.3} parent=0 // pred_check
    _
  $region3: #{convnet_forward.3} parent=0 // pred_check_branch
    %12 = sbr.rel (0) target = $region5
  $region4: #{convnet_forward.3} parent=0 // pred_region
    _
  $region5: #{convnet_forward.3} parent=0 // pred_fallthru
    _
  // Predicated region
  $region6: #{convnet_forward.3} parent=0 // pred_check
    _
  $region7: #{convnet_forward.3} parent=0 // pred_check_branch
    %14 = sbr.rel (0) target = $region9
  $region8: #{convnet_forward.3} parent=0 // pred_region
    _
  $region9: #{convnet_forward.3} parent=0 // pred_fallthru
    _
  // Predicated region
  $region10: #{convnet_forward.3} parent=0 // pred_check
    _
  $region11: #{convnet_forward.3} parent=0 // pred_check_branch
    %16 = sbr.rel (0) target = $region13
  $region12: #{convnet_forward.3} parent=0 // pred_region
    _
  $region13: #{convnet_forward.3} parent=0 // pred_fallthru
    _
  // Predicated region
  $region14: #{convnet_forward.3} parent=0 // pred_check
    _
  $region15: #{convnet_forward.3} parent=0 // pred_check_branch
    %18 = sbr.rel (0) target = $region17
  $region16: #{convnet_forward.3} parent=0 // pred_region
    _
  $region17: #{convnet_forward.3} parent=0 // pred_fallthru
    _
  // Predicated region
  $region18: #{convnet_forward.3} parent=0 // pred_check
    _
  $region19: #{convnet_forward.3} parent=0 // pred_check_branch
    %20 = sbr.rel (0) target = $region21
  $region20: #{convnet_forward.3} parent=0 // pred_region
    _
  $region21: #{convnet_forward.3} parent=0 // pred_fallthru
    _
  // Predicated region
  $region22: #{convnet_forward.3} parent=0 // pred_check
    _
  $region23: #{convnet_forward.3} parent=0 // pred_check_branch
    %22 = sbr.rel (0) target = $region25
  $region24: #{convnet_forward.3} parent=0 // pred_region
    _
  $region25: #{convnet_forward.3} parent=0 // pred_fallthru
    _
  %v24 = vld [vmem:[%s4] sm:$0xf]
  %v25 = vld [vmem:[%s4 + $0x4] sm:$0xf]
  %v26 = vld [vmem:[%s4 + $0x8] sm:$0xf]
  %v27 = vld [vmem:[%s4 + $0xc] sm:$0xf]
  %v28 = vld [vmem:[%s4 + $0x10] sm:$0xf]
  %v29 = vld [vmem:[%s4 + $0x14] sm:$0xf]
  %v30 = vld [vmem:[%s4 + $0x18] sm:$0xf]
  %v31 = vld [vmem:[%s4 + $0x1c] sm:$0xf]
  %v32 = vld [vmem:[%s4 + $0x20] sm:$0xf]
  %v33 = vld [vmem:[%s4 + $0x24] sm:$0xf]
  %v34 = vld [vmem:[%s4 + $0x28] sm:$0xf]
  %v35 = vld [vmem:[%s4 + $0x2c] sm:$0xf]
  %v36 = vld [vmem:[%s4 + $0x30] sm:$0xf]
  %v37 = vld [vmem:[%s4 + $0x34] sm:$0xf]
  %v38 = vld [vmem:[%s4 + $0x38] sm:$0xf]
  %v39 = vld [vmem:[%s4 + $0x3c] sm:$0xf]
  %v40 = vld [vmem:[%s0] sm:$0xf]
  %v41 = vld [vmem:[%s0 + $0x4] sm:$0xf]
  %v42 = vld [vmem:[%s0 + $0x8] sm:$0xf]
  %v43 = vld [vmem:[%s0 + $0xc] sm:$0xf]
  %v44 = vld [vmem:[%s0 + $0x10] sm:$0xf]
  %v45 = vld [vmem:[%s0 + $0x14] sm:$0xf]
  %v46 = vld [vmem:[%s0 + $0x18] sm:$0xf]
  %v47 = vld [vmem:[%s0 + $0x1c] sm:$0xf]
  %v48 = vld [vmem:[%s0 + $0x20] sm:$0xf]
  %v49 = vld [vmem:[%s0 + $0x24] sm:$0xf]
  %v50 = vld [vmem:[%s0 + $0x28] sm:$0xf]
  %v51 = vld [vmem:[%s0 + $0x2c] sm:$0xf]
  %v52 = vld [vmem:[%s0 + $0x30] sm:$0xf]
  %v53 = vld [vmem:[%s0 + $0x34] sm:$0xf]
  %v54 = vld [vmem:[%s0 + $0x38] sm:$0xf]
  %v55 = vld [vmem:[%s0 + $0x3c] sm:$0xf]
  %v56 = vld [vmem:[%s0 + $0x40] sm:$0xf]
  %v57 = vld [vmem:[%s0 + $0x44] sm:$0xf]
  %v58 = vld [vmem:[%s0 + $0x48] sm:$0xf]
  %v59 = vld [vmem:[%s0 + $0x4c] sm:$0xf]
  %v60 = vld [vmem:[%s0 + $0x50] sm:$0xf]
  %v61 = vld [vmem:[%s0 + $0x54] sm:$0xf]
  %v62 = vld [vmem:[%s0 + $0x58] sm:$0xf]
  %v63 = vld [vmem:[%s0 + $0x5c] sm:$0xf]
  %v64 = vld [vmem:[%s0 + $0x60] sm:$0xf]
  %v65 = vld [vmem:[%s0 + $0x64] sm:$0xf]
  %v66 = vld [vmem:[%s0 + $0x68] sm:$0xf]
  %v67 = vld [vmem:[%s0 + $0x6c] sm:$0xf]
  %v68 = vld [vmem:[%s0 + $0x70] sm:$0xf]
  %v69 = vld [vmem:[%s0 + $0x74] sm:$0xf]
  %v70 = vld [vmem:[%s0 + $0x78] sm:$0xf]
  %v71 = vld [vmem:[%s0 + $0x7c] sm:$0xf]
  %v72 = vld [vmem:[%s0 + $0x80] sm:$0xf]
  %v73 = vld [vmem:[%s0 + $0x84] sm:$0xf]
  %v74 = vld [vmem:[%s0 + $0x88] sm:$0xf]
  %v75 = vld [vmem:[%s0 + $0x8c] sm:$0xf]
  %v76 = vld [vmem:[%s0 + $0x90] sm:$0xf]
  %v77 = vld [vmem:[%s0 + $0x94] sm:$0xf]
  %v78 = vld [vmem:[%s0 + $0x98] sm:$0xf]
  %v79 = vld [vmem:[%s0 + $0x9c] sm:$0xf]
  %v80 = vld [vmem:[%s0 + $0xa0] sm:$0xf]
  %v81 = vld [vmem:[%s0 + $0xa4] sm:$0xf]
  %v82 = vld [vmem:[%s0 + $0xa8] sm:$0xf]
  %v83 = vld [vmem:[%s0 + $0xac] sm:$0xf]
  %v84 = vld [vmem:[%s0 + $0xb0] sm:$0xf]
  %v85 = vld [vmem:[%s0 + $0xb4] sm:$0xf]
  %v86 = vld [vmem:[%s0 + $0xb8] sm:$0xf]
  %v87 = vld [vmem:[%s0 + $0xbc] sm:$0xf]
  %v88 = vld [vmem:[%s0 + $0xc0] sm:$0xf]
  %v138 = vunpack.c.l.b16 %v40
  %v139 = vunpack.c.l.b16 %v41
  %v140 = vunpack.c.l.b16 %v42
  %v141 = vunpack.c.l.b16 %v43
  %v142 = vunpack.c.l.b16 %v44
  %v143 = vunpack.c.l.b16 %v45
  %v144 = vunpack.c.l.b16 %v46
  %v145 = vunpack.c.l.b16 %v47
  %v146 = vunpack.c.l.b16 %v48
  %v147 = vunpack.c.l.b16 %v49
  %v148 = vunpack.c.l.b16 %v50
  %v149 = vunpack.c.l.b16 %v51
  %v150 = vunpack.c.l.b16 %v52
  %v151 = vunpack.c.l.b16 %v53
  %v152 = vunpack.c.l.b16 %v54
  %v153 = vunpack.c.l.b16 %v55
  %v154 = vunpack.c.l.b16 %v56
  %v155 = vunpack.c.l.b16 %v57
  %v156 = vunpack.c.l.b16 %v58
  %v157 = vunpack.c.l.b16 %v59
  %v158 = vunpack.c.l.b16 %v60
  %v159 = vunpack.c.l.b16 %v61
  %v160 = vunpack.c.l.b16 %v62
  %v161 = vunpack.c.l.b16 %v63
  %v162 = vunpack.c.l.b16 %v64
  %v163 = vunpack.c.l.b16 %v65
  %v164 = vunpack.c.l.b16 %v66
  %v165 = vunpack.c.l.b16 %v67
  %v166 = vunpack.c.l.b16 %v68
  %v167 = vunpack.c.l.b16 %v69
  %v168 = vunpack.c.l.b16 %v70
  %v169 = vunpack.c.l.b16 %v71
  %v170 = vunpack.c.l.b16 %v72
  %v171 = vunpack.c.l.b16 %v73
  %v172 = vunpack.c.l.b16 %v74
  %v173 = vunpack.c.l.b16 %v75
  %v174 = vunpack.c.l.b16 %v76
  %v175 = vunpack.c.l.b16 %v77
  %v176 = vunpack.c.l.b16 %v78
  %v177 = vunpack.c.l.b16 %v79
  %v178 = vunpack.c.l.b16 %v80
  %v179 = vunpack.c.l.b16 %v81
  %v180 = vunpack.c.l.b16 %v82
  %v181 = vunpack.c.l.b16 %v83
  %v182 = vunpack.c.l.b16 %v84
  %v183 = vunpack.c.l.b16 %v85
  %v184 = vunpack.c.l.b16 %v86
  %v185 = vunpack.c.l.b16 %v87
  %v186 = vunpack.c.l.b16 %v88
  %v187 = vpack.c.b16 %v139, %v138
  %v188 = vpack.c.b16 %v141, %v140
  %v189 = vpack.c.b16 %v143, %v142
  %v190 = vpack.c.b16 %v145, %v144
  %v191 = vpack.c.b16 %v147, %v146
  %v192 = vpack.c.b16 %v149, %v148
  %v193 = vpack.c.b16 %v151, %v150
  %v194 = vpack.c.b16 %v153, %v152
  %v195 = vpack.c.b16 %v155, %v154
  %v196 = vpack.c.b16 %v157, %v156
  %v197 = vpack.c.b16 %v159, %v158
  %v198 = vpack.c.b16 %v161, %v160
  %v199 = vpack.c.b16 %v163, %v162
  %v200 = vpack.c.b16 %v165, %v164
  %v201 = vpack.c.b16 %v167, %v166
  %v202 = vpack.c.b16 %v169, %v168
  %v203 = vpack.c.b16 %v171, %v170
  %v204 = vpack.c.b16 %v173, %v172
  %v205 = vpack.c.b16 %v175, %v174
  %v206 = vpack.c.b16 %v177, %v176
  %v207 = vpack.c.b16 %v179, %v178
  %v208 = vpack.c.b16 %v181, %v180
  %v209 = vpack.c.b16 %v183, %v182
  %v210 = vpack.c.b16 %v185, %v184
  %v211 = vpack.c.b16 %v186, %v186
  %v253 = vunpack.c.l.b16 %v24
  %v254 = vunpack.c.l.b16 %v25
  %v255 = vunpack.c.l.b16 %v26
  %v256 = vunpack.c.l.b16 %v27
  %v257 = vunpack.c.l.b16 %v28
  %v258 = vunpack.c.l.b16 %v29
  %v259 = vunpack.c.l.b16 %v30
  %v260 = vunpack.c.l.b16 %v31
  %v261 = vunpack.c.l.b16 %v32
  %v262 = vunpack.c.l.b16 %v33
  %v263 = vunpack.c.l.b16 %v34
  %v264 = vunpack.c.l.b16 %v35
  %v265 = vunpack.c.l.b16 %v36
  %v266 = vunpack.c.l.b16 %v37
  %v267 = vunpack.c.l.b16 %v38
  %v268 = vunpack.c.l.b16 %v39
  %v269 = vpack.c.b16 %v254, %v253
  %v270 = vpack.c.b16 %v256, %v255
  %v271 = vpack.c.b16 %v258, %v257
  %v272 = vpack.c.b16 %v260, %v259
  %v273 = vpack.c.b16 %v262, %v261
  %v274 = vpack.c.b16 %v264, %v263
  %v275 = vpack.c.b16 %v266, %v265
  %v276 = vpack.c.b16 %v268, %v267
  %285 = vmatprep.subr.bf16.mxu0 0
  %286 = vmatpush1.bf16.msra.mxu0 %v276
  %287 = vmatprep.subr.bf16.mxu0 0
  %288 = vmatpush1.bf16.msra.mxu0 %v275
  %289 = vmatprep.subr.bf16.mxu0 0
  %290 = vmatpush1.bf16.msra.mxu0 %v274
  %291 = vmatprep.subr.bf16.mxu0 0
  %292 = vmatpush1.bf16.msra.mxu0 %v273
  %293 = vmatprep.subr.bf16.mxu0 0
  %294 = vmatpush1.bf16.msra.mxu0 %v272
  %295 = vmatprep.subr.bf16.mxu0 0
  %296 = vmatpush1.bf16.msra.mxu0 %v271
  %297 = vmatprep.subr.bf16.mxu0 0
  %298 = vmatpush1.bf16.msra.mxu0 %v270
  %299 = vmatprep.subr.bf16.mxu0 0
  %300 = vmatpush1.bf16.msra.mxu0 %v269
  %301 = vmatprep.subr.bf16.mxu0 0
  %302 = vmatpush2.bf16.msra.mxu0 0
  %303 = vmatprep.subr.bf16.mxu0 0
  %304 = vmatpush2.bf16.msra.mxu0 0
  %305 = vmatprep.subr.bf16.mxu0 0
  %306 = vmatpush2.bf16.msra.mxu0 0
  %307 = vmatprep.subr.bf16.mxu0 0
  %308 = vmatpush2.bf16.msra.mxu0 0
  %309 = vmatprep.subr.bf16.mxu0 0
  %310 = vmatpush2.bf16.msra.mxu0 0
  %311 = vmatprep.subr.bf16.mxu0 0
  %312 = vmatpush2.bf16.msra.mxu0 0
  %313 = vmatprep.subr.bf16.mxu0 0
  %314 = vmatpush2.bf16.msra.mxu0 0
  %315 = vmatprep.subr.bf16.mxu0 0
  %316 = vmatpush2.bf16.msra.mxu0 0
  %317 = vmatprep.mubr.bf16.mxu0 0
  %318 = vmatmul.mubr.bf16.gmra.mxu0 %v187
  %v319 = vpop.f32.mrf.mxu0
  %v320 = vadd.f32 0.0, %v319
  %v321 = vpop.f32.mrf.mxu0
  %v322 = vpop.f32.mrf.mxu0
  %v323 = vadd.f32 0.0, %v322
  %v324 = vpop.f32.mrf.mxu0
  %325 = vmatprep.mubr.bf16.mxu0 0
  %326 = vmatmul.mubr.bf16.gmra.mxu0 %v188
  %v327 = vpop.f32.mrf.mxu0
  %v328 = vadd.f32 0.0, %v327
  %v329 = vpop.f32.mrf.mxu0
  %v330 = vpop.f32.mrf.mxu0
  %v331 = vadd.f32 0.0, %v330
  %v332 = vpop.f32.mrf.mxu0
  %333 = vmatprep.mubr.bf16.mxu0 0
  %334 = vmatmul.mubr.bf16.gmra.mxu0 %v189
  %v335 = vpop.f32.mrf.mxu0
  %v336 = vadd.f32 0.0, %v335
  %v337 = vpop.f32.mrf.mxu0
  %v338 = vpop.f32.mrf.mxu0
  %v339 = vadd.f32 0.0, %v338
  %v340 = vpop.f32.mrf.mxu0
  %341 = vmatprep.mubr.bf16.mxu0 0
  %342 = vmatmul.mubr.bf16.gmra.mxu0 %v190
  %v343 = vpop.f32.mrf.mxu0
  %v344 = vadd.f32 0.0, %v343
  %v345 = vpop.f32.mrf.mxu0
  %v346 = vpop.f32.mrf.mxu0
  %v347 = vadd.f32 0.0, %v346
  %v348 = vpop.f32.mrf.mxu0
  %349 = vmatprep.mubr.bf16.mxu0 0
  %350 = vmatmul.mubr.bf16.gmra.mxu0 %v191
  %v351 = vpop.f32.mrf.mxu0
  %v352 = vadd.f32 0.0, %v351
  %v353 = vpop.f32.mrf.mxu0
  %v354 = vpop.f32.mrf.mxu0
  %v355 = vadd.f32 0.0, %v354
  %v356 = vpop.f32.mrf.mxu0
  %357 = vmatprep.mubr.bf16.mxu0 0
  %358 = vmatmul.mubr.bf16.gmra.mxu0 %v192
  %v359 = vpop.f32.mrf.mxu0
  %v360 = vadd.f32 0.0, %v359
  %v361 = vpop.f32.mrf.mxu0
  %v362 = vpop.f32.mrf.mxu0
  %v363 = vadd.f32 0.0, %v362
  %v364 = vpop.f32.mrf.mxu0
  %365 = vmatprep.mubr.bf16.mxu0 0
  %366 = vmatmul.mubr.bf16.gmra.mxu0 %v193
  %v367 = vpop.f32.mrf.mxu0
  %v368 = vadd.f32 0.0, %v367
  %v369 = vpop.f32.mrf.mxu0
  %v370 = vpop.f32.mrf.mxu0
  %v371 = vadd.f32 0.0, %v370
  %v372 = vpop.f32.mrf.mxu0
  %373 = vmatprep.mubr.bf16.mxu0 0
  %374 = vmatmul.mubr.bf16.gmra.mxu0 %v194
  %v375 = vpop.f32.mrf.mxu0
  %v376 = vadd.f32 0.0, %v375
  %v377 = vpop.f32.mrf.mxu0
  %v378 = vpop.f32.mrf.mxu0
  %v379 = vadd.f32 0.0, %v378
  %v380 = vpop.f32.mrf.mxu0
  %381 = vmatprep.mubr.bf16.mxu0 0
  %382 = vmatmul.mubr.bf16.gmra.mxu0 %v195
  %v383 = vpop.f32.mrf.mxu0
  %v384 = vadd.f32 0.0, %v383
  %v385 = vpop.f32.mrf.mxu0
  %v386 = vpop.f32.mrf.mxu0
  %v387 = vadd.f32 0.0, %v386
  %v388 = vpop.f32.mrf.mxu0
  %389 = vmatprep.mubr.bf16.mxu0 0
  %390 = vmatmul.mubr.bf16.gmra.mxu0 %v196
  %v391 = vpop.f32.mrf.mxu0
  %v392 = vadd.f32 0.0, %v391
  %v393 = vpop.f32.mrf.mxu0
  %v394 = vpop.f32.mrf.mxu0
  %v395 = vadd.f32 0.0, %v394
  %v396 = vpop.f32.mrf.mxu0
  %397 = vmatprep.mubr.bf16.mxu0 0
  %398 = vmatmul.mubr.bf16.gmra.mxu0 %v197
  %v399 = vpop.f32.mrf.mxu0
  %v400 = vadd.f32 0.0, %v399
  %v401 = vpop.f32.mrf.mxu0
  %v402 = vpop.f32.mrf.mxu0
  %v403 = vadd.f32 0.0, %v402
  %v404 = vpop.f32.mrf.mxu0
  %405 = vmatprep.mubr.bf16.mxu0 0
  %406 = vmatmul.mubr.bf16.gmra.mxu0 %v198
  %v407 = vpop.f32.mrf.mxu0
  %v408 = vadd.f32 0.0, %v407
  %v409 = vpop.f32.mrf.mxu0
  %v410 = vpop.f32.mrf.mxu0
  %v411 = vadd.f32 0.0, %v410
  %v412 = vpop.f32.mrf.mxu0
  %413 = vmatprep.mubr.bf16.mxu0 0
  %414 = vmatmul.mubr.bf16.gmra.mxu0 %v199
  %v415 = vpop.f32.mrf.mxu0
  %v416 = vadd.f32 0.0, %v415
  %v417 = vpop.f32.mrf.mxu0
  %v418 = vpop.f32.mrf.mxu0
  %v419 = vadd.f32 0.0, %v418
  %v420 = vpop.f32.mrf.mxu0
  %421 = vmatprep.mubr.bf16.mxu0 0
  %422 = vmatmul.mubr.bf16.gmra.mxu0 %v200
  %v423 = vpop.f32.mrf.mxu0
  %v424 = vadd.f32 0.0, %v423
  %v425 = vpop.f32.mrf.mxu0
  %v426 = vpop.f32.mrf.mxu0
  %v427 = vadd.f32 0.0, %v426
  %v428 = vpop.f32.mrf.mxu0
  %429 = vmatprep.mubr.bf16.mxu0 0
  %430 = vmatmul.mubr.bf16.gmra.mxu0 %v201
  %v431 = vpop.f32.mrf.mxu0
  %v432 = vadd.f32 0.0, %v431
  %v433 = vpop.f32.mrf.mxu0
  %v434 = vpop.f32.mrf.mxu0
  %v435 = vadd.f32 0.0, %v434
  %v436 = vpop.f32.mrf.mxu0
  %437 = vmatprep.mubr.bf16.mxu0 0
  %438 = vmatmul.mubr.bf16.gmra.mxu0 %v202
  %v439 = vpop.f32.mrf.mxu0
  %v440 = vadd.f32 0.0, %v439
  %v441 = vpop.f32.mrf.mxu0
  %v442 = vpop.f32.mrf.mxu0
  %v443 = vadd.f32 0.0, %v442
  %v444 = vpop.f32.mrf.mxu0
  %445 = vmatprep.mubr.bf16.mxu0 0
  %446 = vmatmul.mubr.bf16.gmra.mxu0 %v203
  %v447 = vpop.f32.mrf.mxu0
  %v448 = vadd.f32 0.0, %v447
  %v449 = vpop.f32.mrf.mxu0
  %v450 = vpop.f32.mrf.mxu0
  %v451 = vadd.f32 0.0, %v450
  %v452 = vpop.f32.mrf.mxu0
  %453 = vmatprep.mubr.bf16.mxu0 0
  %454 = vmatmul.mubr.bf16.gmra.mxu0 %v204
  %v455 = vpop.f32.mrf.mxu0
  %v456 = vadd.f32 0.0, %v455
  %v457 = vpop.f32.mrf.mxu0
  %v458 = vpop.f32.mrf.mxu0
  %v459 = vadd.f32 0.0, %v458
  %v460 = vpop.f32.mrf.mxu0
  %461 = vmatprep.mubr.bf16.mxu0 0
  %462 = vmatmul.mubr.bf16.gmra.mxu0 %v205
  %v463 = vpop.f32.mrf.mxu0
  %v464 = vadd.f32 0.0, %v463
  %v465 = vpop.f32.mrf.mxu0
  %v466 = vpop.f32.mrf.mxu0
  %v467 = vadd.f32 0.0, %v466
  %v468 = vpop.f32.mrf.mxu0
  %469 = vmatprep.mubr.bf16.mxu0 0
  %470 = vmatmul.mubr.bf16.gmra.mxu0 %v206
  %v471 = vpop.f32.mrf.mxu0
  %v472 = vadd.f32 0.0, %v471
  %v473 = vpop.f32.mrf.mxu0
  %v474 = vpop.f32.mrf.mxu0
  %v475 = vadd.f32 0.0, %v474
  %v476 = vpop.f32.mrf.mxu0
  %477 = vmatprep.mubr.bf16.mxu0 0
  %478 = vmatmul.mubr.bf16.gmra.mxu0 %v207
  %v479 = vpop.f32.mrf.mxu0
  %v480 = vadd.f32 0.0, %v479
  %v481 = vpop.f32.mrf.mxu0
  %v482 = vpop.f32.mrf.mxu0
  %v483 = vadd.f32 0.0, %v482
  %v484 = vpop.f32.mrf.mxu0
  %485 = vmatprep.mubr.bf16.mxu0 0
  %486 = vmatmul.mubr.bf16.gmra.mxu0 %v208
  %v487 = vpop.f32.mrf.mxu0
  %v488 = vadd.f32 0.0, %v487
  %v489 = vpop.f32.mrf.mxu0
  %v490 = vpop.f32.mrf.mxu0
  %v491 = vadd.f32 0.0, %v490
  %v492 = vpop.f32.mrf.mxu0
  %493 = vmatprep.mubr.bf16.mxu0 0
  %494 = vmatmul.mubr.bf16.gmra.mxu0 %v209
  %v495 = vpop.f32.mrf.mxu0
  %v496 = vadd.f32 0.0, %v495
  %v497 = vpop.f32.mrf.mxu0
  %v498 = vpop.f32.mrf.mxu0
  %v499 = vadd.f32 0.0, %v498
  %v500 = vpop.f32.mrf.mxu0
  %501 = vmatprep.mubr.bf16.mxu0 0
  %502 = vmatmul.mubr.bf16.gmra.mxu0 %v210
  %v503 = vpop.f32.mrf.mxu0
  %v504 = vadd.f32 0.0, %v503
  %v505 = vpop.f32.mrf.mxu0
  %v506 = vpop.f32.mrf.mxu0
  %v507 = vadd.f32 0.0, %v506
  %v508 = vpop.f32.mrf.mxu0
  %509 = vmatprep.mubr.bf16.mxu0 0
  %510 = vmatmul.mubr.bf16.gmra.mxu0 %v211
  %v511 = vpop.f32.mrf.mxu0
  %v512 = vadd.f32 0.0, %v511
  %v513 = vpop.f32.mrf.mxu0
  %v514 = vpop.f32.mrf.mxu0
  %v515 = vpop.f32.mrf.mxu0
  %516 = vdwg.mxu0
  %v517 = vld [vmem:[%s1] sm:$0xf]
  %v518 = vld [vmem:[%s1 + $0x4] sm:$0xf]
  %v519 = vld [vmem:[%s1 + $0x8] sm:$0xf]
  %v520 = vld [vmem:[%s1 + $0xc] sm:$0xf]
  %v521 = vld [vmem:[%s1 + $0x10] sm:$0xf]
  %v522 = vld [vmem:[%s1 + $0x14] sm:$0xf]
  %v523 = vld [vmem:[%s1 + $0x18] sm:$0xf]
  %v524 = vld [vmem:[%s1 + $0x1c] sm:$0xf]
  %v525 = vld [vmem:[%s1 + $0x20] sm:$0xf]
  %v526 = vld [vmem:[%s1 + $0x24] sm:$0xf]
  %v527 = vld [vmem:[%s1 + $0x28] sm:$0xf]
  %v528 = vld [vmem:[%s1 + $0x2c] sm:$0xf]
  %v529 = vld [vmem:[%s1 + $0x30] sm:$0xf]
  %v530 = vld [vmem:[%s1 + $0x34] sm:$0xf]
  %v531 = vld [vmem:[%s1 + $0x38] sm:$0xf]
  %v532 = vld [vmem:[%s1 + $0x3c] sm:$0xf]
  %v533 = vld [vmem:[%s1 + $0x40] sm:$0xf]
  %v534 = vld [vmem:[%s1 + $0x44] sm:$0xf]
  %v535 = vld [vmem:[%s1 + $0x48] sm:$0xf]
  %v536 = vld [vmem:[%s1 + $0x4c] sm:$0xf]
  %v537 = vld [vmem:[%s1 + $0x50] sm:$0xf]
  %v538 = vld [vmem:[%s1 + $0x54] sm:$0xf]
  %v539 = vld [vmem:[%s1 + $0x58] sm:$0xf]
  %v540 = vld [vmem:[%s1 + $0x5c] sm:$0xf]
  %v541 = vld [vmem:[%s1 + $0x60] sm:$0xf]
  %v542 = vld [vmem:[%s1 + $0x64] sm:$0xf]
  %v543 = vld [vmem:[%s1 + $0x68] sm:$0xf]
  %v544 = vld [vmem:[%s1 + $0x6c] sm:$0xf]
  %v545 = vld [vmem:[%s1 + $0x70] sm:$0xf]
  %v546 = vld [vmem:[%s1 + $0x74] sm:$0xf]
  %v547 = vld [vmem:[%s1 + $0x78] sm:$0xf]
  %v548 = vld [vmem:[%s1 + $0x7c] sm:$0xf]
  %v549 = vld [vmem:[%s1 + $0x80] sm:$0xf]
  %v550 = vld [vmem:[%s1 + $0x84] sm:$0xf]
  %v551 = vld [vmem:[%s1 + $0x88] sm:$0xf]
  %v552 = vld [vmem:[%s1 + $0x8c] sm:$0xf]
  %v553 = vld [vmem:[%s1 + $0x90] sm:$0xf]
  %v554 = vld [vmem:[%s1 + $0x94] sm:$0xf]
  %v555 = vld [vmem:[%s1 + $0x98] sm:$0xf]
  %v556 = vld [vmem:[%s1 + $0x9c] sm:$0xf]
  %v557 = vld [vmem:[%s1 + $0xa0] sm:$0xf]
  %v558 = vld [vmem:[%s1 + $0xa4] sm:$0xf]
  %v559 = vld [vmem:[%s1 + $0xa8] sm:$0xf]
  %v560 = vld [vmem:[%s1 + $0xac] sm:$0xf]
  %v561 = vld [vmem:[%s1 + $0xb0] sm:$0xf]
  %v562 = vld [vmem:[%s1 + $0xb4] sm:$0xf]
  %v563 = vld [vmem:[%s1 + $0xb8] sm:$0xf]
  %v564 = vld [vmem:[%s1 + $0xbc] sm:$0xf]
  %v565 = vld [vmem:[%s1 + $0xc0] sm:$0xf]
  %v615 = vunpack.c.l.b16 %v517
  %v616 = vunpack.c.l.b16 %v518
  %v617 = vunpack.c.l.b16 %v519
  %v618 = vunpack.c.l.b16 %v520
  %v619 = vunpack.c.l.b16 %v521
  %v620 = vunpack.c.l.b16 %v522
  %v621 = vunpack.c.l.b16 %v523
  %v622 = vunpack.c.l.b16 %v524
  %v623 = vunpack.c.l.b16 %v525
  %v624 = vunpack.c.l.b16 %v526
  %v625 = vunpack.c.l.b16 %v527
  %v626 = vunpack.c.l.b16 %v528
  %v627 = vunpack.c.l.b16 %v529
  %v628 = vunpack.c.l.b16 %v530
  %v629 = vunpack.c.l.b16 %v531
  %v630 = vunpack.c.l.b16 %v532
  %v631 = vunpack.c.l.b16 %v533
  %v632 = vunpack.c.l.b16 %v534
  %v633 = vunpack.c.l.b16 %v535
  %v634 = vunpack.c.l.b16 %v536
  %v635 = vunpack.c.l.b16 %v537
  %v636 = vunpack.c.l.b16 %v538
  %v637 = vunpack.c.l.b16 %v539
  %v638 = vunpack.c.l.b16 %v540
  %v639 = vunpack.c.l.b16 %v541
  %v640 = vunpack.c.l.b16 %v542
  %v641 = vunpack.c.l.b16 %v543
  %v642 = vunpack.c.l.b16 %v544
  %v643 = vunpack.c.l.b16 %v545
  %v644 = vunpack.c.l.b16 %v546
  %v645 = vunpack.c.l.b16 %v547
  %v646 = vunpack.c.l.b16 %v548
  %v647 = vunpack.c.l.b16 %v549
  %v648 = vunpack.c.l.b16 %v550
  %v649 = vunpack.c.l.b16 %v551
  %v650 = vunpack.c.l.b16 %v552
  %v651 = vunpack.c.l.b16 %v553
  %v652 = vunpack.c.l.b16 %v554
  %v653 = vunpack.c.l.b16 %v555
  %v654 = vunpack.c.l.b16 %v556
  %v655 = vunpack.c.l.b16 %v557
  %v656 = vunpack.c.l.b16 %v558
  %v657 = vunpack.c.l.b16 %v559
  %v658 = vunpack.c.l.b16 %v560
  %v659 = vunpack.c.l.b16 %v561
  %v660 = vunpack.c.l.b16 %v562
  %v661 = vunpack.c.l.b16 %v563
  %v662 = vunpack.c.l.b16 %v564
  %v663 = vunpack.c.l.b16 %v565
  %v664 = vpack.c.b16 %v616, %v615
  %v665 = vpack.c.b16 %v618, %v617
  %v666 = vpack.c.b16 %v620, %v619
  %v667 = vpack.c.b16 %v622, %v621
  %v668 = vpack.c.b16 %v624, %v623
  %v669 = vpack.c.b16 %v626, %v625
  %v670 = vpack.c.b16 %v628, %v627
  %v671 = vpack.c.b16 %v630, %v629
  %v672 = vpack.c.b16 %v632, %v631
  %v673 = vpack.c.b16 %v634, %v633
  %v674 = vpack.c.b16 %v636, %v635
  %v675 = vpack.c.b16 %v638, %v637
  %v676 = vpack.c.b16 %v640, %v639
  %v677 = vpack.c.b16 %v642, %v641
  %v678 = vpack.c.b16 %v644, %v643
  %v679 = vpack.c.b16 %v646, %v645
  %v680 = vpack.c.b16 %v648, %v647
  %v681 = vpack.c.b16 %v650, %v649
  %v682 = vpack.c.b16 %v652, %v651
  %v683 = vpack.c.b16 %v654, %v653
  %v684 = vpack.c.b16 %v656, %v655
  %v685 = vpack.c.b16 %v658, %v657
  %v686 = vpack.c.b16 %v660, %v659
  %v687 = vpack.c.b16 %v662, %v661
  %v688 = vpack.c.b16 %v663, %v663
  %714 = vmatprep.subr.bf16.mxu0 0
  %715 = vmatpush1.bf16.msra.mxu0 %v276
  %716 = vmatprep.subr.bf16.mxu0 0
  %717 = vmatpush1.bf16.msra.mxu0 %v275
  %718 = vmatprep.subr.bf16.mxu0 0
  %719 = vmatpush1.bf16.msra.mxu0 %v274
  %720 = vmatprep.subr.bf16.mxu0 0
  %721 = vmatpush1.bf16.msra.mxu0 %v273
  %722 = vmatprep.subr.bf16.mxu0 0
  %723 = vmatpush1.bf16.msra.mxu0 %v272
  %724 = vmatprep.subr.bf16.mxu0 0
  %725 = vmatpush1.bf16.msra.mxu0 %v271
  %726 = vmatprep.subr.bf16.mxu0 0
  %727 = vmatpush1.bf16.msra.mxu0 %v270
  %728 = vmatprep.subr.bf16.mxu0 0
  %729 = vmatpush1.bf16.msra.mxu0 %v269
  %730 = vmatprep.subr.bf16.mxu0 0
  %731 = vmatpush2.bf16.msra.mxu0 0
  %732 = vmatprep.subr.bf16.mxu0 0
  %733 = vmatpush2.bf16.msra.mxu0 0
  %734 = vmatprep.subr.bf16.mxu0 0
  %735 = vmatpush2.bf16.msra.mxu0 0
  %736 = vmatprep.subr.bf16.mxu0 0
  %737 = vmatpush2.bf16.msra.mxu0 0
  %738 = vmatprep.subr.bf16.mxu0 0
  %739 = vmatpush2.bf16.msra.mxu0 0
  %740 = vmatprep.subr.bf16.mxu0 0
  %741 = vmatpush2.bf16.msra.mxu0 0
  %742 = vmatprep.subr.bf16.mxu0 0
  %743 = vmatpush2.bf16.msra.mxu0 0
  %744 = vmatprep.subr.bf16.mxu0 0
  %745 = vmatpush2.bf16.msra.mxu0 0
  %746 = vmatprep.mubr.bf16.mxu0 0
  %747 = vmatmul.mubr.bf16.gmra.mxu0 %v664
  %v748 = vpop.f32.mrf.mxu0
  %v749 = vadd.f32 0.0, %v748
  %v750 = vpop.f32.mrf.mxu0
  %v751 = vpop.f32.mrf.mxu0
  %v752 = vadd.f32 0.0, %v751
  %v753 = vpop.f32.mrf.mxu0
  %754 = vmatprep.mubr.bf16.mxu0 0
  %755 = vmatmul.mubr.bf16.gmra.mxu0 %v665
  %v756 = vpop.f32.mrf.mxu0
  %v757 = vadd.f32 0.0, %v756
  %v758 = vpop.f32.mrf.mxu0
  %v759 = vpop.f32.mrf.mxu0
  %v760 = vadd.f32 0.0, %v759
  %v761 = vpop.f32.mrf.mxu0
  %762 = vmatprep.mubr.bf16.mxu0 0
  %763 = vmatmul.mubr.bf16.gmra.mxu0 %v666
  %v764 = vpop.f32.mrf.mxu0
  %v765 = vadd.f32 0.0, %v764
  %v766 = vpop.f32.mrf.mxu0
  %v767 = vpop.f32.mrf.mxu0
  %v768 = vadd.f32 0.0, %v767
  %v769 = vpop.f32.mrf.mxu0
  %770 = vmatprep.mubr.bf16.mxu0 0
  %771 = vmatmul.mubr.bf16.gmra.mxu0 %v667
  %v772 = vpop.f32.mrf.mxu0
  %v773 = vadd.f32 0.0, %v772
  %v774 = vpop.f32.mrf.mxu0
  %v775 = vpop.f32.mrf.mxu0
  %v776 = vadd.f32 0.0, %v775
  %v777 = vpop.f32.mrf.mxu0
  %778 = vmatprep.mubr.bf16.mxu0 0
  %779 = vmatmul.mubr.bf16.gmra.mxu0 %v668
  %v780 = vpop.f32.mrf.mxu0
  %v781 = vadd.f32 0.0, %v780
  %v782 = vpop.f32.mrf.mxu0
  %v783 = vpop.f32.mrf.mxu0
  %v784 = vadd.f32 0.0, %v783
  %v785 = vpop.f32.mrf.mxu0
  %786 = vmatprep.mubr.bf16.mxu0 0
  %787 = vmatmul.mubr.bf16.gmra.mxu0 %v669
  %v788 = vpop.f32.mrf.mxu0
  %v789 = vadd.f32 0.0, %v788
  %v790 = vpop.f32.mrf.mxu0
  %v791 = vpop.f32.mrf.mxu0
  %v792 = vadd.f32 0.0, %v791
  %v793 = vpop.f32.mrf.mxu0
  %794 = vmatprep.mubr.bf16.mxu0 0
  %795 = vmatmul.mubr.bf16.gmra.mxu0 %v670
  %v796 = vpop.f32.mrf.mxu0
  %v797 = vadd.f32 0.0, %v796
  %v798 = vpop.f32.mrf.mxu0
  %v799 = vpop.f32.mrf.mxu0
  %v800 = vadd.f32 0.0, %v799
  %v801 = vpop.f32.mrf.mxu0
  %802 = vmatprep.mubr.bf16.mxu0 0
  %803 = vmatmul.mubr.bf16.gmra.mxu0 %v671
  %v804 = vpop.f32.mrf.mxu0
  %v805 = vadd.f32 0.0, %v804
  %v806 = vpop.f32.mrf.mxu0
  %v807 = vpop.f32.mrf.mxu0
  %v808 = vadd.f32 0.0, %v807
  %v809 = vpop.f32.mrf.mxu0
  %810 = vmatprep.mubr.bf16.mxu0 0
  %811 = vmatmul.mubr.bf16.gmra.mxu0 %v672
  %v812 = vpop.f32.mrf.mxu0
  %v813 = vadd.f32 0.0, %v812
  %v814 = vpop.f32.mrf.mxu0
  %v815 = vpop.f32.mrf.mxu0
  %v816 = vadd.f32 0.0, %v815
  %v817 = vpop.f32.mrf.mxu0
  %818 = vmatprep.mubr.bf16.mxu0 0
  %819 = vmatmul.mubr.bf16.gmra.mxu0 %v673
  %v820 = vpop.f32.mrf.mxu0
  %v821 = vadd.f32 0.0, %v820
  %v822 = vpop.f32.mrf.mxu0
  %v823 = vpop.f32.mrf.mxu0
  %v824 = vadd.f32 0.0, %v823
  %v825 = vpop.f32.mrf.mxu0
  %826 = vmatprep.mubr.bf16.mxu0 0
  %827 = vmatmul.mubr.bf16.gmra.mxu0 %v674
  %v828 = vpop.f32.mrf.mxu0
  %v829 = vadd.f32 0.0, %v828
  %v830 = vpop.f32.mrf.mxu0
  %v831 = vpop.f32.mrf.mxu0
  %v832 = vadd.f32 0.0, %v831
  %v833 = vpop.f32.mrf.mxu0
  %834 = vmatprep.mubr.bf16.mxu0 0
  %835 = vmatmul.mubr.bf16.gmra.mxu0 %v675
  %v836 = vpop.f32.mrf.mxu0
  %v837 = vadd.f32 0.0, %v836
  %v838 = vpop.f32.mrf.mxu0
  %v839 = vpop.f32.mrf.mxu0
  %v840 = vadd.f32 0.0, %v839
  %v841 = vpop.f32.mrf.mxu0
  %842 = vmatprep.mubr.bf16.mxu0 0
  %843 = vmatmul.mubr.bf16.gmra.mxu0 %v676
  %v844 = vpop.f32.mrf.mxu0
  %v845 = vadd.f32 0.0, %v844
  %v846 = vpop.f32.mrf.mxu0
  %v847 = vpop.f32.mrf.mxu0
  %v848 = vadd.f32 0.0, %v847
  %v849 = vpop.f32.mrf.mxu0
  %850 = vmatprep.mubr.bf16.mxu0 0
  %851 = vmatmul.mubr.bf16.gmra.mxu0 %v677
  %v852 = vpop.f32.mrf.mxu0
  %v853 = vadd.f32 0.0, %v852
  %v854 = vpop.f32.mrf.mxu0
  %v855 = vpop.f32.mrf.mxu0
  %v856 = vadd.f32 0.0, %v855
  %v857 = vpop.f32.mrf.mxu0
  %858 = vmatprep.mubr.bf16.mxu0 0
  %859 = vmatmul.mubr.bf16.gmra.mxu0 %v678
  %v860 = vpop.f32.mrf.mxu0
  %v861 = vadd.f32 0.0, %v860
  %v862 = vpop.f32.mrf.mxu0
  %v863 = vpop.f32.mrf.mxu0
  %v864 = vadd.f32 0.0, %v863
  %v865 = vpop.f32.mrf.mxu0
  %866 = vmatprep.mubr.bf16.mxu0 0
  %867 = vmatmul.mubr.bf16.gmra.mxu0 %v679
  %v868 = vpop.f32.mrf.mxu0
  %v869 = vadd.f32 0.0, %v868
  %v870 = vpop.f32.mrf.mxu0
  %v871 = vpop.f32.mrf.mxu0
  %v872 = vadd.f32 0.0, %v871
  %v873 = vpop.f32.mrf.mxu0
  %874 = vmatprep.mubr.bf16.mxu0 0
  %875 = vmatmul.mubr.bf16.gmra.mxu0 %v680
  %v876 = vpop.f32.mrf.mxu0
  %v877 = vadd.f32 0.0, %v876
  %v878 = vpop.f32.mrf.mxu0
  %v879 = vpop.f32.mrf.mxu0
  %v880 = vadd.f32 0.0, %v879
  %v881 = vpop.f32.mrf.mxu0
  %882 = vmatprep.mubr.bf16.mxu0 0
  %883 = vmatmul.mubr.bf16.gmra.mxu0 %v681
  %v884 = vpop.f32.mrf.mxu0
  %v885 = vadd.f32 0.0, %v884
  %v886 = vpop.f32.mrf.mxu0
  %v887 = vpop.f32.mrf.mxu0
  %v888 = vadd.f32 0.0, %v887
  %v889 = vpop.f32.mrf.mxu0
  %890 = vmatprep.mubr.bf16.mxu0 0
  %891 = vmatmul.mubr.bf16.gmra.mxu0 %v682
  %v892 = vpop.f32.mrf.mxu0
  %v893 = vadd.f32 0.0, %v892
  %v894 = vpop.f32.mrf.mxu0
  %v895 = vpop.f32.mrf.mxu0
  %v896 = vadd.f32 0.0, %v895
  %v897 = vpop.f32.mrf.mxu0
  %898 = vmatprep.mubr.bf16.mxu0 0
  %899 = vmatmul.mubr.bf16.gmra.mxu0 %v683
  %v900 = vpop.f32.mrf.mxu0
  %v901 = vadd.f32 0.0, %v900
  %v902 = vpop.f32.mrf.mxu0
  %v903 = vpop.f32.mrf.mxu0
  %v904 = vadd.f32 0.0, %v903
  %v905 = vpop.f32.mrf.mxu0
  %906 = vmatprep.mubr.bf16.mxu0 0
  %907 = vmatmul.mubr.bf16.gmra.mxu0 %v684
  %v908 = vpop.f32.mrf.mxu0
  %v909 = vadd.f32 0.0, %v908
  %v910 = vpop.f32.mrf.mxu0
  %v911 = vpop.f32.mrf.mxu0
  %v912 = vadd.f32 0.0, %v911
  %v913 = vpop.f32.mrf.mxu0
  %914 = vmatprep.mubr.bf16.mxu0 0
  %915 = vmatmul.mubr.bf16.gmra.mxu0 %v685
  %v916 = vpop.f32.mrf.mxu0
  %v917 = vadd.f32 0.0, %v916
  %v918 = vpop.f32.mrf.mxu0
  %v919 = vpop.f32.mrf.mxu0
  %v920 = vadd.f32 0.0, %v919
  %v921 = vpop.f32.mrf.mxu0
  %922 = vmatprep.mubr.bf16.mxu0 0
  %923 = vmatmul.mubr.bf16.gmra.mxu0 %v686
  %v924 = vpop.f32.mrf.mxu0
  %v925 = vadd.f32 0.0, %v924
  %v926 = vpop.f32.mrf.mxu0
  %v927 = vpop.f32.mrf.mxu0
  %v928 = vadd.f32 0.0, %v927
  %v929 = vpop.f32.mrf.mxu0
  %930 = vmatprep.mubr.bf16.mxu0 0
  %931 = vmatmul.mubr.bf16.gmra.mxu0 %v687
  %v932 = vpop.f32.mrf.mxu0
  %v933 = vadd.f32 0.0, %v932
  %v934 = vpop.f32.mrf.mxu0
  %v935 = vpop.f32.mrf.mxu0
  %v936 = vadd.f32 0.0, %v935
  %v937 = vpop.f32.mrf.mxu0
  %938 = vmatprep.mubr.bf16.mxu0 0
  %939 = vmatmul.mubr.bf16.gmra.mxu0 %v688
  %v940 = vpop.f32.mrf.mxu0
  %v941 = vadd.f32 0.0, %v940
  %v942 = vpop.f32.mrf.mxu0
  %v943 = vpop.f32.mrf.mxu0
  %v944 = vpop.f32.mrf.mxu0
  %945 = vdwg.mxu0
  %v946 = vmax.f32 %v320, %v749
  %v947 = vmax.f32 %v323, %v752
  %v948 = vmax.f32 %v328, %v757
  %v949 = vmax.f32 %v331, %v760
  %v950 = vmax.f32 %v336, %v765
  %v951 = vmax.f32 %v339, %v768
  %v952 = vmax.f32 %v344, %v773
  %v953 = vmax.f32 %v347, %v776
  %v954 = vmax.f32 %v352, %v781
  %v955 = vmax.f32 %v355, %v784
  %v956 = vmax.f32 %v360, %v789
  %v957 = vmax.f32 %v363, %v792
  %v958 = vmax.f32 %v368, %v797
  %v959 = vmax.f32 %v371, %v800
  %v960 = vmax.f32 %v376, %v805
  %v961 = vmax.f32 %v379, %v808
  %v962 = vmax.f32 %v384, %v813
  %v963 = vmax.f32 %v387, %v816
  %v964 = vmax.f32 %v392, %v821
  %v965 = vmax.f32 %v395, %v824
  %v966 = vmax.f32 %v400, %v829
  %v967 = vmax.f32 %v403, %v832
  %v968 = vmax.f32 %v408, %v837
  %v969 = vmax.f32 %v411, %v840
  %v970 = vmax.f32 %v416, %v845
  %v971 = vmax.f32 %v419, %v848
  %v972 = vmax.f32 %v424, %v853
  %v973 = vmax.f32 %v427, %v856
  %v974 = vmax.f32 %v432, %v861
  %v975 = vmax.f32 %v435, %v864
  %v976 = vmax.f32 %v440, %v869
  %v977 = vmax.f32 %v443, %v872
  %v978 = vmax.f32 %v448, %v877
  %v979 = vmax.f32 %v451, %v880
  %v980 = vmax.f32 %v456, %v885
  %v981 = vmax.f32 %v459, %v888
  %v982 = vmax.f32 %v464, %v893
  %v983 = vmax.f32 %v467, %v896
  %v984 = vmax.f32 %v472, %v901
  %v985 = vmax.f32 %v475, %v904
  %v986 = vmax.f32 %v480, %v909
  %v987 = vmax.f32 %v483, %v912
  %v988 = vmax.f32 %v488, %v917
  %v989 = vmax.f32 %v491, %v920
  %v990 = vmax.f32 %v496, %v925
  %v991 = vmax.f32 %v499, %v928
  %v992 = vmax.f32 %v504, %v933
  %v993 = vmax.f32 %v507, %v936
  %v994 = vmax.f32 %v512, %v941
  %v995 = vld [vmem:[%s2] sm:$0xf]
  %v996 = vld [vmem:[%s2 + $0x4] sm:$0xf]
  %v997 = vld [vmem:[%s2 + $0x8] sm:$0xf]
  %v998 = vld [vmem:[%s2 + $0xc] sm:$0xf]
  %v999 = vld [vmem:[%s2 + $0x10] sm:$0xf]
  %v1000 = vld [vmem:[%s2 + $0x14] sm:$0xf]
  %v1001 = vld [vmem:[%s2 + $0x18] sm:$0xf]
  %v1002 = vld [vmem:[%s2 + $0x1c] sm:$0xf]
  %v1003 = vld [vmem:[%s2 + $0x20] sm:$0xf]
  %v1004 = vld [vmem:[%s2 + $0x24] sm:$0xf]
  %v1005 = vld [vmem:[%s2 + $0x28] sm:$0xf]
  %v1006 = vld [vmem:[%s2 + $0x2c] sm:$0xf]
  %v1007 = vld [vmem:[%s2 + $0x30] sm:$0xf]
  %v1008 = vld [vmem:[%s2 + $0x34] sm:$0xf]
  %v1009 = vld [vmem:[%s2 + $0x38] sm:$0xf]
  %v1010 = vld [vmem:[%s2 + $0x3c] sm:$0xf]
  %v1011 = vld [vmem:[%s2 + $0x40] sm:$0xf]
  %v1012 = vld [vmem:[%s2 + $0x44] sm:$0xf]
  %v1013 = vld [vmem:[%s2 + $0x48] sm:$0xf]
  %v1014 = vld [vmem:[%s2 + $0x4c] sm:$0xf]
  %v1015 = vld [vmem:[%s2 + $0x50] sm:$0xf]
  %v1016 = vld [vmem:[%s2 + $0x54] sm:$0xf]
  %v1017 = vld [vmem:[%s2 + $0x58] sm:$0xf]
  %v1018 = vld [vmem:[%s2 + $0x5c] sm:$0xf]
  %v1019 = vld [vmem:[%s2 + $0x60] sm:$0xf]
  %v1020 = vld [vmem:[%s2 + $0x64] sm:$0xf]
  %v1021 = vld [vmem:[%s2 + $0x68] sm:$0xf]
  %v1022 = vld [vmem:[%s2 + $0x6c] sm:$0xf]
  %v1023 = vld [vmem:[%s2 + $0x70] sm:$0xf]
  %v1024 = vld [vmem:[%s2 + $0x74] sm:$0xf]
  %v1025 = vld [vmem:[%s2 + $0x78] sm:$0xf]
  %v1026 = vld [vmem:[%s2 + $0x7c] sm:$0xf]
  %v1027 = vld [vmem:[%s2 + $0x80] sm:$0xf]
  %v1028 = vld [vmem:[%s2 + $0x84] sm:$0xf]
  %v1029 = vld [vmem:[%s2 + $0x88] sm:$0xf]
  %v1030 = vld [vmem:[%s2 + $0x8c] sm:$0xf]
  %v1031 = vld [vmem:[%s2 + $0x90] sm:$0xf]
  %v1032 = vld [vmem:[%s2 + $0x94] sm:$0xf]
  %v1033 = vld [vmem:[%s2 + $0x98] sm:$0xf]
  %v1034 = vld [vmem:[%s2 + $0x9c] sm:$0xf]
  %v1035 = vld [vmem:[%s2 + $0xa0] sm:$0xf]
  %v1036 = vld [vmem:[%s2 + $0xa4] sm:$0xf]
  %v1037 = vld [vmem:[%s2 + $0xa8] sm:$0xf]
  %v1038 = vld [vmem:[%s2 + $0xac] sm:$0xf]
  %v1039 = vld [vmem:[%s2 + $0xb0] sm:$0xf]
  %v1040 = vld [vmem:[%s2 + $0xb4] sm:$0xf]
  %v1041 = vld [vmem:[%s2 + $0xb8] sm:$0xf]
  %v1042 = vld [vmem:[%s2 + $0xbc] sm:$0xf]
  %v1043 = vld [vmem:[%s2 + $0xc0] sm:$0xf]
  %v1093 = vunpack.c.l.b16 %v995
  %v1094 = vunpack.c.l.b16 %v996
  %v1095 = vunpack.c.l.b16 %v997
  %v1096 = vunpack.c.l.b16 %v998
  %v1097 = vunpack.c.l.b16 %v999
  %v1098 = vunpack.c.l.b16 %v1000
  %v1099 = vunpack.c.l.b16 %v1001
  %v1100 = vunpack.c.l.b16 %v1002
  %v1101 = vunpack.c.l.b16 %v1003
  %v1102 = vunpack.c.l.b16 %v1004
  %v1103 = vunpack.c.l.b16 %v1005
  %v1104 = vunpack.c.l.b16 %v1006
  %v1105 = vunpack.c.l.b16 %v1007
  %v1106 = vunpack.c.l.b16 %v1008
  %v1107 = vunpack.c.l.b16 %v1009
  %v1108 = vunpack.c.l.b16 %v1010
  %v1109 = vunpack.c.l.b16 %v1011
  %v1110 = vunpack.c.l.b16 %v1012
  %v1111 = vunpack.c.l.b16 %v1013
  %v1112 = vunpack.c.l.b16 %v1014
  %v1113 = vunpack.c.l.b16 %v1015
  %v1114 = vunpack.c.l.b16 %v1016
  %v1115 = vunpack.c.l.b16 %v1017
  %v1116 = vunpack.c.l.b16 %v1018
  %v1117 = vunpack.c.l.b16 %v1019
  %v1118 = vunpack.c.l.b16 %v1020
  %v1119 = vunpack.c.l.b16 %v1021
  %v1120 = vunpack.c.l.b16 %v1022
  %v1121 = vunpack.c.l.b16 %v1023
  %v1122 = vunpack.c.l.b16 %v1024
  %v1123 = vunpack.c.l.b16 %v1025
  %v1124 = vunpack.c.l.b16 %v1026
  %v1125 = vunpack.c.l.b16 %v1027
  %v1126 = vunpack.c.l.b16 %v1028
  %v1127 = vunpack.c.l.b16 %v1029
  %v1128 = vunpack.c.l.b16 %v1030
  %v1129 = vunpack.c.l.b16 %v1031
  %v1130 = vunpack.c.l.b16 %v1032
  %v1131 = vunpack.c.l.b16 %v1033
  %v1132 = vunpack.c.l.b16 %v1034
  %v1133 = vunpack.c.l.b16 %v1035
  %v1134 = vunpack.c.l.b16 %v1036
  %v1135 = vunpack.c.l.b16 %v1037
  %v1136 = vunpack.c.l.b16 %v1038
  %v1137 = vunpack.c.l.b16 %v1039
  %v1138 = vunpack.c.l.b16 %v1040
  %v1139 = vunpack.c.l.b16 %v1041
  %v1140 = vunpack.c.l.b16 %v1042
  %v1141 = vunpack.c.l.b16 %v1043
  %v1142 = vpack.c.b16 %v1094, %v1093
  %v1143 = vpack.c.b16 %v1096, %v1095
  %v1144 = vpack.c.b16 %v1098, %v1097
  %v1145 = vpack.c.b16 %v1100, %v1099
  %v1146 = vpack.c.b16 %v1102, %v1101
  %v1147 = vpack.c.b16 %v1104, %v1103
  %v1148 = vpack.c.b16 %v1106, %v1105
  %v1149 = vpack.c.b16 %v1108, %v1107
  %v1150 = vpack.c.b16 %v1110, %v1109
  %v1151 = vpack.c.b16 %v1112, %v1111
  %v1152 = vpack.c.b16 %v1114, %v1113
  %v1153 = vpack.c.b16 %v1116, %v1115
  %v1154 = vpack.c.b16 %v1118, %v1117
  %v1155 = vpack.c.b16 %v1120, %v1119
  %v1156 = vpack.c.b16 %v1122, %v1121
  %v1157 = vpack.c.b16 %v1124, %v1123
  %v1158 = vpack.c.b16 %v1126, %v1125
  %v1159 = vpack.c.b16 %v1128, %v1127
  %v1160 = vpack.c.b16 %v1130, %v1129
  %v1161 = vpack.c.b16 %v1132, %v1131
  %v1162 = vpack.c.b16 %v1134, %v1133
  %v1163 = vpack.c.b16 %v1136, %v1135
  %v1164 = vpack.c.b16 %v1138, %v1137
  %v1165 = vpack.c.b16 %v1140, %v1139
  %v1166 = vpack.c.b16 %v1141, %v1141
  %1192 = vmatprep.subr.bf16.mxu0 0
  %1193 = vmatpush1.bf16.msra.mxu0 %v276
  %1194 = vmatprep.subr.bf16.mxu0 0
  %1195 = vmatpush1.bf16.msra.mxu0 %v275
  %1196 = vmatprep.subr.bf16.mxu0 0
  %1197 = vmatpush1.bf16.msra.mxu0 %v274
  %1198 = vmatprep.subr.bf16.mxu0 0
  %1199 = vmatpush1.bf16.msra.mxu0 %v273
  %1200 = vmatprep.subr.bf16.mxu0 0
  %1201 = vmatpush1.bf16.msra.mxu0 %v272
  %1202 = vmatprep.subr.bf16.mxu0 0
  %1203 = vmatpush1.bf16.msra.mxu0 %v271
  %1204 = vmatprep.subr.bf16.mxu0 0
  %1205 = vmatpush1.bf16.msra.mxu0 %v270
  %1206 = vmatprep.subr.bf16.mxu0 0
  %1207 = vmatpush1.bf16.msra.mxu0 %v269
  %1208 = vmatprep.subr.bf16.mxu0 0
  %1209 = vmatpush2.bf16.msra.mxu0 0
  %1210 = vmatprep.subr.bf16.mxu0 0
  %1211 = vmatpush2.bf16.msra.mxu0 0
  %1212 = vmatprep.subr.bf16.mxu0 0
  %1213 = vmatpush2.bf16.msra.mxu0 0
  %1214 = vmatprep.subr.bf16.mxu0 0
  %1215 = vmatpush2.bf16.msra.mxu0 0
  %1216 = vmatprep.subr.bf16.mxu0 0
  %1217 = vmatpush2.bf16.msra.mxu0 0
  %1218 = vmatprep.subr.bf16.mxu0 0
  %1219 = vmatpush2.bf16.msra.mxu0 0
  %1220 = vmatprep.subr.bf16.mxu0 0
  %1221 = vmatpush2.bf16.msra.mxu0 0
  %1222 = vmatprep.subr.bf16.mxu0 0
  %1223 = vmatpush2.bf16.msra.mxu0 0
  %1224 = vmatprep.mubr.bf16.mxu0 0
  %1225 = vmatmul.mubr.bf16.gmra.mxu0 %v1142
  %v1226 = vpop.f32.mrf.mxu0
  %v1227 = vadd.f32 0.0, %v1226
  %v1228 = vpop.f32.mrf.mxu0
  %v1229 = vpop.f32.mrf.mxu0
  %v1230 = vadd.f32 0.0, %v1229
  %v1231 = vpop.f32.mrf.mxu0
  %1232 = vmatprep.mubr.bf16.mxu0 0
  %1233 = vmatmul.mubr.bf16.gmra.mxu0 %v1143
  %v1234 = vpop.f32.mrf.mxu0
  %v1235 = vadd.f32 0.0, %v1234
  %v1236 = vpop.f32.mrf.mxu0
  %v1237 = vpop.f32.mrf.mxu0
  %v1238 = vadd.f32 0.0, %v1237
  %v1239 = vpop.f32.mrf.mxu0
  %1240 = vmatprep.mubr.bf16.mxu0 0
  %1241 = vmatmul.mubr.bf16.gmra.mxu0 %v1144
  %v1242 = vpop.f32.mrf.mxu0
  %v1243 = vadd.f32 0.0, %v1242
  %v1244 = vpop.f32.mrf.mxu0
  %v1245 = vpop.f32.mrf.mxu0
  %v1246 = vadd.f32 0.0, %v1245
  %v1247 = vpop.f32.mrf.mxu0
  %1248 = vmatprep.mubr.bf16.mxu0 0
  %1249 = vmatmul.mubr.bf16.gmra.mxu0 %v1145
  %v1250 = vpop.f32.mrf.mxu0
  %v1251 = vadd.f32 0.0, %v1250
  %v1252 = vpop.f32.mrf.mxu0
  %v1253 = vpop.f32.mrf.mxu0
  %v1254 = vadd.f32 0.0, %v1253
  %v1255 = vpop.f32.mrf.mxu0
  %1256 = vmatprep.mubr.bf16.mxu0 0
  %1257 = vmatmul.mubr.bf16.gmra.mxu0 %v1146
  %v1258 = vpop.f32.mrf.mxu0
  %v1259 = vadd.f32 0.0, %v1258
  %v1260 = vpop.f32.mrf.mxu0
  %v1261 = vpop.f32.mrf.mxu0
  %v1262 = vadd.f32 0.0, %v1261
  %v1263 = vpop.f32.mrf.mxu0
  %1264 = vmatprep.mubr.bf16.mxu0 0
  %1265 = vmatmul.mubr.bf16.gmra.mxu0 %v1147
  %v1266 = vpop.f32.mrf.mxu0
  %v1267 = vadd.f32 0.0, %v1266
  %v1268 = vpop.f32.mrf.mxu0
  %v1269 = vpop.f32.mrf.mxu0
  %v1270 = vadd.f32 0.0, %v1269
  %v1271 = vpop.f32.mrf.mxu0
  %1272 = vmatprep.mubr.bf16.mxu0 0
  %1273 = vmatmul.mubr.bf16.gmra.mxu0 %v1148
  %v1274 = vpop.f32.mrf.mxu0
  %v1275 = vadd.f32 0.0, %v1274
  %v1276 = vpop.f32.mrf.mxu0
  %v1277 = vpop.f32.mrf.mxu0
  %v1278 = vadd.f32 0.0, %v1277
  %v1279 = vpop.f32.mrf.mxu0
  %1280 = vmatprep.mubr.bf16.mxu0 0
  %1281 = vmatmul.mubr.bf16.gmra.mxu0 %v1149
  %v1282 = vpop.f32.mrf.mxu0
  %v1283 = vadd.f32 0.0, %v1282
  %v1284 = vpop.f32.mrf.mxu0
  %v1285 = vpop.f32.mrf.mxu0
  %v1286 = vadd.f32 0.0, %v1285
  %v1287 = vpop.f32.mrf.mxu0
  %1288 = vmatprep.mubr.bf16.mxu0 0
  %1289 = vmatmul.mubr.bf16.gmra.mxu0 %v1150
  %v1290 = vpop.f32.mrf.mxu0
  %v1291 = vadd.f32 0.0, %v1290
  %v1292 = vpop.f32.mrf.mxu0
  %v1293 = vpop.f32.mrf.mxu0
  %v1294 = vadd.f32 0.0, %v1293
  %v1295 = vpop.f32.mrf.mxu0
  %1296 = vmatprep.mubr.bf16.mxu0 0
  %1297 = vmatmul.mubr.bf16.gmra.mxu0 %v1151
  %v1298 = vpop.f32.mrf.mxu0
  %v1299 = vadd.f32 0.0, %v1298
  %v1300 = vpop.f32.mrf.mxu0
  %v1301 = vpop.f32.mrf.mxu0
  %v1302 = vadd.f32 0.0, %v1301
  %v1303 = vpop.f32.mrf.mxu0
  %1304 = vmatprep.mubr.bf16.mxu0 0
  %1305 = vmatmul.mubr.bf16.gmra.mxu0 %v1152
  %v1306 = vpop.f32.mrf.mxu0
  %v1307 = vadd.f32 0.0, %v1306
  %v1308 = vpop.f32.mrf.mxu0
  %v1309 = vpop.f32.mrf.mxu0
  %v1310 = vadd.f32 0.0, %v1309
  %v1311 = vpop.f32.mrf.mxu0
  %1312 = vmatprep.mubr.bf16.mxu0 0
  %1313 = vmatmul.mubr.bf16.gmra.mxu0 %v1153
  %v1314 = vpop.f32.mrf.mxu0
  %v1315 = vadd.f32 0.0, %v1314
  %v1316 = vpop.f32.mrf.mxu0
  %v1317 = vpop.f32.mrf.mxu0
  %v1318 = vadd.f32 0.0, %v1317
  %v1319 = vpop.f32.mrf.mxu0
  %1320 = vmatprep.mubr.bf16.mxu0 0
  %1321 = vmatmul.mubr.bf16.gmra.mxu0 %v1154
  %v1322 = vpop.f32.mrf.mxu0
  %v1323 = vadd.f32 0.0, %v1322
  %v1324 = vpop.f32.mrf.mxu0
  %v1325 = vpop.f32.mrf.mxu0
  %v1326 = vadd.f32 0.0, %v1325
  %v1327 = vpop.f32.mrf.mxu0
  %1328 = vmatprep.mubr.bf16.mxu0 0
  %1329 = vmatmul.mubr.bf16.gmra.mxu0 %v1155
  %v1330 = vpop.f32.mrf.mxu0
  %v1331 = vadd.f32 0.0, %v1330
  %v1332 = vpop.f32.mrf.mxu0
  %v1333 = vpop.f32.mrf.mxu0
  %v1334 = vadd.f32 0.0, %v1333
  %v1335 = vpop.f32.mrf.mxu0
  %1336 = vmatprep.mubr.bf16.mxu0 0
  %1337 = vmatmul.mubr.bf16.gmra.mxu0 %v1156
  %v1338 = vpop.f32.mrf.mxu0
  %v1339 = vadd.f32 0.0, %v1338
  %v1340 = vpop.f32.mrf.mxu0
  %v1341 = vpop.f32.mrf.mxu0
  %v1342 = vadd.f32 0.0, %v1341
  %v1343 = vpop.f32.mrf.mxu0
  %1344 = vmatprep.mubr.bf16.mxu0 0
  %1345 = vmatmul.mubr.bf16.gmra.mxu0 %v1157
  %v1346 = vpop.f32.mrf.mxu0
  %v1347 = vadd.f32 0.0, %v1346
  %v1348 = vpop.f32.mrf.mxu0
  %v1349 = vpop.f32.mrf.mxu0
  %v1350 = vadd.f32 0.0, %v1349
  %v1351 = vpop.f32.mrf.mxu0
  %1352 = vmatprep.mubr.bf16.mxu0 0
  %1353 = vmatmul.mubr.bf16.gmra.mxu0 %v1158
  %v1354 = vpop.f32.mrf.mxu0
  %v1355 = vadd.f32 0.0, %v1354
  %v1356 = vpop.f32.mrf.mxu0
  %v1357 = vpop.f32.mrf.mxu0
  %v1358 = vadd.f32 0.0, %v1357
  %v1359 = vpop.f32.mrf.mxu0
  %1360 = vmatprep.mubr.bf16.mxu0 0
  %1361 = vmatmul.mubr.bf16.gmra.mxu0 %v1159
  %v1362 = vpop.f32.mrf.mxu0
  %v1363 = vadd.f32 0.0, %v1362
  %v1364 = vpop.f32.mrf.mxu0
  %v1365 = vpop.f32.mrf.mxu0
  %v1366 = vadd.f32 0.0, %v1365
  %v1367 = vpop.f32.mrf.mxu0
  %1368 = vmatprep.mubr.bf16.mxu0 0
  %1369 = vmatmul.mubr.bf16.gmra.mxu0 %v1160
  %v1370 = vpop.f32.mrf.mxu0
  %v1371 = vadd.f32 0.0, %v1370
  %v1372 = vpop.f32.mrf.mxu0
  %v1373 = vpop.f32.mrf.mxu0
  %v1374 = vadd.f32 0.0, %v1373
  %v1375 = vpop.f32.mrf.mxu0
  %1376 = vmatprep.mubr.bf16.mxu0 0
  %1377 = vmatmul.mubr.bf16.gmra.mxu0 %v1161
  %v1378 = vpop.f32.mrf.mxu0
  %v1379 = vadd.f32 0.0, %v1378
  %v1380 = vpop.f32.mrf.mxu0
  %v1381 = vpop.f32.mrf.mxu0
  %v1382 = vadd.f32 0.0, %v1381
  %v1383 = vpop.f32.mrf.mxu0
  %1384 = vmatprep.mubr.bf16.mxu0 0
  %1385 = vmatmul.mubr.bf16.gmra.mxu0 %v1162
  %v1386 = vpop.f32.mrf.mxu0
  %v1387 = vadd.f32 0.0, %v1386
  %v1388 = vpop.f32.mrf.mxu0
  %v1389 = vpop.f32.mrf.mxu0
  %v1390 = vadd.f32 0.0, %v1389
  %v1391 = vpop.f32.mrf.mxu0
  %1392 = vmatprep.mubr.bf16.mxu0 0
  %1393 = vmatmul.mubr.bf16.gmra.mxu0 %v1163
  %v1394 = vpop.f32.mrf.mxu0
  %v1395 = vadd.f32 0.0, %v1394
  %v1396 = vpop.f32.mrf.mxu0
  %v1397 = vpop.f32.mrf.mxu0
  %v1398 = vadd.f32 0.0, %v1397
  %v1399 = vpop.f32.mrf.mxu0
  %1400 = vmatprep.mubr.bf16.mxu0 0
  %1401 = vmatmul.mubr.bf16.gmra.mxu0 %v1164
  %v1402 = vpop.f32.mrf.mxu0
  %v1403 = vadd.f32 0.0, %v1402
  %v1404 = vpop.f32.mrf.mxu0
  %v1405 = vpop.f32.mrf.mxu0
  %v1406 = vadd.f32 0.0, %v1405
  %v1407 = vpop.f32.mrf.mxu0
  %1408 = vmatprep.mubr.bf16.mxu0 0
  %1409 = vmatmul.mubr.bf16.gmra.mxu0 %v1165
  %v1410 = vpop.f32.mrf.mxu0
  %v1411 = vadd.f32 0.0, %v1410
  %v1412 = vpop.f32.mrf.mxu0
  %v1413 = vpop.f32.mrf.mxu0
  %v1414 = vadd.f32 0.0, %v1413
  %v1415 = vpop.f32.mrf.mxu0
  %1416 = vmatprep.mubr.bf16.mxu0 0
  %1417 = vmatmul.mubr.bf16.gmra.mxu0 %v1166
  %v1418 = vpop.f32.mrf.mxu0
  %v1419 = vadd.f32 0.0, %v1418
  %v1420 = vpop.f32.mrf.mxu0
  %v1421 = vpop.f32.mrf.mxu0
  %v1422 = vpop.f32.mrf.mxu0
  %1423 = vdwg.mxu0
  %v1424 = vmax.f32 %v946, %v1227
  %v1425 = vmax.f32 %v947, %v1230
  %v1426 = vmax.f32 %v948, %v1235
  %v1427 = vmax.f32 %v949, %v1238
  %v1428 = vmax.f32 %v950, %v1243
  %v1429 = vmax.f32 %v951, %v1246
  %v1430 = vmax.f32 %v952, %v1251
  %v1431 = vmax.f32 %v953, %v1254
  %v1432 = vmax.f32 %v954, %v1259
  %v1433 = vmax.f32 %v955, %v1262
  %v1434 = vmax.f32 %v956, %v1267
  %v1435 = vmax.f32 %v957, %v1270
  %v1436 = vmax.f32 %v958, %v1275
  %v1437 = vmax.f32 %v959, %v1278
  %v1438 = vmax.f32 %v960, %v1283
  %v1439 = vmax.f32 %v961, %v1286
  %v1440 = vmax.f32 %v962, %v1291
  %v1441 = vmax.f32 %v963, %v1294
  %v1442 = vmax.f32 %v964, %v1299
  %v1443 = vmax.f32 %v965, %v1302
  %v1444 = vmax.f32 %v966, %v1307
  %v1445 = vmax.f32 %v967, %v1310
  %v1446 = vmax.f32 %v968, %v1315
  %v1447 = vmax.f32 %v969, %v1318
  %v1448 = vmax.f32 %v970, %v1323
  %v1449 = vmax.f32 %v971, %v1326
  %v1450 = vmax.f32 %v972, %v1331
  %v1451 = vmax.f32 %v973, %v1334
  %v1452 = vmax.f32 %v974, %v1339
  %v1453 = vmax.f32 %v975, %v1342
  %v1454 = vmax.f32 %v976, %v1347
  %v1455 = vmax.f32 %v977, %v1350
  %v1456 = vmax.f32 %v978, %v1355
  %v1457 = vmax.f32 %v979, %v1358
  %v1458 = vmax.f32 %v980, %v1363
  %v1459 = vmax.f32 %v981, %v1366
  %v1460 = vmax.f32 %v982, %v1371
  %v1461 = vmax.f32 %v983, %v1374
  %v1462 = vmax.f32 %v984, %v1379
  %v1463 = vmax.f32 %v985, %v1382
  %v1464 = vmax.f32 %v986, %v1387
  %v1465 = vmax.f32 %v987, %v1390
  %v1466 = vmax.f32 %v988, %v1395
  %v1467 = vmax.f32 %v989, %v1398
  %v1468 = vmax.f32 %v990, %v1403
  %v1469 = vmax.f32 %v991, %v1406
  %v1470 = vmax.f32 %v992, %v1411
  %v1471 = vmax.f32 %v993, %v1414
  %v1472 = vmax.f32 %v994, %v1419
  %v1473 = vld [vmem:[%s3] sm:$0xf]
  %v1474 = vld [vmem:[%s3 + $0x4] sm:$0xf]
  %v1475 = vld [vmem:[%s3 + $0x8] sm:$0xf]
  %v1476 = vld [vmem:[%s3 + $0xc] sm:$0xf]
  %v1477 = vld [vmem:[%s3 + $0x10] sm:$0xf]
  %v1478 = vld [vmem:[%s3 + $0x14] sm:$0xf]
  %v1479 = vld [vmem:[%s3 + $0x18] sm:$0xf]
  %v1480 = vld [vmem:[%s3 + $0x1c] sm:$0xf]
  %v1481 = vld [vmem:[%s3 + $0x20] sm:$0xf]
  %v1482 = vld [vmem:[%s3 + $0x24] sm:$0xf]
  %v1483 = vld [vmem:[%s3 + $0x28] sm:$0xf]
  %v1484 = vld [vmem:[%s3 + $0x2c] sm:$0xf]
  %v1485 = vld [vmem:[%s3 + $0x30] sm:$0xf]
  %v1486 = vld [vmem:[%s3 + $0x34] sm:$0xf]
  %v1487 = vld [vmem:[%s3 + $0x38] sm:$0xf]
  %v1488 = vld [vmem:[%s3 + $0x3c] sm:$0xf]
  %v1489 = vld [vmem:[%s3 + $0x40] sm:$0xf]
  %v1490 = vld [vmem:[%s3 + $0x44] sm:$0xf]
  %v1491 = vld [vmem:[%s3 + $0x48] sm:$0xf]
  %v1492 = vld [vmem:[%s3 + $0x4c] sm:$0xf]
  %v1493 = vld [vmem:[%s3 + $0x50] sm:$0xf]
  %v1494 = vld [vmem:[%s3 + $0x54] sm:$0xf]
  %v1495 = vld [vmem:[%s3 + $0x58] sm:$0xf]
  %v1496 = vld [vmem:[%s3 + $0x5c] sm:$0xf]
  %v1497 = vld [vmem:[%s3 + $0x60] sm:$0xf]
  %v1498 = vld [vmem:[%s3 + $0x64] sm:$0xf]
  %v1499 = vld [vmem:[%s3 + $0x68] sm:$0xf]
  %v1500 = vld [vmem:[%s3 + $0x6c] sm:$0xf]
  %v1501 = vld [vmem:[%s3 + $0x70] sm:$0xf]
  %v1502 = vld [vmem:[%s3 + $0x74] sm:$0xf]
  %v1503 = vld [vmem:[%s3 + $0x78] sm:$0xf]
  %v1504 = vld [vmem:[%s3 + $0x7c] sm:$0xf]
  %v1505 = vld [vmem:[%s3 + $0x80] sm:$0xf]
  %v1506 = vld [vmem:[%s3 + $0x84] sm:$0xf]
  %v1507 = vld [vmem:[%s3 + $0x88] sm:$0xf]
  %v1508 = vld [vmem:[%s3 + $0x8c] sm:$0xf]
  %v1509 = vld [vmem:[%s3 + $0x90] sm:$0xf]
  %v1510 = vld [vmem:[%s3 + $0x94] sm:$0xf]
  %v1511 = vld [vmem:[%s3 + $0x98] sm:$0xf]
  %v1512 = vld [vmem:[%s3 + $0x9c] sm:$0xf]
  %v1513 = vld [vmem:[%s3 + $0xa0] sm:$0xf]
  %v1514 = vld [vmem:[%s3 + $0xa4] sm:$0xf]
  %v1515 = vld [vmem:[%s3 + $0xa8] sm:$0xf]
  %v1516 = vld [vmem:[%s3 + $0xac] sm:$0xf]
  %v1517 = vld [vmem:[%s3 + $0xb0] sm:$0xf]
  %v1518 = vld [vmem:[%s3 + $0xb4] sm:$0xf]
  %v1519 = vld [vmem:[%s3 + $0xb8] sm:$0xf]
  %v1520 = vld [vmem:[%s3 + $0xbc] sm:$0xf]
  %v1521 = vld [vmem:[%s3 + $0xc0] sm:$0xf]
  %v1571 = vunpack.c.l.b16 %v1473
  %v1572 = vunpack.c.l.b16 %v1474
  %v1573 = vunpack.c.l.b16 %v1475
  %v1574 = vunpack.c.l.b16 %v1476
  %v1575 = vunpack.c.l.b16 %v1477
  %v1576 = vunpack.c.l.b16 %v1478
  %v1577 = vunpack.c.l.b16 %v1479
  %v1578 = vunpack.c.l.b16 %v1480
  %v1579 = vunpack.c.l.b16 %v1481
  %v1580 = vunpack.c.l.b16 %v1482
  %v1581 = vunpack.c.l.b16 %v1483
  %v1582 = vunpack.c.l.b16 %v1484
  %v1583 = vunpack.c.l.b16 %v1485
  %v1584 = vunpack.c.l.b16 %v1486
  %v1585 = vunpack.c.l.b16 %v1487
  %v1586 = vunpack.c.l.b16 %v1488
  %v1587 = vunpack.c.l.b16 %v1489
  %v1588 = vunpack.c.l.b16 %v1490
  %v1589 = vunpack.c.l.b16 %v1491
  %v1590 = vunpack.c.l.b16 %v1492
  %v1591 = vunpack.c.l.b16 %v1493
  %v1592 = vunpack.c.l.b16 %v1494
  %v1593 = vunpack.c.l.b16 %v1495
  %v1594 = vunpack.c.l.b16 %v1496
  %v1595 = vunpack.c.l.b16 %v1497
  %v1596 = vunpack.c.l.b16 %v1498
  %v1597 = vunpack.c.l.b16 %v1499
  %v1598 = vunpack.c.l.b16 %v1500
  %v1599 = vunpack.c.l.b16 %v1501
  %v1600 = vunpack.c.l.b16 %v1502
  %v1601 = vunpack.c.l.b16 %v1503
  %v1602 = vunpack.c.l.b16 %v1504
  %v1603 = vunpack.c.l.b16 %v1505
  %v1604 = vunpack.c.l.b16 %v1506
  %v1605 = vunpack.c.l.b16 %v1507
  %v1606 = vunpack.c.l.b16 %v1508
  %v1607 = vunpack.c.l.b16 %v1509
  %v1608 = vunpack.c.l.b16 %v1510
  %v1609 = vunpack.c.l.b16 %v1511
  %v1610 = vunpack.c.l.b16 %v1512
  %v1611 = vunpack.c.l.b16 %v1513
  %v1612 = vunpack.c.l.b16 %v1514
  %v1613 = vunpack.c.l.b16 %v1515
  %v1614 = vunpack.c.l.b16 %v1516
  %v1615 = vunpack.c.l.b16 %v1517
  %v1616 = vunpack.c.l.b16 %v1518
  %v1617 = vunpack.c.l.b16 %v1519
  %v1618 = vunpack.c.l.b16 %v1520
  %v1619 = vunpack.c.l.b16 %v1521
  %v1620 = vpack.c.b16 %v1572, %v1571
  %v1621 = vpack.c.b16 %v1574, %v1573
  %v1622 = vpack.c.b16 %v1576, %v1575
  %v1623 = vpack.c.b16 %v1578, %v1577
  %v1624 = vpack.c.b16 %v1580, %v1579
  %v1625 = vpack.c.b16 %v1582, %v1581
  %v1626 = vpack.c.b16 %v1584, %v1583
  %v1627 = vpack.c.b16 %v1586, %v1585
  %v1628 = vpack.c.b16 %v1588, %v1587
  %v1629 = vpack.c.b16 %v1590, %v1589
  %v1630 = vpack.c.b16 %v1592, %v1591
  %v1631 = vpack.c.b16 %v1594, %v1593
  %v1632 = vpack.c.b16 %v1596, %v1595
  %v1633 = vpack.c.b16 %v1598, %v1597
  %v1634 = vpack.c.b16 %v1600, %v1599
  %v1635 = vpack.c.b16 %v1602, %v1601
  %v1636 = vpack.c.b16 %v1604, %v1603
  %v1637 = vpack.c.b16 %v1606, %v1605
  %v1638 = vpack.c.b16 %v1608, %v1607
  %v1639 = vpack.c.b16 %v1610, %v1609
  %v1640 = vpack.c.b16 %v1612, %v1611
  %v1641 = vpack.c.b16 %v1614, %v1613
  %v1642 = vpack.c.b16 %v1616, %v1615
  %v1643 = vpack.c.b16 %v1618, %v1617
  %v1644 = vpack.c.b16 %v1619, %v1619
  %1670 = vmatprep.subr.bf16.mxu0 0
  %1671 = vmatpush1.bf16.msra.mxu0 %v276
  %1672 = vmatprep.subr.bf16.mxu0 0
  %1673 = vmatpush1.bf16.msra.mxu0 %v275
  %1674 = vmatprep.subr.bf16.mxu0 0
  %1675 = vmatpush1.bf16.msra.mxu0 %v274
  %1676 = vmatprep.subr.bf16.mxu0 0
  %1677 = vmatpush1.bf16.msra.mxu0 %v273
  %1678 = vmatprep.subr.bf16.mxu0 0
  %1679 = vmatpush1.bf16.msra.mxu0 %v272
  %1680 = vmatprep.subr.bf16.mxu0 0
  %1681 = vmatpush1.bf16.msra.mxu0 %v271
  %1682 = vmatprep.subr.bf16.mxu0 0
  %1683 = vmatpush1.bf16.msra.mxu0 %v270
  %1684 = vmatprep.subr.bf16.mxu0 0
  %1685 = vmatpush1.bf16.msra.mxu0 %v269
  %1686 = vmatprep.subr.bf16.mxu0 0
  %1687 = vmatpush2.bf16.msra.mxu0 0
  %1688 = vmatprep.subr.bf16.mxu0 0
  %1689 = vmatpush2.bf16.msra.mxu0 0
  %1690 = vmatprep.subr.bf16.mxu0 0
  %1691 = vmatpush2.bf16.msra.mxu0 0
  %1692 = vmatprep.subr.bf16.mxu0 0
  %1693 = vmatpush2.bf16.msra.mxu0 0
  %1694 = vmatprep.subr.bf16.mxu0 0
  %1695 = vmatpush2.bf16.msra.mxu0 0
  %1696 = vmatprep.subr.bf16.mxu0 0
  %1697 = vmatpush2.bf16.msra.mxu0 0
  %1698 = vmatprep.subr.bf16.mxu0 0
  %1699 = vmatpush2.bf16.msra.mxu0 0
  %1700 = vmatprep.subr.bf16.mxu0 0
  %1701 = vmatpush2.bf16.msra.mxu0 0
  %1702 = vmatprep.mubr.bf16.mxu0 0
  %1703 = vmatmul.mubr.bf16.gmra.mxu0 %v1620
  %v1704 = vpop.f32.mrf.mxu0
  %v1705 = vadd.f32 0.0, %v1704
  %v1706 = vpop.f32.mrf.mxu0
  %v1707 = vpop.f32.mrf.mxu0
  %v1708 = vadd.f32 0.0, %v1707
  %v1709 = vpop.f32.mrf.mxu0
  %1710 = vmatprep.mubr.bf16.mxu0 0
  %1711 = vmatmul.mubr.bf16.gmra.mxu0 %v1621
  %v1712 = vpop.f32.mrf.mxu0
  %v1713 = vadd.f32 0.0, %v1712
  %v1714 = vpop.f32.mrf.mxu0
  %v1715 = vpop.f32.mrf.mxu0
  %v1716 = vadd.f32 0.0, %v1715
  %v1717 = vpop.f32.mrf.mxu0
  %1718 = vmatprep.mubr.bf16.mxu0 0
  %1719 = vmatmul.mubr.bf16.gmra.mxu0 %v1622
  %v1720 = vpop.f32.mrf.mxu0
  %v1721 = vadd.f32 0.0, %v1720
  %v1722 = vpop.f32.mrf.mxu0
  %v1723 = vpop.f32.mrf.mxu0
  %v1724 = vadd.f32 0.0, %v1723
  %v1725 = vpop.f32.mrf.mxu0
  %1726 = vmatprep.mubr.bf16.mxu0 0
  %1727 = vmatmul.mubr.bf16.gmra.mxu0 %v1623
  %v1728 = vpop.f32.mrf.mxu0
  %v1729 = vadd.f32 0.0, %v1728
  %v1730 = vpop.f32.mrf.mxu0
  %v1731 = vpop.f32.mrf.mxu0
  %v1732 = vadd.f32 0.0, %v1731
  %v1733 = vpop.f32.mrf.mxu0
  %1734 = vmatprep.mubr.bf16.mxu0 0
  %1735 = vmatmul.mubr.bf16.gmra.mxu0 %v1624
  %v1736 = vpop.f32.mrf.mxu0
  %v1737 = vadd.f32 0.0, %v1736
  %v1738 = vpop.f32.mrf.mxu0
  %v1739 = vpop.f32.mrf.mxu0
  %v1740 = vadd.f32 0.0, %v1739
  %v1741 = vpop.f32.mrf.mxu0
  %1742 = vmatprep.mubr.bf16.mxu0 0
  %1743 = vmatmul.mubr.bf16.gmra.mxu0 %v1625
  %v1744 = vpop.f32.mrf.mxu0
  %v1745 = vadd.f32 0.0, %v1744
  %v1746 = vpop.f32.mrf.mxu0
  %v1747 = vpop.f32.mrf.mxu0
  %v1748 = vadd.f32 0.0, %v1747
  %v1749 = vpop.f32.mrf.mxu0
  %1750 = vmatprep.mubr.bf16.mxu0 0
  %1751 = vmatmul.mubr.bf16.gmra.mxu0 %v1626
  %v1752 = vpop.f32.mrf.mxu0
  %v1753 = vadd.f32 0.0, %v1752
  %v1754 = vpop.f32.mrf.mxu0
  %v1755 = vpop.f32.mrf.mxu0
  %v1756 = vadd.f32 0.0, %v1755
  %v1757 = vpop.f32.mrf.mxu0
  %1758 = vmatprep.mubr.bf16.mxu0 0
  %1759 = vmatmul.mubr.bf16.gmra.mxu0 %v1627
  %v1760 = vpop.f32.mrf.mxu0
  %v1761 = vadd.f32 0.0, %v1760
  %v1762 = vpop.f32.mrf.mxu0
  %v1763 = vpop.f32.mrf.mxu0
  %v1764 = vadd.f32 0.0, %v1763
  %v1765 = vpop.f32.mrf.mxu0
  %1766 = vmatprep.mubr.bf16.mxu0 0
  %1767 = vmatmul.mubr.bf16.gmra.mxu0 %v1628
  %v1768 = vpop.f32.mrf.mxu0
  %v1769 = vadd.f32 0.0, %v1768
  %v1770 = vpop.f32.mrf.mxu0
  %v1771 = vpop.f32.mrf.mxu0
  %v1772 = vadd.f32 0.0, %v1771
  %v1773 = vpop.f32.mrf.mxu0
  %1774 = vmatprep.mubr.bf16.mxu0 0
  %1775 = vmatmul.mubr.bf16.gmra.mxu0 %v1629
  %v1776 = vpop.f32.mrf.mxu0
  %v1777 = vadd.f32 0.0, %v1776
  %v1778 = vpop.f32.mrf.mxu0
  %v1779 = vpop.f32.mrf.mxu0
  %v1780 = vadd.f32 0.0, %v1779
  %v1781 = vpop.f32.mrf.mxu0
  %1782 = vmatprep.mubr.bf16.mxu0 0
  %1783 = vmatmul.mubr.bf16.gmra.mxu0 %v1630
  %v1784 = vpop.f32.mrf.mxu0
  %v1785 = vadd.f32 0.0, %v1784
  %v1786 = vpop.f32.mrf.mxu0
  %v1787 = vpop.f32.mrf.mxu0
  %v1788 = vadd.f32 0.0, %v1787
  %v1789 = vpop.f32.mrf.mxu0
  %1790 = vmatprep.mubr.bf16.mxu0 0
  %1791 = vmatmul.mubr.bf16.gmra.mxu0 %v1631
  %v1792 = vpop.f32.mrf.mxu0
  %v1793 = vadd.f32 0.0, %v1792
  %v1794 = vpop.f32.mrf.mxu0
  %v1795 = vpop.f32.mrf.mxu0
  %v1796 = vadd.f32 0.0, %v1795
  %v1797 = vpop.f32.mrf.mxu0
  %1798 = vmatprep.mubr.bf16.mxu0 0
  %1799 = vmatmul.mubr.bf16.gmra.mxu0 %v1632
  %v1800 = vpop.f32.mrf.mxu0
  %v1801 = vadd.f32 0.0, %v1800
  %v1802 = vpop.f32.mrf.mxu0
  %v1803 = vpop.f32.mrf.mxu0
  %v1804 = vadd.f32 0.0, %v1803
  %v1805 = vpop.f32.mrf.mxu0
  %1806 = vmatprep.mubr.bf16.mxu0 0
  %1807 = vmatmul.mubr.bf16.gmra.mxu0 %v1633
  %v1808 = vpop.f32.mrf.mxu0
  %v1809 = vadd.f32 0.0, %v1808
  %v1810 = vpop.f32.mrf.mxu0
  %v1811 = vpop.f32.mrf.mxu0
  %v1812 = vadd.f32 0.0, %v1811
  %v1813 = vpop.f32.mrf.mxu0
  %1814 = vmatprep.mubr.bf16.mxu0 0
  %1815 = vmatmul.mubr.bf16.gmra.mxu0 %v1634
  %v1816 = vpop.f32.mrf.mxu0
  %v1817 = vadd.f32 0.0, %v1816
  %v1818 = vpop.f32.mrf.mxu0
  %v1819 = vpop.f32.mrf.mxu0
  %v1820 = vadd.f32 0.0, %v1819
  %v1821 = vpop.f32.mrf.mxu0
  %1822 = vmatprep.mubr.bf16.mxu0 0
  %1823 = vmatmul.mubr.bf16.gmra.mxu0 %v1635
  %v1824 = vpop.f32.mrf.mxu0
  %v1825 = vadd.f32 0.0, %v1824
  %v1826 = vpop.f32.mrf.mxu0
  %v1827 = vpop.f32.mrf.mxu0
  %v1828 = vadd.f32 0.0, %v1827
  %v1829 = vpop.f32.mrf.mxu0
  %1830 = vmatprep.mubr.bf16.mxu0 0
  %1831 = vmatmul.mubr.bf16.gmra.mxu0 %v1636
  %v1832 = vpop.f32.mrf.mxu0
  %v1833 = vadd.f32 0.0, %v1832
  %v1834 = vpop.f32.mrf.mxu0
  %v1835 = vpop.f32.mrf.mxu0
  %v1836 = vadd.f32 0.0, %v1835
  %v1837 = vpop.f32.mrf.mxu0
  %1838 = vmatprep.mubr.bf16.mxu0 0
  %1839 = vmatmul.mubr.bf16.gmra.mxu0 %v1637
  %v1840 = vpop.f32.mrf.mxu0
  %v1841 = vadd.f32 0.0, %v1840
  %v1842 = vpop.f32.mrf.mxu0
  %v1843 = vpop.f32.mrf.mxu0
  %v1844 = vadd.f32 0.0, %v1843
  %v1845 = vpop.f32.mrf.mxu0
  %1846 = vmatprep.mubr.bf16.mxu0 0
  %1847 = vmatmul.mubr.bf16.gmra.mxu0 %v1638
  %v1848 = vpop.f32.mrf.mxu0
  %v1849 = vadd.f32 0.0, %v1848
  %v1850 = vpop.f32.mrf.mxu0
  %v1851 = vpop.f32.mrf.mxu0
  %v1852 = vadd.f32 0.0, %v1851
  %v1853 = vpop.f32.mrf.mxu0
  %1854 = vmatprep.mubr.bf16.mxu0 0
  %1855 = vmatmul.mubr.bf16.gmra.mxu0 %v1639
  %v1856 = vpop.f32.mrf.mxu0
  %v1857 = vadd.f32 0.0, %v1856
  %v1858 = vpop.f32.mrf.mxu0
  %v1859 = vpop.f32.mrf.mxu0
  %v1860 = vadd.f32 0.0, %v1859
  %v1861 = vpop.f32.mrf.mxu0
  %1862 = vmatprep.mubr.bf16.mxu0 0
  %1863 = vmatmul.mubr.bf16.gmra.mxu0 %v1640
  %v1864 = vpop.f32.mrf.mxu0
  %v1865 = vadd.f32 0.0, %v1864
  %v1866 = vpop.f32.mrf.mxu0
  %v1867 = vpop.f32.mrf.mxu0
  %v1868 = vadd.f32 0.0, %v1867
  %v1869 = vpop.f32.mrf.mxu0
  %1870 = vmatprep.mubr.bf16.mxu0 0
  %1871 = vmatmul.mubr.bf16.gmra.mxu0 %v1641
  %v1872 = vpop.f32.mrf.mxu0
  %v1873 = vadd.f32 0.0, %v1872
  %v1874 = vpop.f32.mrf.mxu0
  %v1875 = vpop.f32.mrf.mxu0
  %v1876 = vadd.f32 0.0, %v1875
  %v1877 = vpop.f32.mrf.mxu0
  %1878 = vmatprep.mubr.bf16.mxu0 0
  %1879 = vmatmul.mubr.bf16.gmra.mxu0 %v1642
  %v1880 = vpop.f32.mrf.mxu0
  %v1881 = vadd.f32 0.0, %v1880
  %v1882 = vpop.f32.mrf.mxu0
  %v1883 = vpop.f32.mrf.mxu0
  %v1884 = vadd.f32 0.0, %v1883
  %v1885 = vpop.f32.mrf.mxu0
  %1886 = vmatprep.mubr.bf16.mxu0 0
  %1887 = vmatmul.mubr.bf16.gmra.mxu0 %v1643
  %v1888 = vpop.f32.mrf.mxu0
  %v1889 = vadd.f32 0.0, %v1888
  %v1890 = vpop.f32.mrf.mxu0
  %v1891 = vpop.f32.mrf.mxu0
  %v1892 = vadd.f32 0.0, %v1891
  %v1893 = vpop.f32.mrf.mxu0
  %1894 = vmatprep.mubr.bf16.mxu0 0
  %1895 = vmatmul.mubr.bf16.gmra.mxu0 %v1644
  %v1896 = vpop.f32.mrf.mxu0
  %v1897 = vadd.f32 0.0, %v1896
  %v1898 = vpop.f32.mrf.mxu0
  %v1899 = vpop.f32.mrf.mxu0
  %v1900 = vpop.f32.mrf.mxu0
  %1901 = vdwg.mxu0
  %v1902 = vmax.f32 %v1424, %v1705
  %v1903 = vmax.f32 %v1425, %v1708
  %v1904 = vmax.f32 %v1426, %v1713
  %v1905 = vmax.f32 %v1427, %v1716
  %v1906 = vmax.f32 %v1428, %v1721
  %v1907 = vmax.f32 %v1429, %v1724
  %v1908 = vmax.f32 %v1430, %v1729
  %v1909 = vmax.f32 %v1431, %v1732
  %v1910 = vmax.f32 %v1432, %v1737
  %v1911 = vmax.f32 %v1433, %v1740
  %v1912 = vmax.f32 %v1434, %v1745
  %v1913 = vmax.f32 %v1435, %v1748
  %v1914 = vmax.f32 %v1436, %v1753
  %v1915 = vmax.f32 %v1437, %v1756
  %v1916 = vmax.f32 %v1438, %v1761
  %v1917 = vmax.f32 %v1439, %v1764
  %v1918 = vmax.f32 %v1440, %v1769
  %v1919 = vmax.f32 %v1441, %v1772
  %v1920 = vmax.f32 %v1442, %v1777
  %v1921 = vmax.f32 %v1443, %v1780
  %v1922 = vmax.f32 %v1444, %v1785
  %v1923 = vmax.f32 %v1445, %v1788
  %v1924 = vmax.f32 %v1446, %v1793
  %v1925 = vmax.f32 %v1447, %v1796
  %v1926 = vmax.f32 %v1448, %v1801
  %v1927 = vmax.f32 %v1449, %v1804
  %v1928 = vmax.f32 %v1450, %v1809
  %v1929 = vmax.f32 %v1451, %v1812
  %v1930 = vmax.f32 %v1452, %v1817
  %v1931 = vmax.f32 %v1453, %v1820
  %v1932 = vmax.f32 %v1454, %v1825
  %v1933 = vmax.f32 %v1455, %v1828
  %v1934 = vmax.f32 %v1456, %v1833
  %v1935 = vmax.f32 %v1457, %v1836
  %v1936 = vmax.f32 %v1458, %v1841
  %v1937 = vmax.f32 %v1459, %v1844
  %v1938 = vmax.f32 %v1460, %v1849
  %v1939 = vmax.f32 %v1461, %v1852
  %v1940 = vmax.f32 %v1462, %v1857
  %v1941 = vmax.f32 %v1463, %v1860
  %v1942 = vmax.f32 %v1464, %v1865
  %v1943 = vmax.f32 %v1465, %v1868
  %v1944 = vmax.f32 %v1466, %v1873
  %v1945 = vmax.f32 %v1467, %v1876
  %v1946 = vmax.f32 %v1468, %v1881
  %v1947 = vmax.f32 %v1469, %v1884
  %v1948 = vmax.f32 %v1470, %v1889
  %v1949 = vmax.f32 %v1471, %v1892
  %v1950 = vmax.f32 %v1472, %v1897
  %v1951 = vld [vmem:[%s5] sm:$0x1]
  %v1953 = vlaneseq
  %v1954 = vshrl.u32 %v1953, 7
  %v1955 = vsub.s32 0, %v1954
  %v1956 = vrot.slane %v1951, %v1955
  %v1958 = vadd.f32 %v1902, %v1956
  %v1959 = vadd.f32 %v1903, %v1956
  %v1960 = vadd.f32 %v1904, %v1956
  %v1961 = vadd.f32 %v1905, %v1956
  %v1962 = vadd.f32 %v1906, %v1956
  %v1963 = vadd.f32 %v1907, %v1956
  %v1964 = vadd.f32 %v1908, %v1956
  %v1965 = vadd.f32 %v1909, %v1956
  %v1966 = vadd.f32 %v1910, %v1956
  %v1967 = vadd.f32 %v1911, %v1956
  %v1968 = vadd.f32 %v1912, %v1956
  %v1969 = vadd.f32 %v1913, %v1956
  %v1970 = vadd.f32 %v1914, %v1956
  %v1971 = vadd.f32 %v1915, %v1956
  %v1972 = vadd.f32 %v1916, %v1956
  %v1973 = vadd.f32 %v1917, %v1956
  %v1974 = vadd.f32 %v1918, %v1956
  %v1975 = vadd.f32 %v1919, %v1956
  %v1976 = vadd.f32 %v1920, %v1956
  %v1977 = vadd.f32 %v1921, %v1956
  %v1978 = vadd.f32 %v1922, %v1956
  %v1979 = vadd.f32 %v1923, %v1956
  %v1980 = vadd.f32 %v1924, %v1956
  %v1981 = vadd.f32 %v1925, %v1956
  %v1982 = vadd.f32 %v1926, %v1956
  %v1983 = vadd.f32 %v1927, %v1956
  %v1984 = vadd.f32 %v1928, %v1956
  %v1985 = vadd.f32 %v1929, %v1956
  %v1986 = vadd.f32 %v1930, %v1956
  %v1987 = vadd.f32 %v1931, %v1956
  %v1988 = vadd.f32 %v1932, %v1956
  %v1989 = vadd.f32 %v1933, %v1956
  %v1990 = vadd.f32 %v1934, %v1956
  %v1991 = vadd.f32 %v1935, %v1956
  %v1992 = vadd.f32 %v1936, %v1956
  %v1993 = vadd.f32 %v1937, %v1956
  %v1994 = vadd.f32 %v1938, %v1956
  %v1995 = vadd.f32 %v1939, %v1956
  %v1996 = vadd.f32 %v1940, %v1956
  %v1997 = vadd.f32 %v1941, %v1956
  %v1998 = vadd.f32 %v1942, %v1956
  %v1999 = vadd.f32 %v1943, %v1956
  %v2000 = vadd.f32 %v1944, %v1956
  %v2001 = vadd.f32 %v1945, %v1956
  %v2002 = vadd.f32 %v1946, %v1956
  %v2003 = vadd.f32 %v1947, %v1956
  %v2004 = vadd.f32 %v1948, %v1956
  %v2005 = vadd.f32 %v1949, %v1956
  %v2006 = vadd.f32 %v1950, %v1956
  %v2007 = vmax.f32 %v1958, 0.0
  %v2008 = vmax.f32 %v1959, 0.0
  %v2009 = vmax.f32 %v1960, 0.0
  %v2010 = vmax.f32 %v1961, 0.0
  %v2011 = vmax.f32 %v1962, 0.0
  %v2012 = vmax.f32 %v1963, 0.0
  %v2013 = vmax.f32 %v1964, 0.0
  %v2014 = vmax.f32 %v1965, 0.0
  %v2015 = vmax.f32 %v1966, 0.0
  %v2016 = vmax.f32 %v1967, 0.0
  %v2017 = vmax.f32 %v1968, 0.0
  %v2018 = vmax.f32 %v1969, 0.0
  %v2019 = vmax.f32 %v1970, 0.0
  %v2020 = vmax.f32 %v1971, 0.0
  %v2021 = vmax.f32 %v1972, 0.0
  %v2022 = vmax.f32 %v1973, 0.0
  %v2023 = vmax.f32 %v1974, 0.0
  %v2024 = vmax.f32 %v1975, 0.0
  %v2025 = vmax.f32 %v1976, 0.0
  %v2026 = vmax.f32 %v1977, 0.0
  %v2027 = vmax.f32 %v1978, 0.0
  %v2028 = vmax.f32 %v1979, 0.0
  %v2029 = vmax.f32 %v1980, 0.0
  %v2030 = vmax.f32 %v1981, 0.0
  %v2031 = vmax.f32 %v1982, 0.0
  %v2032 = vmax.f32 %v1983, 0.0
  %v2033 = vmax.f32 %v1984, 0.0
  %v2034 = vmax.f32 %v1985, 0.0
  %v2035 = vmax.f32 %v1986, 0.0
  %v2036 = vmax.f32 %v1987, 0.0
  %v2037 = vmax.f32 %v1988, 0.0
  %v2038 = vmax.f32 %v1989, 0.0
  %v2039 = vmax.f32 %v1990, 0.0
  %v2040 = vmax.f32 %v1991, 0.0
  %v2041 = vmax.f32 %v1992, 0.0
  %v2042 = vmax.f32 %v1993, 0.0
  %v2043 = vmax.f32 %v1994, 0.0
  %v2044 = vmax.f32 %v1995, 0.0
  %v2045 = vmax.f32 %v1996, 0.0
  %v2046 = vmax.f32 %v1997, 0.0
  %v2047 = vmax.f32 %v1998, 0.0
  %v2048 = vmax.f32 %v1999, 0.0
  %v2049 = vmax.f32 %v2000, 0.0
  %v2050 = vmax.f32 %v2001, 0.0
  %v2051 = vmax.f32 %v2002, 0.0
  %v2052 = vmax.f32 %v2003, 0.0
  %v2053 = vmax.f32 %v2004, 0.0
  %v2054 = vmax.f32 %v2005, 0.0
  %v2055 = vmax.f32 %v2006, 0.0
  %2056 = vst [vmem:[%s6] sm:$0xff] %v2007
  %2057 = vst [vmem:[%s6 + $0x8] sm:$0xff] %v2008
  %2058 = vst [vmem:[%s6 + $0x10] sm:$0xff] %v2009
  %2059 = vst [vmem:[%s6 + $0x18] sm:$0xff] %v2010
  %2060 = vst [vmem:[%s6 + $0x20] sm:$0xff] %v2011
  %2061 = vst [vmem:[%s6 + $0x28] sm:$0xff] %v2012
  %2062 = vst [vmem:[%s6 + $0x30] sm:$0xff] %v2013
  %2063 = vst [vmem:[%s6 + $0x38] sm:$0xff] %v2014
  %2064 = vst [vmem:[%s6 + $0x40] sm:$0xff] %v2015
  %2065 = vst [vmem:[%s6 + $0x48] sm:$0xff] %v2016
  %2066 = vst [vmem:[%s6 + $0x50] sm:$0xff] %v2017
  %2067 = vst [vmem:[%s6 + $0x58] sm:$0xff] %v2018
  %2068 = vst [vmem:[%s6 + $0x60] sm:$0xff] %v2019
  %2069 = vst [vmem:[%s6 + $0x68] sm:$0xff] %v2020
  %2070 = vst [vmem:[%s6 + $0x70] sm:$0xff] %v2021
  %2071 = vst [vmem:[%s6 + $0x78] sm:$0xff] %v2022
  %2072 = vst [vmem:[%s6 + $0x80] sm:$0xff] %v2023
  %2073 = vst [vmem:[%s6 + $0x88] sm:$0xff] %v2024
  %2074 = vst [vmem:[%s6 + $0x90] sm:$0xff] %v2025
  %2075 = vst [vmem:[%s6 + $0x98] sm:$0xff] %v2026
  %2076 = vst [vmem:[%s6 + $0xa0] sm:$0xff] %v2027
  %2077 = vst [vmem:[%s6 + $0xa8] sm:$0xff] %v2028
  %2078 = vst [vmem:[%s6 + $0xb0] sm:$0xff] %v2029
  %2079 = vst [vmem:[%s6 + $0xb8] sm:$0xff] %v2030
  %2080 = vst [vmem:[%s6 + $0xc0] sm:$0xff] %v2031
  %2081 = vst [vmem:[%s6 + $0xc8] sm:$0xff] %v2032
  %2082 = vst [vmem:[%s6 + $0xd0] sm:$0xff] %v2033
  %2083 = vst [vmem:[%s6 + $0xd8] sm:$0xff] %v2034
  %2084 = vst [vmem:[%s6 + $0xe0] sm:$0xff] %v2035
  %2085 = vst [vmem:[%s6 + $0xe8] sm:$0xff] %v2036
  %2086 = vst [vmem:[%s6 + $0xf0] sm:$0xff] %v2037
  %2087 = vst [vmem:[%s6 + $0xf8] sm:$0xff] %v2038
  %2088 = vst [vmem:[%s6 + $0x100] sm:$0xff] %v2039
  %2089 = vst [vmem:[%s6 + $0x108] sm:$0xff] %v2040
  %2090 = vst [vmem:[%s6 + $0x110] sm:$0xff] %v2041
  %2091 = vst [vmem:[%s6 + $0x118] sm:$0xff] %v2042
  %2092 = vst [vmem:[%s6 + $0x120] sm:$0xff] %v2043
  %2093 = vst [vmem:[%s6 + $0x128] sm:$0xff] %v2044
  %2094 = vst [vmem:[%s6 + $0x130] sm:$0xff] %v2045
  %2095 = vst [vmem:[%s6 + $0x138] sm:$0xff] %v2046
  %2096 = vst [vmem:[%s6 + $0x140] sm:$0xff] %v2047
  %2097 = vst [vmem:[%s6 + $0x148] sm:$0xff] %v2048
  %2098 = vst [vmem:[%s6 + $0x150] sm:$0xff] %v2049
  %2099 = vst [vmem:[%s6 + $0x158] sm:$0xff] %v2050
  %2100 = vst [vmem:[%s6 + $0x160] sm:$0xff] %v2051
  %2101 = vst [vmem:[%s6 + $0x168] sm:$0xff] %v2052
  %2102 = vst [vmem:[%s6 + $0x170] sm:$0xff] %v2053
  %2103 = vst [vmem:[%s6 + $0x178] sm:$0xff] %v2054
  %2104 = vst [vmem:[%s6 + $0x180] sm:$0xff] %v2055
  // Predicated region
  $region26: #{convnet_forward.3} parent=0 // pred_check
    _
  $region27: #{convnet_forward.3} parent=0 // pred_check_branch
    %2106 = sbr.rel (0) target = $region29
  $region28: #{convnet_forward.3} parent=0 // pred_region
    _
  $region29: #{convnet_forward.3} parent=0 // pred_fallthru
    _
  // Predicated region
  $region30: #{convnet_forward.3} parent=0 // pred_check
    _
  $region31: #{convnet_forward.3} parent=0 // pred_check_branch
    %2108 = sbr.rel (0) target = $region33
  $region32: #{convnet_forward.3} parent=0 // pred_region
    _
  $region33: #{convnet_forward.3} parent=0 // pred_fallthru
    _

// kernel: convnet_forward.4
$region0: #{convnet_forward.4}
  #allocation0 [shape = 'u32[]', space=smem, size = 0x4, offset = 0x4, fixed_abs, tag = 'smem constant byte address 0x4 - core index']
  #allocation1 [shape = 'u32[144,128]{1,0:T(1,128)}', space=vmem, size = 0x12000, scoped, tag = 'internal scratch']
  %s0 = inlined_call_operand.vmem [shape: bf16[56,256], index: 0, kind: input, shape index: {}]
  %s1 = inlined_call_operand.vmem [shape: bf16[56,256], index: 1, kind: input, shape index: {}]
  %s2 = inlined_call_operand.vmem [shape: bf16[56,256], index: 2, kind: input, shape index: {}]
  %s3 = inlined_call_operand.vmem [shape: bf16[56,256], index: 3, kind: input, shape index: {}]
  %s4 = inlined_call_operand.vmem [shape: bf16[256,128], index: 4, kind: input, shape index: {}]
  %s5 = inlined_call_operand.vmem [shape: f32[1,128], index: 5, kind: input, shape index: {}]
  %s6 = inlined_call_operand.vmem [shape: f32[56,128], index: 6, kind: output, shape index: {}]
  %s7 = sld [smem:[#allocation0]]
  $region34: #{convnet_forward.4} parent=0
    _
  %s9 = ssub.s32 1, %s7
  %s10 = scalar_select 0, %s9, %s7
  // Predicated region
  $region2: #{convnet_forward.4} parent=0 // pred_check
    _
  $region3: #{convnet_forward.4} parent=0 // pred_check_branch
    %12 = sbr.rel (0) target = $region5
  $region4: #{convnet_forward.4} parent=0 // pred_region
    _
  $region5: #{convnet_forward.4} parent=0 // pred_fallthru
    _
  // Predicated region
  $region6: #{convnet_forward.4} parent=0 // pred_check
    _
  $region7: #{convnet_forward.4} parent=0 // pred_check_branch
    %14 = sbr.rel (0) target = $region9
  $region8: #{convnet_forward.4} parent=0 // pred_region
    _
  $region9: #{convnet_forward.4} parent=0 // pred_fallthru
    _
  // Predicated region
  $region10: #{convnet_forward.4} parent=0 // pred_check
    _
  $region11: #{convnet_forward.4} parent=0 // pred_check_branch
    %16 = sbr.rel (0) target = $region13
  $region12: #{convnet_forward.4} parent=0 // pred_region
    _
  $region13: #{convnet_forward.4} parent=0 // pred_fallthru
    _
  // Predicated region
  $region14: #{convnet_forward.4} parent=0 // pred_check
    _
  $region15: #{convnet_forward.4} parent=0 // pred_check_branch
    %18 = sbr.rel (0) target = $region17
  $region16: #{convnet_forward.4} parent=0 // pred_region
    _
  $region17: #{convnet_forward.4} parent=0 // pred_fallthru
    _
  // Predicated region
  $region18: #{convnet_forward.4} parent=0 // pred_check
    _
  $region19: #{convnet_forward.4} parent=0 // pred_check_branch
    %20 = sbr.rel (0) target = $region21
  $region20: #{convnet_forward.4} parent=0 // pred_region
    _
  $region21: #{convnet_forward.4} parent=0 // pred_fallthru
    _
  // Predicated region
  $region22: #{convnet_forward.4} parent=0 // pred_check
    _
  $region23: #{convnet_forward.4} parent=0 // pred_check_branch
    %22 = sbr.rel (0) target = $region25
  $region24: #{convnet_forward.4} parent=0 // pred_region
    _
  $region25: #{convnet_forward.4} parent=0 // pred_fallthru
    _
  %v24 = vld [vmem:[%s4] sm:$0xf]
  %v25 = vld [vmem:[%s4 + $0x4] sm:$0xf]
  %v26 = vld [vmem:[%s4 + $0x8] sm:$0xf]
  %v27 = vld [vmem:[%s4 + $0xc] sm:$0xf]
  %v28 = vld [vmem:[%s4 + $0x10] sm:$0xf]
  %v29 = vld [vmem:[%s4 + $0x14] sm:$0xf]
  %v30 = vld [vmem:[%s4 + $0x18] sm:$0xf]
  %v31 = vld [vmem:[%s4 + $0x1c] sm:$0xf]
  %v32 = vld [vmem:[%s4 + $0x20] sm:$0xf]
  %v33 = vld [vmem:[%s4 + $0x24] sm:$0xf]
  %v34 = vld [vmem:[%s4 + $0x28] sm:$0xf]
  %v35 = vld [vmem:[%s4 + $0x2c] sm:$0xf]
  %v36 = vld [vmem:[%s4 + $0x30] sm:$0xf]
  %v37 = vld [vmem:[%s4 + $0x34] sm:$0xf]
  %v38 = vld [vmem:[%s4 + $0x38] sm:$0xf]
  %v39 = vld [vmem:[%s4 + $0x3c] sm:$0xf]
  %v40 = vld [vmem:[%s4 + $0x40] sm:$0xf]
  %v41 = vld [vmem:[%s4 + $0x44] sm:$0xf]
  %v42 = vld [vmem:[%s4 + $0x48] sm:$0xf]
  %v43 = vld [vmem:[%s4 + $0x4c] sm:$0xf]
  %v44 = vld [vmem:[%s4 + $0x50] sm:$0xf]
  %v45 = vld [vmem:[%s4 + $0x54] sm:$0xf]
  %v46 = vld [vmem:[%s4 + $0x58] sm:$0xf]
  %v47 = vld [vmem:[%s4 + $0x5c] sm:$0xf]
  %v48 = vld [vmem:[%s4 + $0x60] sm:$0xf]
  %v49 = vld [vmem:[%s4 + $0x64] sm:$0xf]
  %v50 = vld [vmem:[%s4 + $0x68] sm:$0xf]
  %v51 = vld [vmem:[%s4 + $0x6c] sm:$0xf]
  %v52 = vld [vmem:[%s4 + $0x70] sm:$0xf]
  %v53 = vld [vmem:[%s4 + $0x74] sm:$0xf]
  %v54 = vld [vmem:[%s4 + $0x78] sm:$0xf]
  %v55 = vld [vmem:[%s4 + $0x7c] sm:$0xf]
  %v56 = vld [vmem:[%s0] sm:$0xff]
  %v57 = vld [vmem:[%s0 + $0x8] sm:$0xff]
  %v58 = vld [vmem:[%s0 + $0x10] sm:$0xff]
  %v59 = vld [vmem:[%s0 + $0x18] sm:$0xff]
  %v60 = vld [vmem:[%s0 + $0x20] sm:$0xff]
  %v61 = vld [vmem:[%s0 + $0x28] sm:$0xff]
  %v62 = vld [vmem:[%s0 + $0x30] sm:$0xff]
  %v70 = vunpack.c.l.b16 %v56
  %v71 = vunpack.c.h.b16 %v56
  %v72 = vunpack.c.l.b16 %v57
  %v73 = vunpack.c.h.b16 %v57
  %v74 = vunpack.c.l.b16 %v58
  %v75 = vunpack.c.h.b16 %v58
  %v76 = vunpack.c.l.b16 %v59
  %v77 = vunpack.c.h.b16 %v59
  %v78 = vunpack.c.l.b16 %v60
  %v79 = vunpack.c.h.b16 %v60
  %v80 = vunpack.c.l.b16 %v61
  %v81 = vunpack.c.h.b16 %v61
  %v82 = vunpack.c.l.b16 %v62
  %v83 = vunpack.c.h.b16 %v62
  %v84 = vpack.c.b16 %v72, %v70
  %v85 = vpack.c.b16 %v73, %v71
  %v86 = vpack.c.b16 %v76, %v74
  %v87 = vpack.c.b16 %v77, %v75
  %v88 = vpack.c.b16 %v80, %v78
  %v89 = vpack.c.b16 %v81, %v79
  %v90 = vpack.c.b16 %v82, %v82
  %v91 = vpack.c.b16 %v83, %v83
  %v132 = vunpack.c.l.b16 %v24
  %v133 = vunpack.c.l.b16 %v25
  %v134 = vunpack.c.l.b16 %v26
  %v135 = vunpack.c.l.b16 %v27
  %v136 = vunpack.c.l.b16 %v28
  %v137 = vunpack.c.l.b16 %v29
  %v138 = vunpack.c.l.b16 %v30
  %v139 = vunpack.c.l.b16 %v31
  %v140 = vunpack.c.l.b16 %v32
  %v141 = vunpack.c.l.b16 %v33
  %v142 = vunpack.c.l.b16 %v34
  %v143 = vunpack.c.l.b16 %v35
  %v144 = vunpack.c.l.b16 %v36
  %v145 = vunpack.c.l.b16 %v37
  %v146 = vunpack.c.l.b16 %v38
  %v147 = vunpack.c.l.b16 %v39
  %v148 = vunpack.c.l.b16 %v40
  %v149 = vunpack.c.l.b16 %v41
  %v150 = vunpack.c.l.b16 %v42
  %v151 = vunpack.c.l.b16 %v43
  %v152 = vunpack.c.l.b16 %v44
  %v153 = vunpack.c.l.b16 %v45
  %v154 = vunpack.c.l.b16 %v46
  %v155 = vunpack.c.l.b16 %v47
  %v156 = vunpack.c.l.b16 %v48
  %v157 = vunpack.c.l.b16 %v49
  %v158 = vunpack.c.l.b16 %v50
  %v159 = vunpack.c.l.b16 %v51
  %v160 = vunpack.c.l.b16 %v52
  %v161 = vunpack.c.l.b16 %v53
  %v162 = vunpack.c.l.b16 %v54
  %v163 = vunpack.c.l.b16 %v55
  %v164 = vpack.c.b16 %v133, %v132
  %v165 = vpack.c.b16 %v135, %v134
  %v166 = vpack.c.b16 %v137, %v136
  %v167 = vpack.c.b16 %v139, %v138
  %v168 = vpack.c.b16 %v141, %v140
  %v169 = vpack.c.b16 %v143, %v142
  %v170 = vpack.c.b16 %v145, %v144
  %v171 = vpack.c.b16 %v147, %v146
  %v172 = vpack.c.b16 %v149, %v148
  %v173 = vpack.c.b16 %v151, %v150
  %v174 = vpack.c.b16 %v153, %v152
  %v175 = vpack.c.b16 %v155, %v154
  %v176 = vpack.c.b16 %v157, %v156
  %v177 = vpack.c.b16 %v159, %v158
  %v178 = vpack.c.b16 %v161, %v160
  %v179 = vpack.c.b16 %v163, %v162
  %196 = vmatprep.subr.bf16.mxu0 0
  %197 = vmatpush1.bf16.msra.mxu0 %v171
  %198 = vmatprep.subr.bf16.mxu0 0
  %199 = vmatpush1.bf16.msra.mxu0 %v170
  %200 = vmatprep.subr.bf16.mxu0 0
  %201 = vmatpush1.bf16.msra.mxu0 %v169
  %202 = vmatprep.subr.bf16.mxu0 0
  %203 = vmatpush1.bf16.msra.mxu0 %v168
  %204 = vmatprep.subr.bf16.mxu0 0
  %205 = vmatpush1.bf16.msra.mxu0 %v167
  %206 = vmatprep.subr.bf16.mxu0 0
  %207 = vmatpush1.bf16.msra.mxu0 %v166
  %208 = vmatprep.subr.bf16.mxu0 0
  %209 = vmatpush1.bf16.msra.mxu0 %v165
  %210 = vmatprep.subr.bf16.mxu0 0
  %211 = vmatpush1.bf16.msra.mxu0 %v164
  %212 = vmatprep.subr.bf16.mxu0 0
  %213 = vmatpush2.bf16.msra.mxu0 %v179
  %214 = vmatprep.subr.bf16.mxu0 0
  %215 = vmatpush2.bf16.msra.mxu0 %v178
  %216 = vmatprep.subr.bf16.mxu0 0
  %217 = vmatpush2.bf16.msra.mxu0 %v177
  %218 = vmatprep.subr.bf16.mxu0 0
  %219 = vmatpush2.bf16.msra.mxu0 %v176
  %220 = vmatprep.subr.bf16.mxu0 0
  %221 = vmatpush2.bf16.msra.mxu0 %v175
  %222 = vmatprep.subr.bf16.mxu0 0
  %223 = vmatpush2.bf16.msra.mxu0 %v174
  %224 = vmatprep.subr.bf16.mxu0 0
  %225 = vmatpush2.bf16.msra.mxu0 %v173
  %226 = vmatprep.subr.bf16.mxu0 0
  %227 = vmatpush2.bf16.msra.mxu0 %v172
  %228 = vmatprep.mubr.bf16.mxu0 %v85
  %229 = vmatmul.mubr.bf16.gmra.mxu0 %v84
  %v230 = vpop.f32.mrf.mxu0
  %v231 = vadd.f32 0.0, %v230
  %v232 = vpop.f32.mrf.mxu0
  %v233 = vpop.f32.mrf.mxu0
  %v234 = vadd.f32 0.0, %v233
  %v235 = vpop.f32.mrf.mxu0
  %236 = vmatprep.mubr.bf16.mxu0 %v87
  %237 = vmatmul.mubr.bf16.gmra.mxu0 %v86
  %v238 = vpop.f32.mrf.mxu0
  %v239 = vadd.f32 0.0, %v238
  %v240 = vpop.f32.mrf.mxu0
  %v241 = vpop.f32.mrf.mxu0
  %v242 = vadd.f32 0.0, %v241
  %v243 = vpop.f32.mrf.mxu0
  %244 = vmatprep.mubr.bf16.mxu0 %v89
  %245 = vmatmul.mubr.bf16.gmra.mxu0 %v88
  %v246 = vpop.f32.mrf.mxu0
  %v247 = vadd.f32 0.0, %v246
  %v248 = vpop.f32.mrf.mxu0
  %v249 = vpop.f32.mrf.mxu0
  %v250 = vadd.f32 0.0, %v249
  %v251 = vpop.f32.mrf.mxu0
  %252 = vmatprep.mubr.bf16.mxu0 %v91
  %253 = vmatmul.mubr.bf16.gmra.mxu0 %v90
  %v254 = vpop.f32.mrf.mxu0
  %v255 = vadd.f32 0.0, %v254
  %v256 = vpop.f32.mrf.mxu0
  %v257 = vpop.f32.mrf.mxu0
  %v258 = vpop.f32.mrf.mxu0
  %259 = vdwg.mxu0
  %v260 = vld [vmem:[%s1] sm:$0xff]
  %v261 = vld [vmem:[%s1 + $0x8] sm:$0xff]
  %v262 = vld [vmem:[%s1 + $0x10] sm:$0xff]
  %v263 = vld [vmem:[%s1 + $0x18] sm:$0xff]
  %v264 = vld [vmem:[%s1 + $0x20] sm:$0xff]
  %v265 = vld [vmem:[%s1 + $0x28] sm:$0xff]
  %v266 = vld [vmem:[%s1 + $0x30] sm:$0xff]
  %v274 = vunpack.c.l.b16 %v260
  %v275 = vunpack.c.h.b16 %v260
  %v276 = vunpack.c.l.b16 %v261
  %v277 = vunpack.c.h.b16 %v261
  %v278 = vunpack.c.l.b16 %v262
  %v279 = vunpack.c.h.b16 %v262
  %v280 = vunpack.c.l.b16 %v263
  %v281 = vunpack.c.h.b16 %v263
  %v282 = vunpack.c.l.b16 %v264
  %v283 = vunpack.c.h.b16 %v264
  %v284 = vunpack.c.l.b16 %v265
  %v285 = vunpack.c.h.b16 %v265
  %v286 = vunpack.c.l.b16 %v266
  %v287 = vunpack.c.h.b16 %v266
  %v288 = vpack.c.b16 %v276, %v274
  %v289 = vpack.c.b16 %v277, %v275
  %v290 = vpack.c.b16 %v280, %v278
  %v291 = vpack.c.b16 %v281, %v279
  %v292 = vpack.c.b16 %v284, %v282
  %v293 = vpack.c.b16 %v285, %v283
  %v294 = vpack.c.b16 %v286, %v286
  %v295 = vpack.c.b16 %v287, %v287
  %304 = vmatprep.subr.bf16.mxu0 0
  %305 = vmatpush1.bf16.msra.mxu0 %v171
  %306 = vmatprep.subr.bf16.mxu0 0
  %307 = vmatpush1.bf16.msra.mxu0 %v170
  %308 = vmatprep.subr.bf16.mxu0 0
  %309 = vmatpush1.bf16.msra.mxu0 %v169
  %310 = vmatprep.subr.bf16.mxu0 0
  %311 = vmatpush1.bf16.msra.mxu0 %v168
  %312 = vmatprep.subr.bf16.mxu0 0
  %313 = vmatpush1.bf16.msra.mxu0 %v167
  %314 = vmatprep.subr.bf16.mxu0 0
  %315 = vmatpush1.bf16.msra.mxu0 %v166
  %316 = vmatprep.subr.bf16.mxu0 0
  %317 = vmatpush1.bf16.msra.mxu0 %v165
  %318 = vmatprep.subr.bf16.mxu0 0
  %319 = vmatpush1.bf16.msra.mxu0 %v164
  %320 = vmatprep.subr.bf16.mxu0 0
  %321 = vmatpush2.bf16.msra.mxu0 %v179
  %322 = vmatprep.subr.bf16.mxu0 0
  %323 = vmatpush2.bf16.msra.mxu0 %v178
  %324 = vmatprep.subr.bf16.mxu0 0
  %325 = vmatpush2.bf16.msra.mxu0 %v177
  %326 = vmatprep.subr.bf16.mxu0 0
  %327 = vmatpush2.bf16.msra.mxu0 %v176
  %328 = vmatprep.subr.bf16.mxu0 0
  %329 = vmatpush2.bf16.msra.mxu0 %v175
  %330 = vmatprep.subr.bf16.mxu0 0
  %331 = vmatpush2.bf16.msra.mxu0 %v174
  %332 = vmatprep.subr.bf16.mxu0 0
  %333 = vmatpush2.bf16.msra.mxu0 %v173
  %334 = vmatprep.subr.bf16.mxu0 0
  %335 = vmatpush2.bf16.msra.mxu0 %v172
  %336 = vmatprep.mubr.bf16.mxu0 %v289
  %337 = vmatmul.mubr.bf16.gmra.mxu0 %v288
  %v338 = vpop.f32.mrf.mxu0
  %v339 = vadd.f32 0.0, %v338
  %v340 = vpop.f32.mrf.mxu0
  %v341 = vpop.f32.mrf.mxu0
  %v342 = vadd.f32 0.0, %v341
  %v343 = vpop.f32.mrf.mxu0
  %344 = vmatprep.mubr.bf16.mxu0 %v291
  %345 = vmatmul.mubr.bf16.gmra.mxu0 %v290
  %v346 = vpop.f32.mrf.mxu0
  %v347 = vadd.f32 0.0, %v346
  %v348 = vpop.f32.mrf.mxu0
  %v349 = vpop.f32.mrf.mxu0
  %v350 = vadd.f32 0.0, %v349
  %v351 = vpop.f32.mrf.mxu0
  %352 = vmatprep.mubr.bf16.mxu0 %v293
  %353 = vmatmul.mubr.bf16.gmra.mxu0 %v292
  %v354 = vpop.f32.mrf.mxu0
  %v355 = vadd.f32 0.0, %v354
  %v356 = vpop.f32.mrf.mxu0
  %v357 = vpop.f32.mrf.mxu0
  %v358 = vadd.f32 0.0, %v357
  %v359 = vpop.f32.mrf.mxu0
  %360 = vmatprep.mubr.bf16.mxu0 %v295
  %361 = vmatmul.mubr.bf16.gmra.mxu0 %v294
  %v362 = vpop.f32.mrf.mxu0
  %v363 = vadd.f32 0.0, %v362
  %v364 = vpop.f32.mrf.mxu0
  %v365 = vpop.f32.mrf.mxu0
  %v366 = vpop.f32.mrf.mxu0
  %367 = vdwg.mxu0
  %v368 = vmax.f32 %v231, %v339
  %v369 = vmax.f32 %v234, %v342
  %v370 = vmax.f32 %v239, %v347
  %v371 = vmax.f32 %v242, %v350
  %v372 = vmax.f32 %v247, %v355
  %v373 = vmax.f32 %v250, %v358
  %v374 = vmax.f32 %v255, %v363
  %v375 = vld [vmem:[%s2] sm:$0xff]
  %v376 = vld [vmem:[%s2 + $0x8] sm:$0xff]
  %v377 = vld [vmem:[%s2 + $0x10] sm:$0xff]
  %v378 = vld [vmem:[%s2 + $0x18] sm:$0xff]
  %v379 = vld [vmem:[%s2 + $0x20] sm:$0xff]
  %v380 = vld [vmem:[%s2 + $0x28] sm:$0xff]
  %v381 = vld [vmem:[%s2 + $0x30] sm:$0xff]
  %v389 = vunpack.c.l.b16 %v375
  %v390 = vunpack.c.h.b16 %v375
  %v391 = vunpack.c.l.b16 %v376
  %v392 = vunpack.c.h.b16 %v376
  %v393 = vunpack.c.l.b16 %v377
  %v394 = vunpack.c.h.b16 %v377
  %v395 = vunpack.c.l.b16 %v378
  %v396 = vunpack.c.h.b16 %v378
  %v397 = vunpack.c.l.b16 %v379
  %v398 = vunpack.c.h.b16 %v379
  %v399 = vunpack.c.l.b16 %v380
  %v400 = vunpack.c.h.b16 %v380
  %v401 = vunpack.c.l.b16 %v381
  %v402 = vunpack.c.h.b16 %v381
  %v403 = vpack.c.b16 %v391, %v389
  %v404 = vpack.c.b16 %v392, %v390
  %v405 = vpack.c.b16 %v395, %v393
  %v406 = vpack.c.b16 %v396, %v394
  %v407 = vpack.c.b16 %v399, %v397
  %v408 = vpack.c.b16 %v400, %v398
  %v409 = vpack.c.b16 %v401, %v401
  %v410 = vpack.c.b16 %v402, %v402
  %419 = vmatprep.subr.bf16.mxu0 0
  %420 = vmatpush1.bf16.msra.mxu0 %v171
  %421 = vmatprep.subr.bf16.mxu0 0
  %422 = vmatpush1.bf16.msra.mxu0 %v170
  %423 = vmatprep.subr.bf16.mxu0 0
  %424 = vmatpush1.bf16.msra.mxu0 %v169
  %425 = vmatprep.subr.bf16.mxu0 0
  %426 = vmatpush1.bf16.msra.mxu0 %v168
  %427 = vmatprep.subr.bf16.mxu0 0
  %428 = vmatpush1.bf16.msra.mxu0 %v167
  %429 = vmatprep.subr.bf16.mxu0 0
  %430 = vmatpush1.bf16.msra.mxu0 %v166
  %431 = vmatprep.subr.bf16.mxu0 0
  %432 = vmatpush1.bf16.msra.mxu0 %v165
  %433 = vmatprep.subr.bf16.mxu0 0
  %434 = vmatpush1.bf16.msra.mxu0 %v164
  %435 = vmatprep.subr.bf16.mxu0 0
  %436 = vmatpush2.bf16.msra.mxu0 %v179
  %437 = vmatprep.subr.bf16.mxu0 0
  %438 = vmatpush2.bf16.msra.mxu0 %v178
  %439 = vmatprep.subr.bf16.mxu0 0
  %440 = vmatpush2.bf16.msra.mxu0 %v177
  %441 = vmatprep.subr.bf16.mxu0 0
  %442 = vmatpush2.bf16.msra.mxu0 %v176
  %443 = vmatprep.subr.bf16.mxu0 0
  %444 = vmatpush2.bf16.msra.mxu0 %v175
  %445 = vmatprep.subr.bf16.mxu0 0
  %446 = vmatpush2.bf16.msra.mxu0 %v174
  %447 = vmatprep.subr.bf16.mxu0 0
  %448 = vmatpush2.bf16.msra.mxu0 %v173
  %449 = vmatprep.subr.bf16.mxu0 0
  %450 = vmatpush2.bf16.msra.mxu0 %v172
  %451 = vmatprep.mubr.bf16.mxu0 %v404
  %452 = vmatmul.mubr.bf16.gmra.mxu0 %v403
  %v453 = vpop.f32.mrf.mxu0
  %v454 = vadd.f32 0.0, %v453
  %v455 = vpop.f32.mrf.mxu0
  %v456 = vpop.f32.mrf.mxu0
  %v457 = vadd.f32 0.0, %v456
  %v458 = vpop.f32.mrf.mxu0
  %459 = vmatprep.mubr.bf16.mxu0 %v406
  %460 = vmatmul.mubr.bf16.gmra.mxu0 %v405
  %v461 = vpop.f32.mrf.mxu0
  %v462 = vadd.f32 0.0, %v461
  %v463 = vpop.f32.mrf.mxu0
  %v464 = vpop.f32.mrf.mxu0
  %v465 = vadd.f32 0.0, %v464
  %v466 = vpop.f32.mrf.mxu0
  %467 = vmatprep.mubr.bf16.mxu0 %v408
  %468 = vmatmul.mubr.bf16.gmra.mxu0 %v407
  %v469 = vpop.f32.mrf.mxu0
  %v470 = vadd.f32 0.0, %v469
  %v471 = vpop.f32.mrf.mxu0
  %v472 = vpop.f32.mrf.mxu0
  %v473 = vadd.f32 0.0, %v472
  %v474 = vpop.f32.mrf.mxu0
  %475 = vmatprep.mubr.bf16.mxu0 %v410
  %476 = vmatmul.mubr.bf16.gmra.mxu0 %v409
  %v477 = vpop.f32.mrf.mxu0
  %v478 = vadd.f32 0.0, %v477
  %v479 = vpop.f32.mrf.mxu0
  %v480 = vpop.f32.mrf.mxu0
  %v481 = vpop.f32.mrf.mxu0
  %482 = vdwg.mxu0
  %v483 = vmax.f32 %v368, %v454
  %v484 = vmax.f32 %v369, %v457
  %v485 = vmax.f32 %v370, %v462
  %v486 = vmax.f32 %v371, %v465
  %v487 = vmax.f32 %v372, %v470
  %v488 = vmax.f32 %v373, %v473
  %v489 = vmax.f32 %v374, %v478
  %v490 = vld [vmem:[%s3] sm:$0xff]
  %v491 = vld [vmem:[%s3 + $0x8] sm:$0xff]
  %v492 = vld [vmem:[%s3 + $0x10] sm:$0xff]
  %v493 = vld [vmem:[%s3 + $0x18] sm:$0xff]
  %v494 = vld [vmem:[%s3 + $0x20] sm:$0xff]
  %v495 = vld [vmem:[%s3 + $0x28] sm:$0xff]
  %v496 = vld [vmem:[%s3 + $0x30] sm:$0xff]
  %v504 = vunpack.c.l.b16 %v490
  %v505 = vunpack.c.h.b16 %v490
  %v506 = vunpack.c.l.b16 %v491
  %v507 = vunpack.c.h.b16 %v491
  %v508 = vunpack.c.l.b16 %v492
  %v509 = vunpack.c.h.b16 %v492
  %v510 = vunpack.c.l.b16 %v493
  %v511 = vunpack.c.h.b16 %v493
  %v512 = vunpack.c.l.b16 %v494
  %v513 = vunpack.c.h.b16 %v494
  %v514 = vunpack.c.l.b16 %v495
  %v515 = vunpack.c.h.b16 %v495
  %v516 = vunpack.c.l.b16 %v496
  %v517 = vunpack.c.h.b16 %v496
  %v518 = vpack.c.b16 %v506, %v504
  %v519 = vpack.c.b16 %v507, %v505
  %v520 = vpack.c.b16 %v510, %v508
  %v521 = vpack.c.b16 %v511, %v509
  %v522 = vpack.c.b16 %v514, %v512
  %v523 = vpack.c.b16 %v515, %v513
  %v524 = vpack.c.b16 %v516, %v516
  %v525 = vpack.c.b16 %v517, %v517
  %534 = vmatprep.subr.bf16.mxu0 0
  %535 = vmatpush1.bf16.msra.mxu0 %v171
  %536 = vmatprep.subr.bf16.mxu0 0
  %537 = vmatpush1.bf16.msra.mxu0 %v170
  %538 = vmatprep.subr.bf16.mxu0 0
  %539 = vmatpush1.bf16.msra.mxu0 %v169
  %540 = vmatprep.subr.bf16.mxu0 0
  %541 = vmatpush1.bf16.msra.mxu0 %v168
  %542 = vmatprep.subr.bf16.mxu0 0
  %543 = vmatpush1.bf16.msra.mxu0 %v167
  %544 = vmatprep.subr.bf16.mxu0 0
  %545 = vmatpush1.bf16.msra.mxu0 %v166
  %546 = vmatprep.subr.bf16.mxu0 0
  %547 = vmatpush1.bf16.msra.mxu0 %v165
  %548 = vmatprep.subr.bf16.mxu0 0
  %549 = vmatpush1.bf16.msra.mxu0 %v164
  %550 = vmatprep.subr.bf16.mxu0 0
  %551 = vmatpush2.bf16.msra.mxu0 %v179
  %552 = vmatprep.subr.bf16.mxu0 0
  %553 = vmatpush2.bf16.msra.mxu0 %v178
  %554 = vmatprep.subr.bf16.mxu0 0
  %555 = vmatpush2.bf16.msra.mxu0 %v177
  %556 = vmatprep.subr.bf16.mxu0 0
  %557 = vmatpush2.bf16.msra.mxu0 %v176
  %558 = vmatprep.subr.bf16.mxu0 0
  %559 = vmatpush2.bf16.msra.mxu0 %v175
  %560 = vmatprep.subr.bf16.mxu0 0
  %561 = vmatpush2.bf16.msra.mxu0 %v174
  %562 = vmatprep.subr.bf16.mxu0 0
  %563 = vmatpush2.bf16.msra.mxu0 %v173
  %564 = vmatprep.subr.bf16.mxu0 0
  %565 = vmatpush2.bf16.msra.mxu0 %v172
  %566 = vmatprep.mubr.bf16.mxu0 %v519
  %567 = vmatmul.mubr.bf16.gmra.mxu0 %v518
  %v568 = vpop.f32.mrf.mxu0
  %v569 = vadd.f32 0.0, %v568
  %v570 = vpop.f32.mrf.mxu0
  %v571 = vpop.f32.mrf.mxu0
  %v572 = vadd.f32 0.0, %v571
  %v573 = vpop.f32.mrf.mxu0
  %574 = vmatprep.mubr.bf16.mxu0 %v521
  %575 = vmatmul.mubr.bf16.gmra.mxu0 %v520
  %v576 = vpop.f32.mrf.mxu0
  %v577 = vadd.f32 0.0, %v576
  %v578 = vpop.f32.mrf.mxu0
  %v579 = vpop.f32.mrf.mxu0
  %v580 = vadd.f32 0.0, %v579
  %v581 = vpop.f32.mrf.mxu0
  %582 = vmatprep.mubr.bf16.mxu0 %v523
  %583 = vmatmul.mubr.bf16.gmra.mxu0 %v522
  %v584 = vpop.f32.mrf.mxu0
  %v585 = vadd.f32 0.0, %v584
  %v586 = vpop.f32.mrf.mxu0
  %v587 = vpop.f32.mrf.mxu0
  %v588 = vadd.f32 0.0, %v587
  %v589 = vpop.f32.mrf.mxu0
  %590 = vmatprep.mubr.bf16.mxu0 %v525
  %591 = vmatmul.mubr.bf16.gmra.mxu0 %v524
  %v592 = vpop.f32.mrf.mxu0
  %v593 = vadd.f32 0.0, %v592
  %v594 = vpop.f32.mrf.mxu0
  %v595 = vpop.f32.mrf.mxu0
  %v596 = vpop.f32.mrf.mxu0
  %597 = vdwg.mxu0
  %v598 = vmax.f32 %v483, %v569
  %v599 = vmax.f32 %v484, %v572
  %v600 = vmax.f32 %v485, %v577
  %v601 = vmax.f32 %v486, %v580
  %v602 = vmax.f32 %v487, %v585
  %v603 = vmax.f32 %v488, %v588
  %v604 = vmax.f32 %v489, %v593
  %v605 = vld [vmem:[%s5] sm:$0x1]
  %v607 = vlaneseq
  %v608 = vshrl.u32 %v607, 7
  %v609 = vsub.s32 0, %v608
  %v610 = vrot.slane %v605, %v609
  %v612 = vadd.f32 %v598, %v610
  %v613 = vadd.f32 %v599, %v610
  %v614 = vadd.f32 %v600, %v610
  %v615 = vadd.f32 %v601, %v610
  %v616 = vadd.f32 %v602, %v610
  %v617 = vadd.f32 %v603, %v610
  %v618 = vadd.f32 %v604, %v610
  %v619 = vmax.f32 %v612, 0.0
  %v620 = vmax.f32 %v613, 0.0
  %v621 = vmax.f32 %v614, 0.0
  %v622 = vmax.f32 %v615, 0.0
  %v623 = vmax.f32 %v616, 0.0
  %v624 = vmax.f32 %v617, 0.0
  %v625 = vmax.f32 %v618, 0.0
  %626 = vst [vmem:[%s6] sm:$0xff] %v619
  %627 = vst [vmem:[%s6 + $0x8] sm:$0xff] %v620
  %628 = vst [vmem:[%s6 + $0x10] sm:$0xff] %v621
  %629 = vst [vmem:[%s6 + $0x18] sm:$0xff] %v622
  %630 = vst [vmem:[%s6 + $0x20] sm:$0xff] %v623
  %631 = vst [vmem:[%s6 + $0x28] sm:$0xff] %v624
  %632 = vst [vmem:[%s6 + $0x30] sm:$0xff] %v625
  // Predicated region
  $region26: #{convnet_forward.4} parent=0 // pred_check
    _
  $region27: #{convnet_forward.4} parent=0 // pred_check_branch
    %634 = sbr.rel (0) target = $region29
  $region28: #{convnet_forward.4} parent=0 // pred_region
    _
  $region29: #{convnet_forward.4} parent=0 // pred_fallthru
    _
  // Predicated region
  $region30: #{convnet_forward.4} parent=0 // pred_check
    _
  $region31: #{convnet_forward.4} parent=0 // pred_check_branch
    %636 = sbr.rel (0) target = $region33
  $region32: #{convnet_forward.4} parent=0 // pred_region
    _
  $region33: #{convnet_forward.4} parent=0 // pred_fallthru
    _

// kernel: convnet_forward.5
$region0: #{convnet_forward.5}
  #allocation0 [shape = 'u32[]', space=smem, size = 0x4, offset = 0x4, fixed_abs, tag = 'smem constant byte address 0x4 - core index']
  #allocation1 [shape = 'u32[144,128]{1,0:T(1,128)}', space=vmem, size = 0x12000, scoped, tag = 'internal scratch']
  %s0 = inlined_call_operand.vmem [shape: bf16[8,512], index: 0, kind: input, shape index: {}]
  %s1 = inlined_call_operand.vmem [shape: bf16[512,128], index: 1, kind: input, shape index: {}]
  %s2 = inlined_call_operand.vmem [shape: f32[1,128], index: 2, kind: input, shape index: {}]
  %s3 = inlined_call_operand.vmem [shape: bf16[128,128], index: 3, kind: input, shape index: {}]
  %s4 = inlined_call_operand.vmem [shape: f32[1,128], index: 4, kind: input, shape index: {}]
  %s5 = inlined_call_operand.vmem [shape: bf16[128,128], index: 5, kind: input, shape index: {}]
  %s6 = inlined_call_operand.vmem [shape: f32[1,128], index: 6, kind: input, shape index: {}]
  %s7 = inlined_call_operand.vmem [shape: f32[8,128], index: 7, kind: output, shape index: {}]
  %s8 = sld [smem:[#allocation0]]
  $region38: #{convnet_forward.5} parent=0
    _
  %s10 = ssub.s32 1, %s8
  %s11 = scalar_select 0, %s10, %s8
  // Predicated region
  $region2: #{convnet_forward.5} parent=0 // pred_check
    _
  $region3: #{convnet_forward.5} parent=0 // pred_check_branch
    %13 = sbr.rel (0) target = $region5
  $region4: #{convnet_forward.5} parent=0 // pred_region
    _
  $region5: #{convnet_forward.5} parent=0 // pred_fallthru
    _
  // Predicated region
  $region6: #{convnet_forward.5} parent=0 // pred_check
    _
  $region7: #{convnet_forward.5} parent=0 // pred_check_branch
    %15 = sbr.rel (0) target = $region9
  $region8: #{convnet_forward.5} parent=0 // pred_region
    _
  $region9: #{convnet_forward.5} parent=0 // pred_fallthru
    _
  // Predicated region
  $region10: #{convnet_forward.5} parent=0 // pred_check
    _
  $region11: #{convnet_forward.5} parent=0 // pred_check_branch
    %17 = sbr.rel (0) target = $region13
  $region12: #{convnet_forward.5} parent=0 // pred_region
    _
  $region13: #{convnet_forward.5} parent=0 // pred_fallthru
    _
  // Predicated region
  $region14: #{convnet_forward.5} parent=0 // pred_check
    _
  $region15: #{convnet_forward.5} parent=0 // pred_check_branch
    %19 = sbr.rel (0) target = $region17
  $region16: #{convnet_forward.5} parent=0 // pred_region
    _
  $region17: #{convnet_forward.5} parent=0 // pred_fallthru
    _
  // Predicated region
  $region18: #{convnet_forward.5} parent=0 // pred_check
    _
  $region19: #{convnet_forward.5} parent=0 // pred_check_branch
    %21 = sbr.rel (0) target = $region21
  $region20: #{convnet_forward.5} parent=0 // pred_region
    _
  $region21: #{convnet_forward.5} parent=0 // pred_fallthru
    _
  // Predicated region
  $region22: #{convnet_forward.5} parent=0 // pred_check
    _
  $region23: #{convnet_forward.5} parent=0 // pred_check_branch
    %23 = sbr.rel (0) target = $region25
  $region24: #{convnet_forward.5} parent=0 // pred_region
    _
  $region25: #{convnet_forward.5} parent=0 // pred_fallthru
    _
  // Predicated region
  $region26: #{convnet_forward.5} parent=0 // pred_check
    _
  $region27: #{convnet_forward.5} parent=0 // pred_check_branch
    %25 = sbr.rel (0) target = $region29
  $region28: #{convnet_forward.5} parent=0 // pred_region
    _
  $region29: #{convnet_forward.5} parent=0 // pred_fallthru
    _
  %v27 = vld [vmem:[%s0] sm:$0xff]
  %v28 = vld [vmem:[%s0 + $0x8] sm:$0xff]
  %v29 = vld [vmem:[%s1] sm:$0xf]
  %v30 = vld [vmem:[%s1 + $0x4] sm:$0xf]
  %v31 = vld [vmem:[%s1 + $0x8] sm:$0xf]
  %v32 = vld [vmem:[%s1 + $0xc] sm:$0xf]
  %v33 = vld [vmem:[%s1 + $0x10] sm:$0xf]
  %v34 = vld [vmem:[%s1 + $0x14] sm:$0xf]
  %v35 = vld [vmem:[%s1 + $0x18] sm:$0xf]
  %v36 = vld [vmem:[%s1 + $0x1c] sm:$0xf]
  %v37 = vld [vmem:[%s1 + $0x20] sm:$0xf]
  %v38 = vld [vmem:[%s1 + $0x24] sm:$0xf]
  %v39 = vld [vmem:[%s1 + $0x28] sm:$0xf]
  %v40 = vld [vmem:[%s1 + $0x2c] sm:$0xf]
  %v41 = vld [vmem:[%s1 + $0x30] sm:$0xf]
  %v42 = vld [vmem:[%s1 + $0x34] sm:$0xf]
  %v43 = vld [vmem:[%s1 + $0x38] sm:$0xf]
  %v44 = vld [vmem:[%s1 + $0x3c] sm:$0xf]
  %v45 = vld [vmem:[%s1 + $0x40] sm:$0xf]
  %v46 = vld [vmem:[%s1 + $0x44] sm:$0xf]
  %v47 = vld [vmem:[%s1 + $0x48] sm:$0xf]
  %v48 = vld [vmem:[%s1 + $0x4c] sm:$0xf]
  %v49 = vld [vmem:[%s1 + $0x50] sm:$0xf]
  %v50 = vld [vmem:[%s1 + $0x54] sm:$0xf]
  %v51 = vld [vmem:[%s1 + $0x58] sm:$0xf]
  %v52 = vld [vmem:[%s1 + $0x5c] sm:$0xf]
  %v53 = vld [vmem:[%s1 + $0x60] sm:$0xf]
  %v54 = vld [vmem:[%s1 + $0x64] sm:$0xf]
  %v55 = vld [vmem:[%s1 + $0x68] sm:$0xf]
  %v56 = vld [vmem:[%s1 + $0x6c] sm:$0xf]
  %v57 = vld [vmem:[%s1 + $0x70] sm:$0xf]
  %v58 = vld [vmem:[%s1 + $0x74] sm:$0xf]
  %v59 = vld [vmem:[%s1 + $0x78] sm:$0xf]
  %v60 = vld [vmem:[%s1 + $0x7c] sm:$0xf]
  %v61 = vld [vmem:[%s1 + $0x80] sm:$0xf]
  %v62 = vld [vmem:[%s1 + $0x84] sm:$0xf]
  %v63 = vld [vmem:[%s1 + $0x88] sm:$0xf]
  %v64 = vld [vmem:[%s1 + $0x8c] sm:$0xf]
  %v65 = vld [vmem:[%s1 + $0x90] sm:$0xf]
  %v66 = vld [vmem:[%s1 + $0x94] sm:$0xf]
  %v67 = vld [vmem:[%s1 + $0x98] sm:$0xf]
  %v68 = vld [vmem:[%s1 + $0x9c] sm:$0xf]
  %v69 = vld [vmem:[%s1 + $0xa0] sm:$0xf]
  %v70 = vld [vmem:[%s1 + $0xa4] sm:$0xf]
  %v71 = vld [vmem:[%s1 + $0xa8] sm:$0xf]
  %v72 = vld [vmem:[%s1 + $0xac] sm:$0xf]
  %v73 = vld [vmem:[%s1 + $0xb0] sm:$0xf]
  %v74 = vld [vmem:[%s1 + $0xb4] sm:$0xf]
  %v75 = vld [vmem:[%s1 + $0xb8] sm:$0xf]
  %v76 = vld [vmem:[%s1 + $0xbc] sm:$0xf]
  %v77 = vld [vmem:[%s1 + $0xc0] sm:$0xf]
  %v78 = vld [vmem:[%s1 + $0xc4] sm:$0xf]
  %v79 = vld [vmem:[%s1 + $0xc8] sm:$0xf]
  %v80 = vld [vmem:[%s1 + $0xcc] sm:$0xf]
  %v81 = vld [vmem:[%s1 + $0xd0] sm:$0xf]
  %v82 = vld [vmem:[%s1 + $0xd4] sm:$0xf]
  %v83 = vld [vmem:[%s1 + $0xd8] sm:$0xf]
  %v84 = vld [vmem:[%s1 + $0xdc] sm:$0xf]
  %v85 = vld [vmem:[%s1 + $0xe0] sm:$0xf]
  %v86 = vld [vmem:[%s1 + $0xe4] sm:$0xf]
  %v87 = vld [vmem:[%s1 + $0xe8] sm:$0xf]
  %v88 = vld [vmem:[%s1 + $0xec] sm:$0xf]
  %v89 = vld [vmem:[%s1 + $0xf0] sm:$0xf]
  %v90 = vld [vmem:[%s1 + $0xf4] sm:$0xf]
  %v91 = vld [vmem:[%s1 + $0xf8] sm:$0xf]
  %v92 = vld [vmem:[%s1 + $0xfc] sm:$0xf]
  %v93 = vld [vmem:[%s2] sm:$0x1]
  %v95 = vlaneseq
  %v96 = vshrl.u32 %v95, 7
  %v97 = vsub.s32 0, %v96
  %v98 = vrot.slane %v93, %v97
  %v102 = vunpack.c.l.b16 %v27
  %v103 = vunpack.c.h.b16 %v27
  %v104 = vunpack.c.l.b16 %v28
  %v105 = vunpack.c.h.b16 %v28
  %v106 = vpack.c.b16 %v102, %v102
  %v107 = vpack.c.b16 %v103, %v103
  %v108 = vpack.c.b16 %v104, %v104
  %v109 = vpack.c.b16 %v105, %v105
  %v178 = vunpack.c.l.b16 %v29
  %v179 = vunpack.c.l.b16 %v30
  %v180 = vunpack.c.l.b16 %v31
  %v181 = vunpack.c.l.b16 %v32
  %v182 = vunpack.c.l.b16 %v33
  %v183 = vunpack.c.l.b16 %v34
  %v184 = vunpack.c.l.b16 %v35
  %v185 = vunpack.c.l.b16 %v36
  %v186 = vunpack.c.l.b16 %v37
  %v187 = vunpack.c.l.b16 %v38
  %v188 = vunpack.c.l.b16 %v39
  %v189 = vunpack.c.l.b16 %v40
  %v190 = vunpack.c.l.b16 %v41
  %v191 = vunpack.c.l.b16 %v42
  %v192 = vunpack.c.l.b16 %v43
  %v193 = vunpack.c.l.b16 %v44
  %v194 = vunpack.c.l.b16 %v45
  %v195 = vunpack.c.l.b16 %v46
  %v196 = vunpack.c.l.b16 %v47
  %v197 = vunpack.c.l.b16 %v48
  %v198 = vunpack.c.l.b16 %v49
  %v199 = vunpack.c.l.b16 %v50
  %v200 = vunpack.c.l.b16 %v51
  %v201 = vunpack.c.l.b16 %v52
  %v202 = vunpack.c.l.b16 %v53
  %v203 = vunpack.c.l.b16 %v54
  %v204 = vunpack.c.l.b16 %v55
  %v205 = vunpack.c.l.b16 %v56
  %v206 = vunpack.c.l.b16 %v57
  %v207 = vunpack.c.l.b16 %v58
  %v208 = vunpack.c.l.b16 %v59
  %v209 = vunpack.c.l.b16 %v60
  %v210 = vunpack.c.l.b16 %v61
  %v211 = vunpack.c.l.b16 %v62
  %v212 = vunpack.c.l.b16 %v63
  %v213 = vunpack.c.l.b16 %v64
  %v214 = vunpack.c.l.b16 %v65
  %v215 = vunpack.c.l.b16 %v66
  %v216 = vunpack.c.l.b16 %v67
  %v217 = vunpack.c.l.b16 %v68
  %v218 = vunpack.c.l.b16 %v69
  %v219 = vunpack.c.l.b16 %v70
  %v220 = vunpack.c.l.b16 %v71
  %v221 = vunpack.c.l.b16 %v72
  %v222 = vunpack.c.l.b16 %v73
  %v223 = vunpack.c.l.b16 %v74
  %v224 = vunpack.c.l.b16 %v75
  %v225 = vunpack.c.l.b16 %v76
  %v226 = vunpack.c.l.b16 %v77
  %v227 = vunpack.c.l.b16 %v78
  %v228 = vunpack.c.l.b16 %v79
  %v229 = vunpack.c.l.b16 %v80
  %v230 = vunpack.c.l.b16 %v81
  %v231 = vunpack.c.l.b16 %v82
  %v232 = vunpack.c.l.b16 %v83
  %v233 = vunpack.c.l.b16 %v84
  %v234 = vunpack.c.l.b16 %v85
  %v235 = vunpack.c.l.b16 %v86
  %v236 = vunpack.c.l.b16 %v87
  %v237 = vunpack.c.l.b16 %v88
  %v238 = vunpack.c.l.b16 %v89
  %v239 = vunpack.c.l.b16 %v90
  %v240 = vunpack.c.l.b16 %v91
  %v241 = vunpack.c.l.b16 %v92
  %v242 = vpack.c.b16 %v179, %v178
  %v243 = vpack.c.b16 %v181, %v180
  %v244 = vpack.c.b16 %v183, %v182
  %v245 = vpack.c.b16 %v185, %v184
  %v246 = vpack.c.b16 %v187, %v186
  %v247 = vpack.c.b16 %v189, %v188
  %v248 = vpack.c.b16 %v191, %v190
  %v249 = vpack.c.b16 %v193, %v192
  %v250 = vpack.c.b16 %v195, %v194
  %v251 = vpack.c.b16 %v197, %v196
  %v252 = vpack.c.b16 %v199, %v198
  %v253 = vpack.c.b16 %v201, %v200
  %v254 = vpack.c.b16 %v203, %v202
  %v255 = vpack.c.b16 %v205, %v204
  %v256 = vpack.c.b16 %v207, %v206
  %v257 = vpack.c.b16 %v209, %v208
  %v258 = vpack.c.b16 %v211, %v210
  %v259 = vpack.c.b16 %v213, %v212
  %v260 = vpack.c.b16 %v215, %v214
  %v261 = vpack.c.b16 %v217, %v216
  %v262 = vpack.c.b16 %v219, %v218
  %v263 = vpack.c.b16 %v221, %v220
  %v264 = vpack.c.b16 %v223, %v222
  %v265 = vpack.c.b16 %v225, %v224
  %v266 = vpack.c.b16 %v227, %v226
  %v267 = vpack.c.b16 %v229, %v228
  %v268 = vpack.c.b16 %v231, %v230
  %v269 = vpack.c.b16 %v233, %v232
  %v270 = vpack.c.b16 %v235, %v234
  %v271 = vpack.c.b16 %v237, %v236
  %v272 = vpack.c.b16 %v239, %v238
  %v273 = vpack.c.b16 %v241, %v240
  %306 = vmatprep.subr.bf16.mxu0 0
  %307 = vmatpush1.bf16.msra.mxu0 %v249
  %308 = vmatprep.subr.bf16.mxu0 0
  %309 = vmatpush1.bf16.msra.mxu0 %v248
  %310 = vmatprep.subr.bf16.mxu0 0
  %311 = vmatpush1.bf16.msra.mxu0 %v247
  %312 = vmatprep.subr.bf16.mxu0 0
  %313 = vmatpush1.bf16.msra.mxu0 %v246
  %314 = vmatprep.subr.bf16.mxu0 0
  %315 = vmatpush1.bf16.msra.mxu0 %v245
  %316 = vmatprep.subr.bf16.mxu0 0
  %317 = vmatpush1.bf16.msra.mxu0 %v244
  %318 = vmatprep.subr.bf16.mxu0 0
  %319 = vmatpush1.bf16.msra.mxu0 %v243
  %320 = vmatprep.subr.bf16.mxu0 0
  %321 = vmatpush1.bf16.msra.mxu0 %v242
  %322 = vmatprep.subr.bf16.mxu0 0
  %323 = vmatpush2.bf16.msra.mxu0 %v257
  %324 = vmatprep.subr.bf16.mxu0 0
  %325 = vmatpush2.bf16.msra.mxu0 %v256
  %326 = vmatprep.subr.bf16.mxu0 0
  %327 = vmatpush2.bf16.msra.mxu0 %v255
  %328 = vmatprep.subr.bf16.mxu0 0
  %329 = vmatpush2.bf16.msra.mxu0 %v254
  %330 = vmatprep.subr.bf16.mxu0 0
  %331 = vmatpush2.bf16.msra.mxu0 %v253
  %332 = vmatprep.subr.bf16.mxu0 0
  %333 = vmatpush2.bf16.msra.mxu0 %v252
  %334 = vmatprep.subr.bf16.mxu0 0
  %335 = vmatpush2.bf16.msra.mxu0 %v251
  %336 = vmatprep.subr.bf16.mxu0 0
  %337 = vmatpush2.bf16.msra.mxu0 %v250
  %338 = vmatprep.mubr.bf16.mxu0 %v107
  %339 = vmatmul.mubr.bf16.gmra.mxu0 %v106
  %v340 = vpop.f32.mrf.mxu0
  %v341 = vadd.f32 %v98, %v340
  %v342 = vpop.f32.mrf.mxu0
  %v343 = vpop.f32.mrf.mxu0
  %v344 = vpop.f32.mrf.mxu0
  %345 = vdwg.mxu0
  %346 = vmatprep.subr.bf16.mxu0 0
  %347 = vmatpush1.bf16.msra.mxu0 %v265
  %348 = vmatprep.subr.bf16.mxu0 0
  %349 = vmatpush1.bf16.msra.mxu0 %v264
  %350 = vmatprep.subr.bf16.mxu0 0
  %351 = vmatpush1.bf16.msra.mxu0 %v263
  %352 = vmatprep.subr.bf16.mxu0 0
  %353 = vmatpush1.bf16.msra.mxu0 %v262
  %354 = vmatprep.subr.bf16.mxu0 0
  %355 = vmatpush1.bf16.msra.mxu0 %v261
  %356 = vmatprep.subr.bf16.mxu0 0
  %357 = vmatpush1.bf16.msra.mxu0 %v260
  %358 = vmatprep.subr.bf16.mxu0 0
  %359 = vmatpush1.bf16.msra.mxu0 %v259
  %360 = vmatprep.subr.bf16.mxu0 0
  %361 = vmatpush1.bf16.msra.mxu0 %v258
  %362 = vmatprep.subr.bf16.mxu0 0
  %363 = vmatpush2.bf16.msra.mxu0 %v273
  %364 = vmatprep.subr.bf16.mxu0 0
  %365 = vmatpush2.bf16.msra.mxu0 %v272
  %366 = vmatprep.subr.bf16.mxu0 0
  %367 = vmatpush2.bf16.msra.mxu0 %v271
  %368 = vmatprep.subr.bf16.mxu0 0
  %369 = vmatpush2.bf16.msra.mxu0 %v270
  %370 = vmatprep.subr.bf16.mxu0 0
  %371 = vmatpush2.bf16.msra.mxu0 %v269
  %372 = vmatprep.subr.bf16.mxu0 0
  %373 = vmatpush2.bf16.msra.mxu0 %v268
  %374 = vmatprep.subr.bf16.mxu0 0
  %375 = vmatpush2.bf16.msra.mxu0 %v267
  %376 = vmatprep.subr.bf16.mxu0 0
  %377 = vmatpush2.bf16.msra.mxu0 %v266
  %378 = vmatprep.mubr.bf16.mxu0 %v109
  %379 = vmatmul.mubr.bf16.gmra.mxu0 %v108
  %v380 = vpop.f32.mrf.mxu0
  %v381 = vadd.f32 %v341, %v380
  %v382 = vpop.f32.mrf.mxu0
  %v383 = vpop.f32.mrf.mxu0
  %v384 = vpop.f32.mrf.mxu0
  %385 = vdwg.mxu0
  %v386 = vmax.f32 %v381, 0.0
  %v387 = vpack.c.bf16 %v386, %v386
  %v388 = vld [vmem:[%s3] sm:$0xf]
  %v389 = vld [vmem:[%s3 + $0x4] sm:$0xf]
  %v390 = vld [vmem:[%s3 + $0x8] sm:$0xf]
  %v391 = vld [vmem:[%s3 + $0xc] sm:$0xf]
  %v392 = vld [vmem:[%s3 + $0x10] sm:$0xf]
  %v393 = vld [vmem:[%s3 + $0x14] sm:$0xf]
  %v394 = vld [vmem:[%s3 + $0x18] sm:$0xf]
  %v395 = vld [vmem:[%s3 + $0x1c] sm:$0xf]
  %v396 = vld [vmem:[%s3 + $0x20] sm:$0xf]
  %v397 = vld [vmem:[%s3 + $0x24] sm:$0xf]
  %v398 = vld [vmem:[%s3 + $0x28] sm:$0xf]
  %v399 = vld [vmem:[%s3 + $0x2c] sm:$0xf]
  %v400 = vld [vmem:[%s3 + $0x30] sm:$0xf]
  %v401 = vld [vmem:[%s3 + $0x34] sm:$0xf]
  %v402 = vld [vmem:[%s3 + $0x38] sm:$0xf]
  %v403 = vld [vmem:[%s3 + $0x3c] sm:$0xf]
  %v404 = vld [vmem:[%s4] sm:$0x1]
  %v406 = vlaneseq
  %v407 = vshrl.u32 %v406, 7
  %v408 = vsub.s32 0, %v407
  %v409 = vrot.slane %v404, %v408
  %v427 = vunpack.c.l.b16 %v388
  %v428 = vunpack.c.l.b16 %v389
  %v429 = vunpack.c.l.b16 %v390
  %v430 = vunpack.c.l.b16 %v391
  %v431 = vunpack.c.l.b16 %v392
  %v432 = vunpack.c.l.b16 %v393
  %v433 = vunpack.c.l.b16 %v394
  %v434 = vunpack.c.l.b16 %v395
  %v435 = vunpack.c.l.b16 %v396
  %v436 = vunpack.c.l.b16 %v397
  %v437 = vunpack.c.l.b16 %v398
  %v438 = vunpack.c.l.b16 %v399
  %v439 = vunpack.c.l.b16 %v400
  %v440 = vunpack.c.l.b16 %v401
  %v441 = vunpack.c.l.b16 %v402
  %v442 = vunpack.c.l.b16 %v403
  %v443 = vpack.c.b16 %v428, %v427
  %v444 = vpack.c.b16 %v430, %v429
  %v445 = vpack.c.b16 %v432, %v431
  %v446 = vpack.c.b16 %v434, %v433
  %v447 = vpack.c.b16 %v436, %v435
  %v448 = vpack.c.b16 %v438, %v437
  %v449 = vpack.c.b16 %v440, %v439
  %v450 = vpack.c.b16 %v442, %v441
  %459 = vmatprep.subr.bf16.mxu0 0
  %460 = vmatpush1.bf16.msra.mxu0 %v450
  %461 = vmatprep.subr.bf16.mxu0 0
  %462 = vmatpush1.bf16.msra.mxu0 %v449
  %463 = vmatprep.subr.bf16.mxu0 0
  %464 = vmatpush1.bf16.msra.mxu0 %v448
  %465 = vmatprep.subr.bf16.mxu0 0
  %466 = vmatpush1.bf16.msra.mxu0 %v447
  %467 = vmatprep.subr.bf16.mxu0 0
  %468 = vmatpush1.bf16.msra.mxu0 %v446
  %469 = vmatprep.subr.bf16.mxu0 0
  %470 = vmatpush1.bf16.msra.mxu0 %v445
  %471 = vmatprep.subr.bf16.mxu0 0
  %472 = vmatpush1.bf16.msra.mxu0 %v444
  %473 = vmatprep.subr.bf16.mxu0 0
  %474 = vmatpush1.bf16.msra.mxu0 %v443
  %475 = vmatprep.subr.bf16.mxu0 0
  %476 = vmatpush2.bf16.msra.mxu0 0
  %477 = vmatprep.subr.bf16.mxu0 0
  %478 = vmatpush2.bf16.msra.mxu0 0
  %479 = vmatprep.subr.bf16.mxu0 0
  %480 = vmatpush2.bf16.msra.mxu0 0
  %481 = vmatprep.subr.bf16.mxu0 0
  %482 = vmatpush2.bf16.msra.mxu0 0
  %483 = vmatprep.subr.bf16.mxu0 0
  %484 = vmatpush2.bf16.msra.mxu0 0
  %485 = vmatprep.subr.bf16.mxu0 0
  %486 = vmatpush2.bf16.msra.mxu0 0
  %487 = vmatprep.subr.bf16.mxu0 0
  %488 = vmatpush2.bf16.msra.mxu0 0
  %489 = vmatprep.subr.bf16.mxu0 0
  %490 = vmatpush2.bf16.msra.mxu0 0
  %491 = vmatprep.mubr.bf16.mxu0 0
  %492 = vmatmul.mubr.bf16.gmra.mxu0 %v387
  %v493 = vpop.f32.mrf.mxu0
  %v494 = vadd.f32 %v409, %v493
  %v495 = vpop.f32.mrf.mxu0
  %v496 = vpop.f32.mrf.mxu0
  %v497 = vpop.f32.mrf.mxu0
  %498 = vdwg.mxu0
  %v499 = vmax.f32 %v494, 0.0
  %v500 = vpack.c.bf16 %v499, %v499
  %v501 = vld [vmem:[%s5] sm:$0xf]
  %v502 = vld [vmem:[%s5 + $0x4] sm:$0xf]
  %v503 = vld [vmem:[%s5 + $0x8] sm:$0xf]
  %v504 = vld [vmem:[%s5 + $0xc] sm:$0xf]
  %v505 = vld [vmem:[%s5 + $0x10] sm:$0xf]
  %v506 = vld [vmem:[%s5 + $0x14] sm:$0xf]
  %v507 = vld [vmem:[%s5 + $0x18] sm:$0xf]
  %v508 = vld [vmem:[%s5 + $0x1c] sm:$0xf]
  %v509 = vld [vmem:[%s5 + $0x20] sm:$0xf]
  %v510 = vld [vmem:[%s5 + $0x24] sm:$0xf]
  %v511 = vld [vmem:[%s5 + $0x28] sm:$0xf]
  %v512 = vld [vmem:[%s5 + $0x2c] sm:$0xf]
  %v513 = vld [vmem:[%s5 + $0x30] sm:$0xf]
  %v514 = vld [vmem:[%s5 + $0x34] sm:$0xf]
  %v515 = vld [vmem:[%s5 + $0x38] sm:$0xf]
  %v516 = vld [vmem:[%s5 + $0x3c] sm:$0xf]
  %v517 = vld [vmem:[%s6] sm:$0x1]
  %v519 = vlaneseq
  %v520 = vshrl.u32 %v519, 7
  %v521 = vsub.s32 0, %v520
  %v522 = vrot.slane %v517, %v521
  %v540 = vunpack.c.l.b16 %v501
  %v541 = vunpack.c.l.b16 %v502
  %v542 = vunpack.c.l.b16 %v503
  %v543 = vunpack.c.l.b16 %v504
  %v544 = vunpack.c.l.b16 %v505
  %v545 = vunpack.c.l.b16 %v506
  %v546 = vunpack.c.l.b16 %v507
  %v547 = vunpack.c.l.b16 %v508
  %v548 = vunpack.c.l.b16 %v509
  %v549 = vunpack.c.l.b16 %v510
  %v550 = vunpack.c.l.b16 %v511
  %v551 = vunpack.c.l.b16 %v512
  %v552 = vunpack.c.l.b16 %v513
  %v553 = vunpack.c.l.b16 %v514
  %v554 = vunpack.c.l.b16 %v515
  %v555 = vunpack.c.l.b16 %v516
  %v556 = vpack.c.b16 %v541, %v540
  %v557 = vpack.c.b16 %v543, %v542
  %v558 = vpack.c.b16 %v545, %v544
  %v559 = vpack.c.b16 %v547, %v546
  %v560 = vpack.c.b16 %v549, %v548
  %v561 = vpack.c.b16 %v551, %v550
  %v562 = vpack.c.b16 %v553, %v552
  %v563 = vpack.c.b16 %v555, %v554
  %572 = vmatprep.subr.bf16.mxu0 0
  %573 = vmatpush1.bf16.msra.mxu0 %v563
  %574 = vmatprep.subr.bf16.mxu0 0
  %575 = vmatpush1.bf16.msra.mxu0 %v562
  %576 = vmatprep.subr.bf16.mxu0 0
  %577 = vmatpush1.bf16.msra.mxu0 %v561
  %578 = vmatprep.subr.bf16.mxu0 0
  %579 = vmatpush1.bf16.msra.mxu0 %v560
  %580 = vmatprep.subr.bf16.mxu0 0
  %581 = vmatpush1.bf16.msra.mxu0 %v559
  %582 = vmatprep.subr.bf16.mxu0 0
  %583 = vmatpush1.bf16.msra.mxu0 %v558
  %584 = vmatprep.subr.bf16.mxu0 0
  %585 = vmatpush1.bf16.msra.mxu0 %v557
  %586 = vmatprep.subr.bf16.mxu0 0
  %587 = vmatpush1.bf16.msra.mxu0 %v556
  %588 = vmatprep.subr.bf16.mxu0 0
  %589 = vmatpush2.bf16.msra.mxu0 0
  %590 = vmatprep.subr.bf16.mxu0 0
  %591 = vmatpush2.bf16.msra.mxu0 0
  %592 = vmatprep.subr.bf16.mxu0 0
  %593 = vmatpush2.bf16.msra.mxu0 0
  %594 = vmatprep.subr.bf16.mxu0 0
  %595 = vmatpush2.bf16.msra.mxu0 0
  %596 = vmatprep.subr.bf16.mxu0 0
  %597 = vmatpush2.bf16.msra.mxu0 0
  %598 = vmatprep.subr.bf16.mxu0 0
  %599 = vmatpush2.bf16.msra.mxu0 0
  %600 = vmatprep.subr.bf16.mxu0 0
  %601 = vmatpush2.bf16.msra.mxu0 0
  %602 = vmatprep.subr.bf16.mxu0 0
  %603 = vmatpush2.bf16.msra.mxu0 0
  %604 = vmatprep.mubr.bf16.mxu0 0
  %605 = vmatmul.mubr.bf16.gmra.mxu0 %v500
  %v606 = vpop.f32.mrf.mxu0
  %v607 = vadd.f32 %v522, %v606
  %v608 = vpop.f32.mrf.mxu0
  %v609 = vpop.f32.mrf.mxu0
  %v610 = vpop.f32.mrf.mxu0
  %611 = vdwg.mxu0
  %612 = vst [vmem:[%s7] sm:$0xff] %v607
  // Predicated region
  $region30: #{convnet_forward.5} parent=0 // pred_check
    _
  $region31: #{convnet_forward.5} parent=0 // pred_check_branch
    %614 = sbr.rel (0) target = $region33
  $region32: #{convnet_forward.5} parent=0 // pred_region
    _
  $region33: #{convnet_forward.5} parent=0 // pred_fallthru
    _
  // Predicated region
  $region34: #{convnet_forward.5} parent=0 // pred_check
    _
  $region35: #{convnet_forward.5} parent=0 // pred_check_branch
    %616 = sbr.rel (0) target = $region37
  $region36: #{convnet_forward.5} parent=0 // pred_region
    _
  $region37: #{convnet_forward.5} parent=0 // pred_fallthru
    _

</llo_original>
